<compile_context>
chip_gen: v7x
topology: tpu7x:2x2x1
jax: 0.10.0
libtpu: 0.0.40
codegen_flags: <defaults>
</compile_context>

<pallas_src>
import functools

import jax
import jax.numpy as jnp
from jax import lax
from jax.experimental import pallas as pl
from jax.experimental.pallas import tpu as pltpu

EXPANSION = 4

_PRE = 16    # scratch slack rows before the top halo (>=1 for the corner tap
             # read; 16 keeps bf16 stores packed-sublane aligned when W%16==0)
_POST = 16   # scratch slack rows after the bottom halo (>=1 for the corner tap)


def wide_block_kernel(W, TH, x_ref, xt_ref, xb_ref, w1_ref, w2_ref, w3_ref,
                      b1_ref, b2_ref, b3_ref, o_ref, pad_ref):
    M = TH * W                        # output rows handled by this grid step
    C2 = w1_ref.shape[1]
    t = pl.program_id(1)
    last_t = pl.num_programs(1) - 1

    # ---- conv1 (1x1, no bias) + bn1 + relu ----  bf16 MXU matmul, f32 acc.
    # BN1 scale is folded into w1 in the wrapper; only the bias add remains.
    def conv1(x_bf16):
        y = jnp.dot(x_bf16, w1_ref[...], preferred_element_type=jnp.float32)
        return jnp.maximum(y + b1_ref[...], 0.0)

    y1c = conv1(x_ref[0])             # (M, C2)  tile rows
    y1t = conv1(xt_ref[0])            # (W, C2)  top-halo row (recomputed)
    y1b = conv1(xb_ref[0])            # (W, C2)  bottom-halo row (recomputed)
    # 3x3 conv has padding=1: the halo rows are zero at the image borders.
    y1t = jnp.where(t > 0, y1t, 0.0)
    y1b = jnp.where(t < last_t, y1b, 0.0)

    # ---- conv2 (3x3, stride 1, pad 1, no bias) + bn2 + relu ----
    # Flat row-padded bf16 scratch: [slack | top halo | TH tile rows |
    # bottom halo | slack].  Every row that is ever read UNMASKED is written
    # every grid step (the slack rows are only read under a mask), so nothing
    # is carried between steps -> safe with both grid axes "parallel".
    pad_ref[_PRE:_PRE + W, :] = y1t.astype(jnp.bfloat16)
    pad_ref[_PRE + W:_PRE + W + M, :] = y1c.astype(jnp.bfloat16)
    pad_ref[_PRE + W + M:_PRE + 2 * W + M, :] = y1b.astype(jnp.bfloat16)

    # Left/right edge masks, broadcast ONCE to (M, C2) (hoisted out of the
    # 3x3 tap loop; JAX does not CSE broadcast_in_dim).
    wpos = lax.broadcasted_iota(jnp.int32, (M, C2), 0) % W
    not_left = wpos > 0               # column w-1 is in-bounds
    not_right = wpos < (W - 1)        # column w+1 is in-bounds
    zeros_b = jnp.zeros((M, C2), jnp.bfloat16)

    base = _PRE + W                   # scratch row of the tile's local row 0

    def tap(ky, kx):                  # one contiguous shifted slab per tap
        start = base + (ky - 1) * W + (kx - 1)
        return pad_ref[start:start + M, :]

    # TODO(synk): if the bundle dump shows relayout copies for the kx != 1
    # (sublane-misaligned) slab reads, read only the 3 aligned ky slabs and
    # synthesize the kx=0/2 operands with pltpu.roll(slab, +/-1, axis=0) plus
    # these masks (XLU slot has slack under an MXU-bound kernel).
    # TODO(synk): for small C2 (< ~128) a single im2col dot (K = 9*C2) uses
    # the MXU contraction dim better than 9 K=C2 dots; per-tap dots are the
    # right structure for production C2 >= 128.

    # Center tap initializes the accumulator (saves a zero-fill + f32 add).
    acc = jnp.dot(tap(1, 1), w2_ref[1, 1], preferred_element_type=jnp.float32)
    for ky in range(3):
        for kx in range(3):
            if ky == 1 and kx == 1:
                continue
            slab = tap(ky, kx)
            if kx == 0:
                slab = jnp.where(not_left, slab, zeros_b)
            elif kx == 2:
                slab = jnp.where(not_right, slab, zeros_b)
            acc = acc + jnp.dot(slab, w2_ref[ky, kx],
                                preferred_element_type=jnp.float32)
    y2 = jnp.maximum(acc + b2_ref[...], 0.0)                     # (M, C2) f32

    # ---- conv3 (1x1, no bias) + bn3 ----
    y3 = jnp.dot(y2.astype(jnp.bfloat16), w3_ref[...],
                 preferred_element_type=jnp.float32)             # (M, C1) f32
    y3 = y3 + b3_ref[...]

    # ---- residual add (stride=1, downsample=None -> identity = x) ----
    # Re-read the bf16 x tile here instead of holding it live across the body.
    o_ref[0] = (y3 + x_ref[0].astype(jnp.float32)).astype(o_ref.dtype)


def wide_block(x, w1, w2, w3, s1, b1, s2, b2, s3, b3, *, tile_h=8):
    """WideBlock forward, NHWC, inference-mode BN, bf16 activation I/O.

    Returns bf16 (keep activations bf16 between blocks; cast outside if f32
    is required).  tile_h: rows per grid step -- ~8-16 on v7x (64 MiB VMEM),
    ~32 on v6e; on v5e budget against the 16 MiB default scoped VMEM.
    """
    N, H, W, C1 = x.shape
    C2 = w1.shape[1]
    # stride=1, downsample=None (module defaults) => identity residual path.
    assert C2 * EXPANSION == C1, "residual add requires c1 == c2 * expansion"

    TH = min(tile_h, H)
    assert H % TH == 0, f"tile_h={TH} must divide H={H}"
    assert W % 8 == 0, "spatial width must be sublane-aligned (W % 8 == 0)"
    # W % 16 == 0 additionally keeps the bf16 scratch stores / center slab
    # reads on packed-sublane boundaries (true for production W=64).
    T = H // TH
    HW, M = H * W, TH * W

    # bf16 activations on the HBM path; weights bf16 with the BN scale folded
    # in (linear, exact); only the bias adds stay in-kernel (f32).
    x_flat = x.astype(jnp.bfloat16).reshape(N, HW, C1)   # free reshape in HBM
    w1f = (w1 * s1).astype(jnp.bfloat16)                 # (C1, C2)
    w2f = (w2 * s2).astype(jnp.bfloat16)                 # (3, 3, C2, C2) HWIO
    w3f = (w3 * s3).astype(jnp.bfloat16)                 # (C2, C1)
    b1f = b1.astype(jnp.float32)
    b2f = b2.astype(jnp.float32)
    b3f = b3.astype(jnp.float32)

    def const_spec(shape):
        # Grid-invariant operand (constant block index): Pallas does not
        # re-fetch it between grid steps.  On v7x, if the lowering still
        # double-buffers these, add pipeline_mode=pl.Buffered(1) to recover
        # ~half of the weight VMEM.
        nd = len(shape)
        return pl.BlockSpec(shape, lambda n, t, _nd=nd: (0,) * _nd)

    grid_spec = pltpu.PrefetchScalarGridSpec(
        num_scalar_prefetch=0,
        grid=(N, T),                                     # (image, row tile)
        in_specs=[
            # TH spatial rows of x (flattened) -- the main activation stream.
            pl.BlockSpec((1, M, C1), lambda n, t: (n, t, 0)),
            # 1-row top/bottom halos fetched directly from x (block size = one
            # spatial row), clamped at the image border and zeroed in-kernel.
            pl.BlockSpec((1, W, C1),
                         lambda n, t: (n, jnp.maximum(t * TH - 1, 0), 0)),
            pl.BlockSpec((1, W, C1),
                         lambda n, t: (n, jnp.minimum((t + 1) * TH, H - 1), 0)),
            const_spec(w1f.shape), const_spec(w2f.shape), const_spec(w3f.shape),
            const_spec(b1f.shape), const_spec(b2f.shape), const_spec(b3f.shape),
        ],
        out_specs=pl.BlockSpec((1, M, C1), lambda n, t: (n, t, 0)),
        # Row-padded bf16 y1 scratch: slack | halo | TH*W rows | halo | slack.
        scratch_shapes=[
            pltpu.VMEM((_PRE + (TH + 2) * W + _POST, C2), jnp.bfloat16)],
    )
    out = pl.pallas_call(
        functools.partial(wide_block_kernel, W, TH),
        out_shape=jax.ShapeDtypeStruct((N, HW, C1), jnp.bfloat16),
        grid_spec=grid_spec,
        compiler_params=pltpu.CompilerParams(
            # Both axes are independent -> megacore can shard either (v7x's
            # two TCs get work even at small N).  56 MiB scoped VMEM leaves
            # headroom on v7x (64 MiB physical) and is well under the 128 MiB
            # of v5e/v6e; raise further on v6e for bigger tiles.
            dimension_semantics=("parallel", "parallel"),
            vmem_limit_bytes=56 * 1024 * 1024),
    )(x_flat, x_flat, x_flat, w1f, w2f, w3f, b1f, b2f, b3f)
    return out.reshape(N, H, W, C1)


def ref_wide_block(x, w1, w2, w3, s1, b1, s2, b2, s3, b3):
    """Pure-JAX f32 reference (NHWC convs) for numerical verification."""
    C1 = x.shape[-1]
    C2 = w1.shape[1]
    dn = ('NHWC', 'HWIO', 'NHWC')
    y = lax.conv_general_dilated(x, w1.reshape(1, 1, C1, C2), (1, 1), 'VALID',
                                 dimension_numbers=dn)
    y = jnp.maximum(y * s1 + b1, 0.0)
    y = lax.conv_general_dilated(y, w2, (1, 1), ((1, 1), (1, 1)),
                                 dimension_numbers=dn)
    y = jnp.maximum(y * s2 + b2, 0.0)
    y = lax.conv_general_dilated(y, w3.reshape(1, 1, C2, C1), (1, 1), 'VALID',
                                 dimension_numbers=dn)
    y = y * s3 + b3
    return y + x


if __name__ == "__main__":
    key = jax.random.PRNGKey(0)
    N, H, W = 2, 16, 16
    C2 = 4
    C1 = C2 * EXPANSION        # 16; identity path requires c1 == 4 * c2

    ks = jax.random.split(key, 16)
    x = jax.random.normal(ks[0], (N, H, W, C1), jnp.float32)

    # Conv weights stored matmul-ready (1x1 as (Cin, Cout); 3x3 as HWIO).
    w1 = 0.1 * jax.random.normal(ks[1], (C1, C2), jnp.float32)
    w2 = 0.1 * jax.random.normal(ks[2], (3, 3, C2, C2), jnp.float32)
    w3 = 0.1 * jax.random.normal(ks[3], (C2, C1), jnp.float32)

    eps = 1e-5

    def bn_params(kg, kb, km, kv, c):
        gamma = 1.0 + 0.1 * jax.random.normal(kg, (1, c), jnp.float32)
        beta = 0.1 * jax.random.normal(kb, (1, c), jnp.float32)
        mean = 0.1 * jax.random.normal(km, (1, c), jnp.float32)
        var = jnp.abs(jax.random.normal(kv, (1, c), jnp.float32)) + 0.5
        scale = gamma / jnp.sqrt(var + eps)
        bias = beta - mean * scale
        return scale, bias

    s1, b1 = bn_params(ks[4], ks[5], ks[6], ks[7], C2)
    s2, b2 = bn_params(ks[8], ks[9], ks[10], ks[11], C2)
    s3, b3 = bn_params(ks[12], ks[13], ks[14], ks[15], C1)

    out = wide_block(x, w1, w2, w3, s1, b1, s2, b2, s3, b3, tile_h=8)
    out = jax.block_until_ready(out).astype(jnp.float32)

    ref = ref_wide_block(x, w1, w2, w3, s1, b1, s2, b2, s3, b3)
    err = float(jnp.max(jnp.abs(out - ref)))
    # bf16 activation I/O + bf16 matmul operands (f32 accumulation) -> looser
    # tolerance vs the pure-f32 reference.
    assert jnp.allclose(out, ref, rtol=1e-1, atol=1e-1), f"max abs err {err}"

    print("KERNEL_OK")
</pallas_src>

<mosaic_0001>
module attributes {stable_mosaic.version = 11 : i64} {
  func.func @wide_block_kernel(%arg0: i32, %arg1: i32, %arg2: memref<1x128x16xbf16, #tpu.memory_space<vmem>>, %arg3: memref<1x16x16xbf16, #tpu.memory_space<vmem>>, %arg4: memref<1x16x16xbf16, #tpu.memory_space<vmem>>, %arg5: memref<16x4xbf16, #tpu.memory_space<vmem>>, %arg6: memref<3x3x4x4xbf16, #tpu.memory_space<vmem>>, %arg7: memref<4x16xbf16, #tpu.memory_space<vmem>>, %arg8: memref<1x4xf32, #tpu.memory_space<vmem>>, %arg9: memref<1x4xf32, #tpu.memory_space<vmem>>, %arg10: memref<1x16xf32, #tpu.memory_space<vmem>>, %arg11: memref<1x128x16xbf16, #tpu.memory_space<vmem>>, %arg12: memref<192x4xbf16, #tpu.memory_space<vmem>>) attributes {dimension_semantics = [#tpu.dimension_semantics<parallel>, #tpu.dimension_semantics<parallel>], iteration_bounds = array<i64: 2, 2>, scalar_prefetch = 0 : i64, scratch_operands = 1 : i64, tpu.core_type = #tpu.core_type<tc>, window_params = [{transform_indices = @transform_0, window_bounds = array<i64: 1, 128, 16>}, {transform_indices = @transform_1, window_bounds = array<i64: 1, 16, 16>}, {transform_indices = @transform_2, window_bounds = array<i64: 1, 16, 16>}, {pipeline_mode = #tpu.pipeline_mode<synchronous>, transform_indices = @transform_3, window_bounds = array<i64: 16, 4>}, {pipeline_mode = #tpu.pipeline_mode<synchronous>, transform_indices = @transform_4, window_bounds = array<i64: 3, 3, 4, 4>}, {pipeline_mode = #tpu.pipeline_mode<synchronous>, transform_indices = @transform_5, window_bounds = array<i64: 4, 16>}, {pipeline_mode = #tpu.pipeline_mode<synchronous>, transform_indices = @transform_6, window_bounds = array<i64: 1, 4>}, {pipeline_mode = #tpu.pipeline_mode<synchronous>, transform_indices = @transform_7, window_bounds = array<i64: 1, 4>}, {pipeline_mode = #tpu.pipeline_mode<synchronous>, transform_indices = @transform_8, window_bounds = array<i64: 1, 16>}, {transform_indices = @transform_9, window_bounds = array<i64: 1, 128, 16>}]} {
    %c0 = arith.constant 0 : index
    %c0_0 = arith.constant 0 : index
    %c0_1 = arith.constant 0 : index
    %0 = vector.load %arg2[%c0, %c0_0, %c0_1] : memref<1x128x16xbf16, #tpu.memory_space<vmem>>, vector<1x128x16xbf16>
    %1 = vector.shape_cast %0 : vector<1x128x16xbf16> to vector<128x16xbf16>
    %c0_2 = arith.constant 0 : index
    %c0_3 = arith.constant 0 : index
    %2 = vector.load %arg5[%c0_2, %c0_3] : memref<16x4xbf16, #tpu.memory_space<vmem>>, vector<16x4xbf16>
    %cst = arith.constant dense<0.000000e+00> : vector<128x4xf32>
    %3 = tpu.matmul %1, %2, %cst {dimension_numbers = #tpu.dot_dimension_numbers<[1], [0], [0], [1], [0, 0, 1, 1], [], []>} : vector<128x16xbf16>, vector<16x4xbf16>, vector<128x4xf32> -> vector<128x4xf32>
    %c0_4 = arith.constant 0 : index
    %c0_5 = arith.constant 0 : index
    %4 = vector.load %arg8[%c0_4, %c0_5] : memref<1x4xf32, #tpu.memory_space<vmem>>, vector<1x4xf32>
    %5 = vector.broadcast %4 : vector<1x4xf32> to vector<128x4xf32>
    %6 = arith.addf %3, %5 : vector<128x4xf32>
    %cst_6 = arith.constant 0.000000e+00 : f32
    %7 = vector.broadcast %cst_6 : f32 to vector<128x4xf32>
    %8 = arith.maximumf %6, %7 : vector<128x4xf32>
    %c0_7 = arith.constant 0 : index
    %c0_8 = arith.constant 0 : index
    %c0_9 = arith.constant 0 : index
    %9 = vector.load %arg3[%c0_7, %c0_8, %c0_9] : memref<1x16x16xbf16, #tpu.memory_space<vmem>>, vector<1x16x16xbf16>
    %10 = vector.shape_cast %9 : vector<1x16x16xbf16> to vector<16x16xbf16>
    %c0_10 = arith.constant 0 : index
    %c0_11 = arith.constant 0 : index
    %11 = vector.load %arg5[%c0_10, %c0_11] : memref<16x4xbf16, #tpu.memory_space<vmem>>, vector<16x4xbf16>
    %cst_12 = arith.constant dense<0.000000e+00> : vector<16x4xf32>
    %12 = tpu.matmul %10, %11, %cst_12 {dimension_numbers = #tpu.dot_dimension_numbers<[1], [0], [0], [1], [0, 0, 1, 1], [], []>} : vector<16x16xbf16>, vector<16x4xbf16>, vector<16x4xf32> -> vector<16x4xf32>
    %c0_13 = arith.constant 0 : index
    %c0_14 = arith.constant 0 : index
    %13 = vector.load %arg8[%c0_13, %c0_14] : memref<1x4xf32, #tpu.memory_space<vmem>>, vector<1x4xf32>
    %14 = vector.broadcast %13 : vector<1x4xf32> to vector<16x4xf32>
    %15 = arith.addf %12, %14 : vector<16x4xf32>
    %cst_15 = arith.constant 0.000000e+00 : f32
    %16 = vector.broadcast %cst_15 : f32 to vector<16x4xf32>
    %17 = arith.maximumf %15, %16 : vector<16x4xf32>
    %c0_16 = arith.constant 0 : index
    %c0_17 = arith.constant 0 : index
    %c0_18 = arith.constant 0 : index
    %18 = vector.load %arg4[%c0_16, %c0_17, %c0_18] : memref<1x16x16xbf16, #tpu.memory_space<vmem>>, vector<1x16x16xbf16>
    %19 = vector.shape_cast %18 : vector<1x16x16xbf16> to vector<16x16xbf16>
    %c0_19 = arith.constant 0 : index
    %c0_20 = arith.constant 0 : index
    %20 = vector.load %arg5[%c0_19, %c0_20] : memref<16x4xbf16, #tpu.memory_space<vmem>>, vector<16x4xbf16>
    %cst_21 = arith.constant dense<0.000000e+00> : vector<16x4xf32>
    %21 = tpu.matmul %19, %20, %cst_21 {dimension_numbers = #tpu.dot_dimension_numbers<[1], [0], [0], [1], [0, 0, 1, 1], [], []>} : vector<16x16xbf16>, vector<16x4xbf16>, vector<16x4xf32> -> vector<16x4xf32>
    %c0_22 = arith.constant 0 : index
    %c0_23 = arith.constant 0 : index
    %22 = vector.load %arg8[%c0_22, %c0_23] : memref<1x4xf32, #tpu.memory_space<vmem>>, vector<1x4xf32>
    %23 = vector.broadcast %22 : vector<1x4xf32> to vector<16x4xf32>
    %24 = arith.addf %21, %23 : vector<16x4xf32>
    %cst_24 = arith.constant 0.000000e+00 : f32
    %25 = vector.broadcast %cst_24 : f32 to vector<16x4xf32>
    %26 = arith.maximumf %24, %25 : vector<16x4xf32>
    %c0_i32 = arith.constant 0 : i32
    %27 = arith.cmpi sgt, %arg1, %c0_i32 : i32
    %cst_25 = arith.constant 0.000000e+00 : f32
    %28 = vector.broadcast %cst_25 : f32 to vector<16x4xf32>
    %29 = arith.select %27, %17, %28 : vector<16x4xf32>
    %c1_i32 = arith.constant 1 : i32
    %30 = arith.cmpi slt, %arg1, %c1_i32 : i32
    %cst_26 = arith.constant 0.000000e+00 : f32
    %31 = vector.broadcast %cst_26 : f32 to vector<16x4xf32>
    %32 = arith.select %30, %26, %31 : vector<16x4xf32>
    %33 = arith.truncf %29 : vector<16x4xf32> to vector<16x4xbf16>
    %c16 = arith.constant 16 : index
    %c0_27 = arith.constant 0 : index
    %34 = vector.load %arg12[%c16, %c0_27] : memref<192x4xbf16, #tpu.memory_space<vmem>>, vector<16x4xbf16>
    tpu.vector_store %arg12[%c16, %c0_27], %33 {strides = array<i32>} : memref<192x4xbf16, #tpu.memory_space<vmem>>, vector<16x4xbf16>,
    %35 = arith.truncf %8 : vector<128x4xf32> to vector<128x4xbf16>
    %c32 = arith.constant 32 : index
    %c0_28 = arith.constant 0 : index
    %36 = vector.load %arg12[%c32, %c0_28] : memref<192x4xbf16, #tpu.memory_space<vmem>>, vector<128x4xbf16>
    tpu.vector_store %arg12[%c32, %c0_28], %35 {strides = array<i32>} : memref<192x4xbf16, #tpu.memory_space<vmem>>, vector<128x4xbf16>,
    %37 = arith.truncf %32 : vector<16x4xf32> to vector<16x4xbf16>
    %c160 = arith.constant 160 : index
    %c0_29 = arith.constant 0 : index
    %38 = vector.load %arg12[%c160, %c0_29] : memref<192x4xbf16, #tpu.memory_space<vmem>>, vector<16x4xbf16>
    tpu.vector_store %arg12[%c160, %c0_29], %37 {strides = array<i32>} : memref<192x4xbf16, #tpu.memory_space<vmem>>, vector<16x4xbf16>,
    %39 = tpu.iota {dimensions = array<i32: 0>} : vector<128x4xi32>
    %c16_i32 = arith.constant 16 : i32
    %c0_i32_30 = arith.constant 0 : i32
    %40 = arith.cmpi eq, %c16_i32, %c0_i32_30 : i32
    %c1_i32_31 = arith.constant 1 : i32
    %41 = arith.select %40, %c1_i32_31, %c16_i32 : i32
    %42 = vector.broadcast %41 : i32 to vector<128x4xi32>
    %43 = arith.remsi %39, %42 : vector<128x4xi32>
    %c0_i32_32 = arith.constant 0 : i32
    %44 = vector.broadcast %c0_i32_32 : i32 to vector<128x4xi32>
    %45 = arith.cmpi ne, %43, %44 : vector<128x4xi32>
    %c0_i32_33 = arith.constant 0 : i32
    %46 = vector.broadcast %c0_i32_33 : i32 to vector<128x4xi32>
    %47 = arith.cmpi slt, %43, %46 : vector<128x4xi32>
    %c0_i32_34 = arith.constant 0 : i32
    %48 = arith.cmpi slt, %41, %c0_i32_34 : i32
    %49 = vector.broadcast %48 : i1 to vector<128x4xi1>
    %50 = vector.broadcast %49 : vector<128x4xi1> to vector<128x4xi1>
    %51 = arith.xori %47, %50 : vector<128x4xi1>
    %52 = arith.andi %51, %45 : vector<128x4xi1>
    %53 = vector.broadcast %41 : i32 to vector<128x4xi32>
    %54 = arith.addi %43, %53 : vector<128x4xi32>
    %55 = arith.select %52, %54, %43 : vector<128x4xi1>, vector<128x4xi32>
    %c0_i32_35 = arith.constant 0 : i32
    %56 = vector.broadcast %c0_i32_35 : i32 to vector<128x4xi32>
    %57 = arith.cmpi sgt, %55, %56 : vector<128x4xi32>
    %c15_i32 = arith.constant 15 : i32
    %58 = vector.broadcast %c15_i32 : i32 to vector<128x4xi32>
    %59 = arith.cmpi slt, %55, %58 : vector<128x4xi32>
    %cst_36 = arith.constant 0.000000e+00 : bf16
    %60 = vector.broadcast %cst_36 : bf16 to vector<128x4xbf16>
    %c32_37 = arith.constant 32 : index
    %c0_38 = arith.constant 0 : index
    %61 = vector.load %arg12[%c32_37, %c0_38] : memref<192x4xbf16, #tpu.memory_space<vmem>>, vector<128x4xbf16>
    %c1 = arith.constant 1 : index
    %c1_39 = arith.constant 1 : index
    %c0_40 = arith.constant 0 : index
    %c0_41 = arith.constant 0 : index
    %62 = vector.load %arg6[%c1, %c1_39, %c0_40, %c0_41] : memref<3x3x4x4xbf16, #tpu.memory_space<vmem>>, vector<1x1x4x4xbf16>
    %63 = vector.shape_cast %62 : vector<1x1x4x4xbf16> to vector<4x4xbf16>
    %cst_42 = arith.constant dense<0.000000e+00> : vector<128x4xf32>
    %64 = tpu.matmul %61, %63, %cst_42 {dimension_numbers = #tpu.dot_dimension_numbers<[1], [0], [0], [1], [0, 0, 1, 1], [], []>} : vector<128x4xbf16>, vector<4x4xbf16>, vector<128x4xf32> -> vector<128x4xf32>
    %c15 = arith.constant 15 : index
    %c0_43 = arith.constant 0 : index
    %65 = vector.load %arg12[%c15, %c0_43] : memref<192x4xbf16, #tpu.memory_space<vmem>>, vector<128x4xbf16>
    %66 = arith.select %57, %65, %60 : vector<128x4xi1>, vector<128x4xbf16>
    %c0_44 = arith.constant 0 : index
    %c0_45 = arith.constant 0 : index
    %c0_46 = arith.constant 0 : index
    %c0_47 = arith.constant 0 : index
    %67 = vector.load %arg6[%c0_44, %c0_45, %c0_46, %c0_47] : memref<3x3x4x4xbf16, #tpu.memory_space<vmem>>, vector<1x1x4x4xbf16>
    %68 = vector.shape_cast %67 : vector<1x1x4x4xbf16> to vector<4x4xbf16>
    %cst_48 = arith.constant dense<0.000000e+00> : vector<128x4xf32>
    %69 = tpu.matmul %66, %68, %cst_48 {dimension_numbers = #tpu.dot_dimension_numbers<[1], [0], [0], [1], [0, 0, 1, 1], [], []>} : vector<128x4xbf16>, vector<4x4xbf16>, vector<128x4xf32> -> vector<128x4xf32>
    %70 = arith.addf %64, %69 : vector<128x4xf32>
    %c16_49 = arith.constant 16 : index
    %c0_50 = arith.constant 0 : index
    %71 = vector.load %arg12[%c16_49, %c0_50] : memref<192x4xbf16, #tpu.memory_space<vmem>>, vector<128x4xbf16>
    %c0_51 = arith.constant 0 : index
    %c1_52 = arith.constant 1 : index
    %c0_53 = arith.constant 0 : index
    %c0_54 = arith.constant 0 : index
    %72 = vector.load %arg6[%c0_51, %c1_52, %c0_53, %c0_54] : memref<3x3x4x4xbf16, #tpu.memory_space<vmem>>, vector<1x1x4x4xbf16>
    %73 = vector.shape_cast %72 : vector<1x1x4x4xbf16> to vector<4x4xbf16>
    %cst_55 = arith.constant dense<0.000000e+00> : vector<128x4xf32>
    %74 = tpu.matmul %71, %73, %cst_55 {dimension_numbers = #tpu.dot_dimension_numbers<[1], [0], [0], [1], [0, 0, 1, 1], [], []>} : vector<128x4xbf16>, vector<4x4xbf16>, vector<128x4xf32> -> vector<128x4xf32>
    %75 = arith.addf %70, %74 : vector<128x4xf32>
    %c17 = arith.constant 17 : index
    %c0_56 = arith.constant 0 : index
    %76 = vector.load %arg12[%c17, %c0_56] : memref<192x4xbf16, #tpu.memory_space<vmem>>, vector<128x4xbf16>
    %77 = arith.select %59, %76, %60 : vector<128x4xi1>, vector<128x4xbf16>
    %c0_57 = arith.constant 0 : index
    %c2 = arith.constant 2 : index
    %c0_58 = arith.constant 0 : index
    %c0_59 = arith.constant 0 : index
    %78 = vector.load %arg6[%c0_57, %c2, %c0_58, %c0_59] : memref<3x3x4x4xbf16, #tpu.memory_space<vmem>>, vector<1x1x4x4xbf16>
    %79 = vector.shape_cast %78 : vector<1x1x4x4xbf16> to vector<4x4xbf16>
    %cst_60 = arith.constant dense<0.000000e+00> : vector<128x4xf32>
    %80 = tpu.matmul %77, %79, %cst_60 {dimension_numbers = #tpu.dot_dimension_numbers<[1], [0], [0], [1], [0, 0, 1, 1], [], []>} : vector<128x4xbf16>, vector<4x4xbf16>, vector<128x4xf32> -> vector<128x4xf32>
    %81 = arith.addf %75, %80 : vector<128x4xf32>
    %c31 = arith.constant 31 : index
    %c0_61 = arith.constant 0 : index
    %82 = vector.load %arg12[%c31, %c0_61] : memref<192x4xbf16, #tpu.memory_space<vmem>>, vector<128x4xbf16>
    %83 = arith.select %57, %82, %60 : vector<128x4xi1>, vector<128x4xbf16>
    %c1_62 = arith.constant 1 : index
    %c0_63 = arith.constant 0 : index
    %c0_64 = arith.constant 0 : index
    %c0_65 = arith.constant 0 : index
    %84 = vector.load %arg6[%c1_62, %c0_63, %c0_64, %c0_65] : memref<3x3x4x4xbf16, #tpu.memory_space<vmem>>, vector<1x1x4x4xbf16>
    %85 = vector.shape_cast %84 : vector<1x1x4x4xbf16> to vector<4x4xbf16>
    %cst_66 = arith.constant dense<0.000000e+00> : vector<128x4xf32>
    %86 = tpu.matmul %83, %85, %cst_66 {dimension_numbers = #tpu.dot_dimension_numbers<[1], [0], [0], [1], [0, 0, 1, 1], [], []>} : vector<128x4xbf16>, vector<4x4xbf16>, vector<128x4xf32> -> vector<128x4xf32>
    %87 = arith.addf %81, %86 : vector<128x4xf32>
    %c33 = arith.constant 33 : index
    %c0_67 = arith.constant 0 : index
    %88 = vector.load %arg12[%c33, %c0_67] : memref<192x4xbf16, #tpu.memory_space<vmem>>, vector<128x4xbf16>
    %89 = arith.select %59, %88, %60 : vector<128x4xi1>, vector<128x4xbf16>
    %c1_68 = arith.constant 1 : index
    %c2_69 = arith.constant 2 : index
    %c0_70 = arith.constant 0 : index
    %c0_71 = arith.constant 0 : index
    %90 = vector.load %arg6[%c1_68, %c2_69, %c0_70, %c0_71] : memref<3x3x4x4xbf16, #tpu.memory_space<vmem>>, vector<1x1x4x4xbf16>
    %91 = vector.shape_cast %90 : vector<1x1x4x4xbf16> to vector<4x4xbf16>
    %cst_72 = arith.constant dense<0.000000e+00> : vector<128x4xf32>
    %92 = tpu.matmul %89, %91, %cst_72 {dimension_numbers = #tpu.dot_dimension_numbers<[1], [0], [0], [1], [0, 0, 1, 1], [], []>} : vector<128x4xbf16>, vector<4x4xbf16>, vector<128x4xf32> -> vector<128x4xf32>
    %93 = arith.addf %87, %92 : vector<128x4xf32>
    %c47 = arith.constant 47 : index
    %c0_73 = arith.constant 0 : index
    %94 = vector.load %arg12[%c47, %c0_73] : memref<192x4xbf16, #tpu.memory_space<vmem>>, vector<128x4xbf16>
    %95 = arith.select %57, %94, %60 : vector<128x4xi1>, vector<128x4xbf16>
    %c2_74 = arith.constant 2 : index
    %c0_75 = arith.constant 0 : index
    %c0_76 = arith.constant 0 : index
    %c0_77 = arith.constant 0 : index
    %96 = vector.load %arg6[%c2_74, %c0_75, %c0_76, %c0_77] : memref<3x3x4x4xbf16, #tpu.memory_space<vmem>>, vector<1x1x4x4xbf16>
    %97 = vector.shape_cast %96 : vector<1x1x4x4xbf16> to vector<4x4xbf16>
    %cst_78 = arith.constant dense<0.000000e+00> : vector<128x4xf32>
    %98 = tpu.matmul %95, %97, %cst_78 {dimension_numbers = #tpu.dot_dimension_numbers<[1], [0], [0], [1], [0, 0, 1, 1], [], []>} : vector<128x4xbf16>, vector<4x4xbf16>, vector<128x4xf32> -> vector<128x4xf32>
    %99 = arith.addf %93, %98 : vector<128x4xf32>
    %c48 = arith.constant 48 : index
    %c0_79 = arith.constant 0 : index
    %100 = vector.load %arg12[%c48, %c0_79] : memref<192x4xbf16, #tpu.memory_space<vmem>>, vector<128x4xbf16>
    %c2_80 = arith.constant 2 : index
    %c1_81 = arith.constant 1 : index
    %c0_82 = arith.constant 0 : index
    %c0_83 = arith.constant 0 : index
    %101 = vector.load %arg6[%c2_80, %c1_81, %c0_82, %c0_83] : memref<3x3x4x4xbf16, #tpu.memory_space<vmem>>, vector<1x1x4x4xbf16>
    %102 = vector.shape_cast %101 : vector<1x1x4x4xbf16> to vector<4x4xbf16>
    %cst_84 = arith.constant dense<0.000000e+00> : vector<128x4xf32>
    %103 = tpu.matmul %100, %102, %cst_84 {dimension_numbers = #tpu.dot_dimension_numbers<[1], [0], [0], [1], [0, 0, 1, 1], [], []>} : vector<128x4xbf16>, vector<4x4xbf16>, vector<128x4xf32> -> vector<128x4xf32>
    %104 = arith.addf %99, %103 : vector<128x4xf32>
    %c49 = arith.constant 49 : index
    %c0_85 = arith.constant 0 : index
    %105 = vector.load %arg12[%c49, %c0_85] : memref<192x4xbf16, #tpu.memory_space<vmem>>, vector<128x4xbf16>
    %106 = arith.select %59, %105, %60 : vector<128x4xi1>, vector<128x4xbf16>
    %c2_86 = arith.constant 2 : index
    %c2_87 = arith.constant 2 : index
    %c0_88 = arith.constant 0 : index
    %c0_89 = arith.constant 0 : index
    %107 = vector.load %arg6[%c2_86, %c2_87, %c0_88, %c0_89] : memref<3x3x4x4xbf16, #tpu.memory_space<vmem>>, vector<1x1x4x4xbf16>
    %108 = vector.shape_cast %107 : vector<1x1x4x4xbf16> to vector<4x4xbf16>
    %cst_90 = arith.constant dense<0.000000e+00> : vector<128x4xf32>
    %109 = tpu.matmul %106, %108, %cst_90 {dimension_numbers = #tpu.dot_dimension_numbers<[1], [0], [0], [1], [0, 0, 1, 1], [], []>} : vector<128x4xbf16>, vector<4x4xbf16>, vector<128x4xf32> -> vector<128x4xf32>
    %110 = arith.addf %104, %109 : vector<128x4xf32>
    %c0_91 = arith.constant 0 : index
    %c0_92 = arith.constant 0 : index
    %111 = vector.load %arg9[%c0_91, %c0_92] : memref<1x4xf32, #tpu.memory_space<vmem>>, vector<1x4xf32>
    %112 = vector.broadcast %111 : vector<1x4xf32> to vector<128x4xf32>
    %113 = arith.addf %110, %112 : vector<128x4xf32>
    %cst_93 = arith.constant 0.000000e+00 : f32
    %114 = vector.broadcast %cst_93 : f32 to vector<128x4xf32>
    %115 = arith.maximumf %113, %114 : vector<128x4xf32>
    %116 = arith.truncf %115 : vector<128x4xf32> to vector<128x4xbf16>
    %c0_94 = arith.constant 0 : index
    %c0_95 = arith.constant 0 : index
    %117 = vector.load %arg7[%c0_94, %c0_95] : memref<4x16xbf16, #tpu.memory_space<vmem>>, vector<4x16xbf16>
    %cst_96 = arith.constant dense<0.000000e+00> : vector<128x16xf32>
    %118 = tpu.matmul %116, %117, %cst_96 {dimension_numbers = #tpu.dot_dimension_numbers<[1], [0], [0], [1], [0, 0, 1, 1], [], []>} : vector<128x4xbf16>, vector<4x16xbf16>, vector<128x16xf32> -> vector<128x16xf32>
    %c0_97 = arith.constant 0 : index
    %c0_98 = arith.constant 0 : index
    %119 = vector.load %arg10[%c0_97, %c0_98] : memref<1x16xf32, #tpu.memory_space<vmem>>, vector<1x16xf32>
    %120 = vector.broadcast %119 : vector<1x16xf32> to vector<128x16xf32>
    %121 = arith.addf %118, %120 : vector<128x16xf32>
    %c0_99 = arith.constant 0 : index
    %c0_100 = arith.constant 0 : index
    %c0_101 = arith.constant 0 : index
    %122 = vector.load %arg2[%c0_99, %c0_100, %c0_101] : memref<1x128x16xbf16, #tpu.memory_space<vmem>>, vector<1x128x16xbf16>
    %123 = vector.shape_cast %122 : vector<1x128x16xbf16> to vector<128x16xbf16>
    %124 = arith.extf %123 : vector<128x16xbf16> to vector<128x16xf32>
    %125 = arith.addf %121, %124 : vector<128x16xf32>
    %126 = arith.truncf %125 : vector<128x16xf32> to vector<128x16xbf16>
    %c0_102 = arith.constant 0 : index
    %c0_103 = arith.constant 0 : index
    %c0_104 = arith.constant 0 : index
    %127 = vector.load %arg11[%c0_102, %c0_103, %c0_104] : memref<1x128x16xbf16, #tpu.memory_space<vmem>>, vector<1x128x16xbf16>
    %128 = vector.shape_cast %127 : vector<1x128x16xbf16> to vector<128x16xbf16>
    %129 = vector.shape_cast %126 : vector<128x16xbf16> to vector<1x128x16xbf16>
    tpu.vector_store %arg11[%c0_102, %c0_103, %c0_104], %129 {strides = array<i32>} : memref<1x128x16xbf16, #tpu.memory_space<vmem>>, vector<1x128x16xbf16>,
    return
  }
  func.func @transform_0(%arg0: i32, %arg1: i32) -> (i32, i32, i32) {
    %c0_i32 = arith.constant 0 : i32
    %c0_i32_0 = arith.constant 0 : i32
    return %arg0, %arg1, %c0_i32 : i32, i32, i32
  }
  func.func @transform_1(%arg0: i32, %arg1: i32) -> (i32, i32, i32) {
    %c8_i32 = arith.constant 8 : i32
    %0 = arith.muli %arg1, %c8_i32 : i32
    %c1_i32 = arith.constant 1 : i32
    %1 = arith.subi %0, %c1_i32 : i32
    %c0_i32 = arith.constant 0 : i32
    %2 = arith.maxsi %1, %c0_i32 : i32
    %c0_i32_0 = arith.constant 0 : i32
    %c0_i32_1 = arith.constant 0 : i32
    return %arg0, %2, %c0_i32_0 : i32, i32, i32
  }
  func.func @transform_2(%arg0: i32, %arg1: i32) -> (i32, i32, i32) {
    %c1_i32 = arith.constant 1 : i32
    %0 = arith.addi %arg1, %c1_i32 : i32
    %c8_i32 = arith.constant 8 : i32
    %1 = arith.muli %0, %c8_i32 : i32
    %c15_i32 = arith.constant 15 : i32
    %2 = arith.minsi %1, %c15_i32 : i32
    %c0_i32 = arith.constant 0 : i32
    %c0_i32_0 = arith.constant 0 : i32
    return %arg0, %2, %c0_i32 : i32, i32, i32
  }
  func.func @transform_3(%arg0: i32, %arg1: i32) -> (i32, i32) {
    %c0_i32 = arith.constant 0 : i32
    %c0_i32_0 = arith.constant 0 : i32
    %c0_i32_1 = arith.constant 0 : i32
    return %c0_i32, %c0_i32_0 : i32, i32
  }
  func.func @transform_4(%arg0: i32, %arg1: i32) -> (i32, i32, i32, i32) {
    %c0_i32 = arith.constant 0 : i32
    %c0_i32_0 = arith.constant 0 : i32
    %c0_i32_1 = arith.constant 0 : i32
    %c0_i32_2 = arith.constant 0 : i32
    %c0_i32_3 = arith.constant 0 : i32
    return %c0_i32, %c0_i32_0, %c0_i32_1, %c0_i32_2 : i32, i32, i32, i32
  }
  func.func @transform_5(%arg0: i32, %arg1: i32) -> (i32, i32) {
    %c0_i32 = arith.constant 0 : i32
    %c0_i32_0 = arith.constant 0 : i32
    %c0_i32_1 = arith.constant 0 : i32
    return %c0_i32, %c0_i32_0 : i32, i32
  }
  func.func @transform_6(%arg0: i32, %arg1: i32) -> (i32, i32) {
    %c0_i32 = arith.constant 0 : i32
    %c0_i32_0 = arith.constant 0 : i32
    %c0_i32_1 = arith.constant 0 : i32
    return %c0_i32, %c0_i32_0 : i32, i32
  }
  func.func @transform_7(%arg0: i32, %arg1: i32) -> (i32, i32) {
    %c0_i32 = arith.constant 0 : i32
    %c0_i32_0 = arith.constant 0 : i32
    %c0_i32_1 = arith.constant 0 : i32
    return %c0_i32, %c0_i32_0 : i32, i32
  }
  func.func @transform_8(%arg0: i32, %arg1: i32) -> (i32, i32) {
    %c0_i32 = arith.constant 0 : i32
    %c0_i32_0 = arith.constant 0 : i32
    %c0_i32_1 = arith.constant 0 : i32
    return %c0_i32, %c0_i32_0 : i32, i32
  }
  func.func @transform_9(%arg0: i32, %arg1: i32) -> (i32, i32, i32) {
    %c0_i32 = arith.constant 0 : i32
    %c0_i32_0 = arith.constant 0 : i32
    return %arg0, %arg1, %c0_i32 : i32, i32, i32
  }
}

</mosaic_0001>

<llo_original>
// kernel: tpu_custom_call.1
$region0: #{tpu_custom_call.1}
  #allocation0 [shape = 'u32[]', space=smem, size = 0x4, offset = 0x4, fixed_abs, tag = 'smem constant byte address 0x4 - core index']
  #allocation1 [shape = 'u32[144,128]{1,0:T(1,128)}', space=vmem, size = 0x12000, scoped, tag = 'internal scratch']
  #allocation2 [shape = 'bf16[192,4]{1,0:T(16,128)(2,1)}', space=vmem, size = 0xc000, scoped, tag = 'scratch operand']
  %s0 = inlined_call_operand.vmem [shape: bf16[2,256,16], index: 0, kind: input, shape index: {}]
  %s1 = inlined_call_operand.vmem [shape: bf16[2,256,16], index: 1, kind: input, shape index: {}]
  %s2 = inlined_call_operand.vmem [shape: bf16[2,256,16], index: 2, kind: input, shape index: {}]
  %s3 = inlined_call_operand.vmem [shape: bf16[16,4], index: 3, kind: input, shape index: {}]
  %s4 = inlined_call_operand.vmem [shape: bf16[3,3,4,4], index: 4, kind: input, shape index: {}]
  %s5 = inlined_call_operand.vmem [shape: bf16[4,16], index: 5, kind: input, shape index: {}]
  %s6 = inlined_call_operand.vmem [shape: f32[1,4], index: 6, kind: input, shape index: {}]
  %s7 = inlined_call_operand.vmem [shape: f32[1,4], index: 7, kind: input, shape index: {}]
  %s8 = inlined_call_operand.vmem [shape: f32[1,16], index: 8, kind: input, shape index: {}]
  %s9 = inlined_call_operand.vmem [shape: bf16[2,256,16], index: 9, kind: output, shape index: {}]
  %s10 = sld [smem:[#allocation0]]
  $region69: #{tpu_custom_call.1} parent=0
    _
  %s12 = ssub.s32 1, %s10
  %s13 = scalar_select 0, %s12, %s10
  loop: start=0, step=1, limit=6
  $region2: #{tpu_custom_call.1} parent=0 // loop_pre_header
    _
  $region3: #{tpu_custom_call.1} parent=0 // loop_header
    %s15 = sphi 0, %s19
    %p16 = scmp.ge.s32.totalorder %s15, 6
    %s22 = sphi 0, %s34
    %s23 = sphi 0, %s30
    %s24 = sphi 0, %s22
    %s25 = sphi 0, %s23
    %s26 = sphi 0, %s24
    %s27 = sphi 0, %s25
    %s39 = sphi 0, %s41
    %s42 = sphi 0, %s39
    %s43 = sphi 0, %s42
    %s59 = sphi 0, %s43
    %s75 = sphi 0, %s77
    %s78 = sphi 0, %s75
    %s79 = sphi 0, %s78
    %s95 = sphi 0, %s79
    %s111 = sphi 0, %s113
    %s114 = sphi 0, %s111
    %s115 = sphi 0, %s114
    %s131 = sphi 0, %s115
    %s135 = sphi 0, %s135
    %s137 = sphi 0, %s135
    %s138 = sphi 0, %s137
    %s152 = sphi 0, %s138
    %s156 = sphi 0, %s156
    %s158 = sphi 0, %s156
    %s159 = sphi 0, %s158
    %s173 = sphi 0, %s159
    %s177 = sphi 0, %s177
    %s179 = sphi 0, %s177
    %s180 = sphi 0, %s179
    %s194 = sphi 0, %s180
    %s198 = sphi 0, %s198
    %s200 = sphi 0, %s198
    %s201 = sphi 0, %s200
    %s215 = sphi 0, %s201
    %s219 = sphi 0, %s219
    %s221 = sphi 0, %s219
    %s222 = sphi 0, %s221
    %s236 = sphi 0, %s222
    %s240 = sphi 0, %s240
    %s242 = sphi 0, %s240
    %s243 = sphi 0, %s242
    %s257 = sphi 0, %s243
    %s265 = sphi 0, %s267
    %s268 = sphi 0, %s265
    %s269 = sphi 0, %s268
    %s285 = sphi 0, %s269
  $region4: #{tpu_custom_call.1} parent=0 // loop_header_branch
    %18 = sbr.rel (%p16) target = $region8
  $region5: #{tpu_custom_call.1} parent=0 // loop_body
    %s20 = ssub.s32 %s15, 1
    %s21 = ssub.s32 %s15, 2
    %s28 = sadd.s32 1, %s23
    %p29 = scmp.ge.s32.totalorder %s28, 2
    %s30 = scalar_select %p29, 0, %s28
    %s31 = sadd.s32 1, %s22
    %s32 = scalar_select %p29, %s31, %s22
    %p33 = scmp.ge.s32.totalorder %s32, 2
    %s34 = scalar_select %p33, 0, %s32
    %s35 = ssub.s32 %s22, %s34
    %s36 = ssub.s32 %s23, %s30
    %s37 = sor.u32 %s35, %s36
    %p38 = scmp.eq.s32.totalorder %s37, 0
    %s40 = sadd.s32 %s39, 1
    %s41 = scalar_select %p38, %s39, %s40
    %p44 = pneg %p38
    %p45 = scmp.eq.s32.totalorder %s15, 3
    %p46 = por %p44, %p45
    %p47 = scmp.ne.s32.totalorder %s39, %s42
    %p48 = scmp.eq.s32.totalorder %s15, 0
    %p49 = por %p47, %p48
    %p50 = scmp.ne.s32.totalorder %s39, %s42
    %p51 = scmp.eq.s32.totalorder %s20, 3
    %p52 = por %p50, %p51
    %p53 = scmp.ne.s32.totalorder %s42, %s43
    %p54 = scmp.eq.s32.totalorder %s20, 0
    %p55 = por %p53, %p54
    %p56 = scmp.ne.s32.totalorder %s42, %s43
    %p57 = scmp.eq.s32.totalorder %s21, 3
    %p58 = por %p56, %p57
    %p60 = scmp.ne.s32.totalorder %s43, %s59
    %p61 = scmp.eq.s32.totalorder %s21, 0
    %p62 = por %p60, %p61
    %s63 = smul.u32 %s23, 8
    %s64 = ssub.s32 %s63, 1
    %p65 = scmp.gt.s32.totalorder %s64, 0
    %s66 = scalar_select %p65, %s64, 0
    %s67 = smul.u32 %s30, 8
    %s68 = ssub.s32 %s67, 1
    %p69 = scmp.gt.s32.totalorder %s68, 0
    %s70 = scalar_select %p69, %s68, 0
    %s71 = ssub.s32 %s22, %s34
    %s72 = ssub.s32 %s66, %s70
    %s73 = sor.u32 %s71, %s72
    %p74 = scmp.eq.s32.totalorder %s73, 0
    %s76 = sadd.s32 %s75, 1
    %s77 = scalar_select %p74, %s75, %s76
    %p80 = pneg %p74
    %p81 = scmp.eq.s32.totalorder %s15, 3
    %p82 = por %p80, %p81
    %p83 = scmp.ne.s32.totalorder %s75, %s78
    %p84 = scmp.eq.s32.totalorder %s15, 0
    %p85 = por %p83, %p84
    %p86 = scmp.ne.s32.totalorder %s75, %s78
    %p87 = scmp.eq.s32.totalorder %s20, 3
    %p88 = por %p86, %p87
    %p89 = scmp.ne.s32.totalorder %s78, %s79
    %p90 = scmp.eq.s32.totalorder %s20, 0
    %p91 = por %p89, %p90
    %p92 = scmp.ne.s32.totalorder %s78, %s79
    %p93 = scmp.eq.s32.totalorder %s21, 3
    %p94 = por %p92, %p93
    %p96 = scmp.ne.s32.totalorder %s79, %s95
    %p97 = scmp.eq.s32.totalorder %s21, 0
    %p98 = por %p96, %p97
    %s99 = sadd.s32 %s23, 1
    %s100 = smul.u32 %s99, 8
    %p101 = scmp.lt.s32.totalorder %s100, 15
    %s102 = scalar_select %p101, %s100, 15
    %s103 = sadd.s32 %s30, 1
    %s104 = smul.u32 %s103, 8
    %p105 = scmp.lt.s32.totalorder %s104, 15
    %s106 = scalar_select %p105, %s104, 15
    %s107 = ssub.s32 %s22, %s34
    %s108 = ssub.s32 %s102, %s106
    %s109 = sor.u32 %s107, %s108
    %p110 = scmp.eq.s32.totalorder %s109, 0
    %s112 = sadd.s32 %s111, 1
    %s113 = scalar_select %p110, %s111, %s112
    %p116 = pneg %p110
    %p117 = scmp.eq.s32.totalorder %s15, 3
    %p118 = por %p116, %p117
    %p119 = scmp.ne.s32.totalorder %s111, %s114
    %p120 = scmp.eq.s32.totalorder %s15, 0
    %p121 = por %p119, %p120
    %p122 = scmp.ne.s32.totalorder %s111, %s114
    %p123 = scmp.eq.s32.totalorder %s20, 3
    %p124 = por %p122, %p123
    %p125 = scmp.ne.s32.totalorder %s114, %s115
    %p126 = scmp.eq.s32.totalorder %s20, 0
    %p127 = por %p125, %p126
    %p128 = scmp.ne.s32.totalorder %s114, %s115
    %p129 = scmp.eq.s32.totalorder %s21, 3
    %p130 = por %p128, %p129
    %p132 = scmp.ne.s32.totalorder %s115, %s131
    %p133 = scmp.eq.s32.totalorder %s21, 0
    %p134 = por %p132, %p133
    %s136 = sadd.s32 %s135, 1
    %p139 = scmp.eq.s32.totalorder %s15, 3
    %p140 = scmp.ne.s32.totalorder %s135, %s137
    %p141 = scmp.eq.s32.totalorder %s15, 0
    %p142 = por %p140, %p141
    %p143 = scmp.ne.s32.totalorder %s135, %s137
    %p144 = scmp.eq.s32.totalorder %s20, 3
    %p145 = por %p143, %p144
    %p146 = scmp.ne.s32.totalorder %s137, %s138
    %p147 = scmp.eq.s32.totalorder %s20, 0
    %p148 = por %p146, %p147
    %p149 = scmp.ne.s32.totalorder %s137, %s138
    %p150 = scmp.eq.s32.totalorder %s21, 3
    %p151 = por %p149, %p150
    %p153 = scmp.ne.s32.totalorder %s138, %s152
    %p154 = scmp.eq.s32.totalorder %s21, 0
    %p155 = por %p153, %p154
    %s157 = sadd.s32 %s156, 1
    %p160 = scmp.eq.s32.totalorder %s15, 3
    %p161 = scmp.ne.s32.totalorder %s156, %s158
    %p162 = scmp.eq.s32.totalorder %s15, 0
    %p163 = por %p161, %p162
    %p164 = scmp.ne.s32.totalorder %s156, %s158
    %p165 = scmp.eq.s32.totalorder %s20, 3
    %p166 = por %p164, %p165
    %p167 = scmp.ne.s32.totalorder %s158, %s159
    %p168 = scmp.eq.s32.totalorder %s20, 0
    %p169 = por %p167, %p168
    %p170 = scmp.ne.s32.totalorder %s158, %s159
    %p171 = scmp.eq.s32.totalorder %s21, 3
    %p172 = por %p170, %p171
    %p174 = scmp.ne.s32.totalorder %s159, %s173
    %p175 = scmp.eq.s32.totalorder %s21, 0
    %p176 = por %p174, %p175
    %s178 = sadd.s32 %s177, 1
    %p181 = scmp.eq.s32.totalorder %s15, 3
    %p182 = scmp.ne.s32.totalorder %s177, %s179
    %p183 = scmp.eq.s32.totalorder %s15, 0
    %p184 = por %p182, %p183
    %p185 = scmp.ne.s32.totalorder %s177, %s179
    %p186 = scmp.eq.s32.totalorder %s20, 3
    %p187 = por %p185, %p186
    %p188 = scmp.ne.s32.totalorder %s179, %s180
    %p189 = scmp.eq.s32.totalorder %s20, 0
    %p190 = por %p188, %p189
    %p191 = scmp.ne.s32.totalorder %s179, %s180
    %p192 = scmp.eq.s32.totalorder %s21, 3
    %p193 = por %p191, %p192
    %p195 = scmp.ne.s32.totalorder %s180, %s194
    %p196 = scmp.eq.s32.totalorder %s21, 0
    %p197 = por %p195, %p196
    %s199 = sadd.s32 %s198, 1
    %p202 = scmp.eq.s32.totalorder %s15, 3
    %p203 = scmp.ne.s32.totalorder %s198, %s200
    %p204 = scmp.eq.s32.totalorder %s15, 0
    %p205 = por %p203, %p204
    %p206 = scmp.ne.s32.totalorder %s198, %s200
    %p207 = scmp.eq.s32.totalorder %s20, 3
    %p208 = por %p206, %p207
    %p209 = scmp.ne.s32.totalorder %s200, %s201
    %p210 = scmp.eq.s32.totalorder %s20, 0
    %p211 = por %p209, %p210
    %p212 = scmp.ne.s32.totalorder %s200, %s201
    %p213 = scmp.eq.s32.totalorder %s21, 3
    %p214 = por %p212, %p213
    %p216 = scmp.ne.s32.totalorder %s201, %s215
    %p217 = scmp.eq.s32.totalorder %s21, 0
    %p218 = por %p216, %p217
    %s220 = sadd.s32 %s219, 1
    %p223 = scmp.eq.s32.totalorder %s15, 3
    %p224 = scmp.ne.s32.totalorder %s219, %s221
    %p225 = scmp.eq.s32.totalorder %s15, 0
    %p226 = por %p224, %p225
    %p227 = scmp.ne.s32.totalorder %s219, %s221
    %p228 = scmp.eq.s32.totalorder %s20, 3
    %p229 = por %p227, %p228
    %p230 = scmp.ne.s32.totalorder %s221, %s222
    %p231 = scmp.eq.s32.totalorder %s20, 0
    %p232 = por %p230, %p231
    %p233 = scmp.ne.s32.totalorder %s221, %s222
    %p234 = scmp.eq.s32.totalorder %s21, 3
    %p235 = por %p233, %p234
    %p237 = scmp.ne.s32.totalorder %s222, %s236
    %p238 = scmp.eq.s32.totalorder %s21, 0
    %p239 = por %p237, %p238
    %s241 = sadd.s32 %s240, 1
    %p244 = scmp.eq.s32.totalorder %s15, 3
    %p245 = scmp.ne.s32.totalorder %s240, %s242
    %p246 = scmp.eq.s32.totalorder %s15, 0
    %p247 = por %p245, %p246
    %p248 = scmp.ne.s32.totalorder %s240, %s242
    %p249 = scmp.eq.s32.totalorder %s20, 3
    %p250 = por %p248, %p249
    %p251 = scmp.ne.s32.totalorder %s242, %s243
    %p252 = scmp.eq.s32.totalorder %s20, 0
    %p253 = por %p251, %p252
    %p254 = scmp.ne.s32.totalorder %s242, %s243
    %p255 = scmp.eq.s32.totalorder %s21, 3
    %p256 = por %p254, %p255
    %p258 = scmp.ne.s32.totalorder %s243, %s257
    %p259 = scmp.eq.s32.totalorder %s21, 0
    %p260 = por %p258, %p259
    %s261 = ssub.s32 %s22, %s34
    %s262 = ssub.s32 %s23, %s30
    %s263 = sor.u32 %s261, %s262
    %p264 = scmp.eq.s32.totalorder %s263, 0
    %s266 = sadd.s32 %s265, 1
    %s267 = scalar_select %p264, %s265, %s266
    %p270 = pneg %p264
    %p271 = scmp.eq.s32.totalorder %s15, 3
    %p272 = por %p270, %p271
    %p273 = scmp.ne.s32.totalorder %s265, %s268
    %p274 = scmp.eq.s32.totalorder %s15, 0
    %p275 = por %p273, %p274
    %p276 = scmp.ne.s32.totalorder %s265, %s268
    %p277 = scmp.eq.s32.totalorder %s20, 3
    %p278 = por %p276, %p277
    %p279 = scmp.ne.s32.totalorder %s268, %s269
    %p280 = scmp.eq.s32.totalorder %s20, 0
    %p281 = por %p279, %p280
    %p282 = scmp.ne.s32.totalorder %s268, %s269
    %p283 = scmp.eq.s32.totalorder %s21, 3
    %p284 = por %p282, %p283
    %p286 = scmp.ne.s32.totalorder %s269, %s285
    %p287 = scmp.eq.s32.totalorder %s21, 0
    %p288 = por %p286, %p287
    %p289 = scmp.le.s32.totalorder 1, %s15
    %p290 = scmp.lt.s32.totalorder %s15, 5
    %p291 = pnand %p289, %p290
    %p292 = pneg %p291
    // Predicated region
    $region9: #{tpu_custom_call.1} parent=5 // pred_check
      _
    $region10: #{tpu_custom_call.1} parent=5 // pred_check_branch
      %294 = sbr.rel (%p291) target = $region12
    $region11: #{tpu_custom_call.1} parent=5 // pred_region
      %s295 = ssub.s32 %s15, 1
      // Predicated region
      $region13: #{tpu_custom_call.1} parent=11 // pred_check
        %p296 = pneg %p148
      $region14: #{tpu_custom_call.1} parent=11 // pred_check_branch
        %298 = sbr.rel (%p296) target = $region16
      $region15: #{tpu_custom_call.1} parent=11 // pred_region
        _
      $region16: #{tpu_custom_call.1} parent=11 // pred_fallthru
        _
      // Predicated region
      $region17: #{tpu_custom_call.1} parent=11 // pred_check
        %p299 = pneg %p169
      $region18: #{tpu_custom_call.1} parent=11 // pred_check_branch
        %301 = sbr.rel (%p299) target = $region20
      $region19: #{tpu_custom_call.1} parent=11 // pred_region
        _
      $region20: #{tpu_custom_call.1} parent=11 // pred_fallthru
        _
      // Predicated region
      $region21: #{tpu_custom_call.1} parent=11 // pred_check
        %p302 = pneg %p190
      $region22: #{tpu_custom_call.1} parent=11 // pred_check_branch
        %304 = sbr.rel (%p302) target = $region24
      $region23: #{tpu_custom_call.1} parent=11 // pred_region
        _
      $region24: #{tpu_custom_call.1} parent=11 // pred_fallthru
        _
      // Predicated region
      $region25: #{tpu_custom_call.1} parent=11 // pred_check
        %p305 = pneg %p211
      $region26: #{tpu_custom_call.1} parent=11 // pred_check_branch
        %307 = sbr.rel (%p305) target = $region28
      $region27: #{tpu_custom_call.1} parent=11 // pred_region
        _
      $region28: #{tpu_custom_call.1} parent=11 // pred_fallthru
        _
      // Predicated region
      $region29: #{tpu_custom_call.1} parent=11 // pred_check
        %p308 = pneg %p232
      $region30: #{tpu_custom_call.1} parent=11 // pred_check_branch
        %310 = sbr.rel (%p308) target = $region32
      $region31: #{tpu_custom_call.1} parent=11 // pred_region
        _
      $region32: #{tpu_custom_call.1} parent=11 // pred_fallthru
        _
      // Predicated region
      $region33: #{tpu_custom_call.1} parent=11 // pred_check
        %p311 = pneg %p253
      $region34: #{tpu_custom_call.1} parent=11 // pred_check_branch
        %313 = sbr.rel (%p311) target = $region36
      $region35: #{tpu_custom_call.1} parent=11 // pred_region
        _
      $region36: #{tpu_custom_call.1} parent=11 // pred_fallthru
        _
    $region12: #{tpu_custom_call.1} parent=5 // pred_fallthru
      _
    %p314 = scmp.lt.s32.totalorder %s15, 4
    // Predicated region
    $region37: #{tpu_custom_call.1} parent=5 // pred_check
      %p315 = pneg %p314
    $region38: #{tpu_custom_call.1} parent=5 // pred_check_branch
      %317 = sbr.rel (%p315) target = $region40
    $region39: #{tpu_custom_call.1} parent=5 // pred_region
      // Predicated region
      $region41: #{tpu_custom_call.1} parent=39 // pred_check
        %p318 = pneg %p49
      $region42: #{tpu_custom_call.1} parent=39 // pred_check_branch
        %320 = sbr.rel (%p318) target = $region44
      $region43: #{tpu_custom_call.1} parent=39 // pred_region
        %s321 = smul.u32 16, %s23
        %p322 = scmp.lt.s32.totalorder %s22, 1
        %s323 = scalar_select %p322, %s22, 1
        %p324 = scmp.lt.s32.totalorder %s321, 31
        %s325 = scalar_select %p324, %s321, 31
        %s326 = smul.addr %s323, 32
        %s327 = sadd.s32 %s325, %s326
        %s328 = smul.addr %s327, 4
        %s329 = scalar_lea.vmem %s0, %s328
        %s330 = smul.u32 16, %s23
      $region44: #{tpu_custom_call.1} parent=39 // pred_fallthru
        _
      // Predicated region
      $region45: #{tpu_custom_call.1} parent=39 // pred_check
        %p331 = pneg %p85
      $region46: #{tpu_custom_call.1} parent=39 // pred_check_branch
        %333 = sbr.rel (%p331) target = $region48
      $region47: #{tpu_custom_call.1} parent=39 // pred_region
        %s334 = smul.u32 %s23, 8
        %s335 = ssub.s32 %s334, 1
        %p336 = scmp.gt.s32.totalorder %s335, 0
        %s337 = scalar_select %p336, %s335, 0
        %s338 = smul.u32 2, %s337
        %p339 = scmp.lt.s32.totalorder %s22, 1
        %s340 = scalar_select %p339, %s22, 1
        %p341 = scmp.lt.s32.totalorder %s338, 31
        %s342 = scalar_select %p341, %s338, 31
        %s343 = smul.addr %s340, 32
        %s344 = sadd.s32 %s342, %s343
        %s345 = smul.addr %s344, 4
        %s346 = scalar_lea.vmem %s1, %s345
        %s347 = smul.u32 %s23, 8
        %s348 = ssub.s32 %s347, 1
        %p349 = scmp.gt.s32.totalorder %s348, 0
        %s350 = scalar_select %p349, %s348, 0
        %s351 = smul.u32 2, %s350
      $region48: #{tpu_custom_call.1} parent=39 // pred_fallthru
        _
      // Predicated region
      $region49: #{tpu_custom_call.1} parent=39 // pred_check
        %p352 = pneg %p121
      $region50: #{tpu_custom_call.1} parent=39 // pred_check_branch
        %354 = sbr.rel (%p352) target = $region52
      $region51: #{tpu_custom_call.1} parent=39 // pred_region
        %s355 = sadd.s32 %s23, 1
        %s356 = smul.u32 %s355, 8
        %p357 = scmp.lt.s32.totalorder %s356, 15
        %s358 = scalar_select %p357, %s356, 15
        %s359 = smul.u32 2, %s358
        %p360 = scmp.lt.s32.totalorder %s22, 1
        %s361 = scalar_select %p360, %s22, 1
        %p362 = scmp.lt.s32.totalorder %s359, 31
        %s363 = scalar_select %p362, %s359, 31
        %s364 = smul.addr %s361, 32
        %s365 = sadd.s32 %s363, %s364
        %s366 = smul.addr %s365, 4
        %s367 = scalar_lea.vmem %s2, %s366
        %s368 = sadd.s32 %s23, 1
        %s369 = smul.u32 %s368, 8
        %p370 = scmp.lt.s32.totalorder %s369, 15
        %s371 = scalar_select %p370, %s369, 15
        %s372 = smul.u32 2, %s371
      $region52: #{tpu_custom_call.1} parent=39 // pred_fallthru
        _
    $region40: #{tpu_custom_call.1} parent=5 // pred_fallthru
      _
    %p373 = scmp.le.s32.totalorder 1, %s15
    %p374 = scmp.lt.s32.totalorder %s15, 5
    %p375 = pnand %p373, %p374
    %p376 = pneg %p375
    // Predicated region
    $region53: #{tpu_custom_call.1} parent=5 // pred_check
      _
    $region54: #{tpu_custom_call.1} parent=5 // pred_check_branch
      %378 = sbr.rel (%p375) target = $region56
    $region55: #{tpu_custom_call.1} parent=5 // pred_region
      %s379 = ssub.s32 %s15, 1
      %s380 = smul.u32 16, %s25
      %p381 = scmp.lt.s32.totalorder %s24, 1
      %s382 = scalar_select %p381, %s24, 1
      %p383 = scmp.lt.s32.totalorder %s380, 31
      %s384 = scalar_select %p383, %s380, 31
      %s385 = smul.addr %s382, 32
      %s386 = sadd.s32 %s384, %s385
      %s387 = smul.addr %s386, 4
      %s388 = scalar_lea.vmem %s0, %s387
      %p389 = pneg %p55
      %p390 = pneg %p52
      %s391 = smul.u32 %s25, 8
      %s392 = ssub.s32 %s391, 1
      %p393 = scmp.gt.s32.totalorder %s392, 0
      %s394 = scalar_select %p393, %s392, 0
      %s395 = smul.u32 2, %s394
      %p396 = scmp.lt.s32.totalorder %s24, 1
      %s397 = scalar_select %p396, %s24, 1
      %p398 = scmp.lt.s32.totalorder %s395, 31
      %s399 = scalar_select %p398, %s395, 31
      %s400 = smul.addr %s397, 32
      %s401 = sadd.s32 %s399, %s400
      %s402 = smul.addr %s401, 4
      %s403 = scalar_lea.vmem %s1, %s402
      %p404 = pneg %p91
      %p405 = pneg %p88
      %s406 = sadd.s32 %s25, 1
      %s407 = smul.u32 %s406, 8
      %p408 = scmp.lt.s32.totalorder %s407, 15
      %s409 = scalar_select %p408, %s407, 15
      %s410 = smul.u32 2, %s409
      %p411 = scmp.lt.s32.totalorder %s24, 1
      %s412 = scalar_select %p411, %s24, 1
      %p413 = scmp.lt.s32.totalorder %s410, 31
      %s414 = scalar_select %p413, %s410, 31
      %s415 = smul.addr %s412, 32
      %s416 = sadd.s32 %s414, %s415
      %s417 = smul.addr %s416, 4
      %s418 = scalar_lea.vmem %s2, %s417
      %p419 = pneg %p127
      %p420 = pneg %p124
      %p421 = pneg %p148
      %p422 = pneg %p145
      %p423 = pneg %p169
      %p424 = pneg %p166
      %p425 = pneg %p190
      %p426 = pneg %p187
      %p427 = pneg %p211
      %p428 = pneg %p208
      %p429 = pneg %p232
      %p430 = pneg %p229
      %p431 = pneg %p253
      %p432 = pneg %p250
      %p433 = pneg %p281
      %p434 = pneg %p278
      %s435 = smul.u32 16, %s25
      %p436 = scmp.lt.s32.totalorder %s24, 1
      %s437 = scalar_select %p436, %s24, 1
      %p438 = scmp.lt.s32.totalorder %s435, 31
      %s439 = scalar_select %p438, %s435, 31
      %s440 = smul.addr %s437, 32
      %s441 = sadd.s32 %s439, %s440
      %s442 = smul.addr %s441, 4
      %s443 = scalar_lea.vmem %s9, %s442
      %s444 = smul.u32 16, %s25
      %p445 = scmp.lt.s32.totalorder %s24, 1
      %s446 = scalar_select %p445, %s24, 1
      %p447 = scmp.lt.s32.totalorder %s444, 31
      %s448 = scalar_select %p447, %s444, 31
      %s449 = smul.addr %s446, 32
      %s450 = sadd.s32 %s448, %s449
      %s451 = smul.addr %s450, 4
      %s452 = scalar_lea.vmem %s0, %s451
      %s453 = smul.u32 16, %s25
      %s454 = smul.u32 %s25, 8
      %s455 = ssub.s32 %s454, 1
      %p456 = scmp.gt.s32.totalorder %s455, 0
      %s457 = scalar_select %p456, %s455, 0
      %s458 = smul.u32 2, %s457
      %p459 = scmp.lt.s32.totalorder %s24, 1
      %s460 = scalar_select %p459, %s24, 1
      %p461 = scmp.lt.s32.totalorder %s458, 31
      %s462 = scalar_select %p461, %s458, 31
      %s463 = smul.addr %s460, 32
      %s464 = sadd.s32 %s462, %s463
      %s465 = smul.addr %s464, 4
      %s466 = scalar_lea.vmem %s1, %s465
      %s467 = smul.u32 %s25, 8
      %s468 = ssub.s32 %s467, 1
      %p469 = scmp.gt.s32.totalorder %s468, 0
      %s470 = scalar_select %p469, %s468, 0
      %s471 = smul.u32 2, %s470
      %s472 = sadd.s32 %s25, 1
      %s473 = smul.u32 %s472, 8
      %p474 = scmp.lt.s32.totalorder %s473, 15
      %s475 = scalar_select %p474, %s473, 15
      %s476 = smul.u32 2, %s475
      %p477 = scmp.lt.s32.totalorder %s24, 1
      %s478 = scalar_select %p477, %s24, 1
      %p479 = scmp.lt.s32.totalorder %s476, 31
      %s480 = scalar_select %p479, %s476, 31
      %s481 = smul.addr %s478, 32
      %s482 = sadd.s32 %s480, %s481
      %s483 = smul.addr %s482, 4
      %s484 = scalar_lea.vmem %s2, %s483
      %s485 = sadd.s32 %s25, 1
      %s486 = smul.u32 %s485, 8
      %p487 = scmp.lt.s32.totalorder %s486, 15
      %s488 = scalar_select %p487, %s486, 15
      %s489 = smul.u32 2, %s488
      %s490 = smul.u32 16, %s25
      %p491 = scmp.lt.s32.totalorder %s24, 1
      %s492 = scalar_select %p491, %s24, 1
      %p493 = scmp.lt.s32.totalorder %s490, 31
      %s494 = scalar_select %p493, %s490, 31
      %s495 = smul.addr %s492, 32
      %s496 = sadd.s32 %s494, %s495
      %s497 = smul.addr %s496, 4
      %s498 = scalar_lea.vmem %s9, %s497
      %s499 = smul.u32 16, %s25
      %v503 = vld [vmem:[%s452] sm:$0xf]
      %v504 = vld [vmem:[%s452 + $0x4] sm:$0xf]
      %v505 = vld [vmem:[%s452 + $0x8] sm:$0xf]
      %v506 = vld [vmem:[%s452 + $0xc] sm:$0xf]
      %v507 = vld [vmem:[%s452 + $0x10] sm:$0xf]
      %v508 = vld [vmem:[%s452 + $0x14] sm:$0xf]
      %v509 = vld [vmem:[%s452 + $0x18] sm:$0xf]
      %v510 = vld [vmem:[%s452 + $0x1c] sm:$0xf]
      %v511 = vld [vmem:[%s452 + $0x20] sm:$0xf]
      %v512 = vld [vmem:[%s452 + $0x24] sm:$0xf]
      %v513 = vld [vmem:[%s452 + $0x28] sm:$0xf]
      %v514 = vld [vmem:[%s452 + $0x2c] sm:$0xf]
      %v515 = vld [vmem:[%s452 + $0x30] sm:$0xf]
      %v516 = vld [vmem:[%s452 + $0x34] sm:$0xf]
      %v517 = vld [vmem:[%s452 + $0x38] sm:$0xf]
      %v518 = vld [vmem:[%s452 + $0x3c] sm:$0xf]
      %v519 = vld [vmem:[%s3] sm:$0xf]
      %v520 = vld [vmem:[%s3 + $0x4] sm:$0xf]
      %v521 = vld [vmem:[%s6] sm:$0x1]
      %v523 = vlaneseq
      %v524 = vshrl.u32 %v523, 7
      %v525 = vsub.s32 0, %v524
      %v526 = vrot.slane %v521, %v525
      %v544 = vunpack.c.l.b16 %v503
      %v545 = vunpack.c.l.b16 %v504
      %v546 = vunpack.c.l.b16 %v505
      %v547 = vunpack.c.l.b16 %v506
      %v548 = vunpack.c.l.b16 %v507
      %v549 = vunpack.c.l.b16 %v508
      %v550 = vunpack.c.l.b16 %v509
      %v551 = vunpack.c.l.b16 %v510
      %v552 = vunpack.c.l.b16 %v511
      %v553 = vunpack.c.l.b16 %v512
      %v554 = vunpack.c.l.b16 %v513
      %v555 = vunpack.c.l.b16 %v514
      %v556 = vunpack.c.l.b16 %v515
      %v557 = vunpack.c.l.b16 %v516
      %v558 = vunpack.c.l.b16 %v517
      %v559 = vunpack.c.l.b16 %v518
      %v560 = vpack.c.b16 %v545, %v544
      %v561 = vpack.c.b16 %v547, %v546
      %v562 = vpack.c.b16 %v549, %v548
      %v563 = vpack.c.b16 %v551, %v550
      %v564 = vpack.c.b16 %v553, %v552
      %v565 = vpack.c.b16 %v555, %v554
      %v566 = vpack.c.b16 %v557, %v556
      %v567 = vpack.c.b16 %v559, %v558
      %v570 = vunpack.c.l.b16 %v519
      %v571 = vunpack.c.l.b16 %v520
      %v572 = vpack.c.b16 %v571, %v570
      %vm574 = vcmask 130048
      %v576 = vsel %vm574, %v560, 0
      %v579 = vsel %vm574, %v561, 0
      %v582 = vsel %vm574, %v562, 0
      %v585 = vsel %vm574, %v563, 0
      %v588 = vsel %vm574, %v564, 0
      %v591 = vsel %vm574, %v565, 0
      %v594 = vsel %vm574, %v566, 0
      %v597 = vsel %vm574, %v567, 0
      %599 = vmatprep.subr.bf16.mxu0 0
      %600 = vmatpush1.bf16.msra.mxu0 %v572
      %601 = vmatprep.subr.bf16.mxu0 0
      %602 = vmatpush1.bf16.msra.mxu0 0
      %603 = vmatprep.subr.bf16.mxu0 0
      %604 = vmatpush1.bf16.msra.mxu0 0
      %605 = vmatprep.subr.bf16.mxu0 0
      %606 = vmatpush1.bf16.msra.mxu0 0
      %607 = vmatprep.subr.bf16.mxu0 0
      %608 = vmatpush1.bf16.msra.mxu0 0
      %609 = vmatprep.subr.bf16.mxu0 0
      %610 = vmatpush1.bf16.msra.mxu0 0
      %611 = vmatprep.subr.bf16.mxu0 0
      %612 = vmatpush1.bf16.msra.mxu0 0
      %613 = vmatprep.subr.bf16.mxu0 0
      %614 = vmatpush1.bf16.msra.mxu0 0
      %615 = vmatprep.subr.bf16.mxu0 0
      %616 = vmatpush1.bf16.msra.mxu0 0
      %617 = vmatprep.subr.bf16.mxu0 0
      %618 = vmatpush1.bf16.msra.mxu0 0
      %619 = vmatprep.subr.bf16.mxu0 0
      %620 = vmatpush1.bf16.msra.mxu0 0
      %621 = vmatprep.subr.bf16.mxu0 0
      %622 = vmatpush1.bf16.msra.mxu0 0
      %623 = vmatprep.subr.bf16.mxu0 0
      %624 = vmatpush1.bf16.msra.mxu0 0
      %625 = vmatprep.subr.bf16.mxu0 0
      %626 = vmatpush1.bf16.msra.mxu0 0
      %627 = vmatprep.subr.bf16.mxu0 0
      %628 = vmatpush1.bf16.msra.mxu0 0
      %629 = vmatprep.subr.bf16.mxu0 0
      %630 = vmatpush1.bf16.msra.mxu0 0
      %631 = vmatprep.mubr.bf16.mxu0 0
      %632 = vmatmul.mubr.bf16.gmra.mrb[0].mxu0 %v576
      %v633 = vpop.f32.mrb[0].mxu0
      %v634 = vadd.f32 %v526, %v633
      %v635 = vpop.f32.mrb[0].mxu0
      %v636 = vpop.f32.mrb[0].mxu0
      %v637 = vadd.f32 %v526, %v636
      %v638 = vpop.f32.mrb[0].mxu0
      %639 = vmatprep.mubr.bf16.mxu0 0
      %640 = vmatmul.mubr.bf16.gmra.mrb[0].mxu0 %v579
      %v641 = vpop.f32.mrb[0].mxu0
      %v642 = vadd.f32 %v526, %v641
      %v643 = vpop.f32.mrb[0].mxu0
      %v644 = vpop.f32.mrb[0].mxu0
      %v645 = vadd.f32 %v526, %v644
      %v646 = vpop.f32.mrb[0].mxu0
      %647 = vmatprep.mubr.bf16.mxu0 0
      %648 = vmatmul.mubr.bf16.gmra.mrb[0].mxu0 %v582
      %v649 = vpop.f32.mrb[0].mxu0
      %v650 = vadd.f32 %v526, %v649
      %v651 = vpop.f32.mrb[0].mxu0
      %v652 = vpop.f32.mrb[0].mxu0
      %v653 = vadd.f32 %v526, %v652
      %v654 = vpop.f32.mrb[0].mxu0
      %655 = vmatprep.mubr.bf16.mxu0 0
      %656 = vmatmul.mubr.bf16.gmra.mrb[0].mxu0 %v585
      %v657 = vpop.f32.mrb[0].mxu0
      %v658 = vadd.f32 %v526, %v657
      %v659 = vpop.f32.mrb[0].mxu0
      %v660 = vpop.f32.mrb[0].mxu0
      %v661 = vadd.f32 %v526, %v660
      %v662 = vpop.f32.mrb[0].mxu0
      %663 = vmatprep.mubr.bf16.mxu0 0
      %664 = vmatmul.mubr.bf16.gmra.mrb[0].mxu0 %v588
      %v665 = vpop.f32.mrb[0].mxu0
      %v666 = vadd.f32 %v526, %v665
      %v667 = vpop.f32.mrb[0].mxu0
      %v668 = vpop.f32.mrb[0].mxu0
      %v669 = vadd.f32 %v526, %v668
      %v670 = vpop.f32.mrb[0].mxu0
      %671 = vmatprep.mubr.bf16.mxu0 0
      %672 = vmatmul.mubr.bf16.gmra.mrb[0].mxu0 %v591
      %v673 = vpop.f32.mrb[0].mxu0
      %v674 = vadd.f32 %v526, %v673
      %v675 = vpop.f32.mrb[0].mxu0
      %v676 = vpop.f32.mrb[0].mxu0
      %v677 = vadd.f32 %v526, %v676
      %v678 = vpop.f32.mrb[0].mxu0
      %679 = vmatprep.mubr.bf16.mxu0 0
      %680 = vmatmul.mubr.bf16.gmra.mrb[0].mxu0 %v594
      %v681 = vpop.f32.mrb[0].mxu0
      %v682 = vadd.f32 %v526, %v681
      %v683 = vpop.f32.mrb[0].mxu0
      %v684 = vpop.f32.mrb[0].mxu0
      %v685 = vadd.f32 %v526, %v684
      %v686 = vpop.f32.mrb[0].mxu0
      %687 = vmatprep.mubr.bf16.mxu0 0
      %688 = vmatmul.mubr.bf16.gmra.mrb[0].mxu0 %v597
      %v689 = vpop.f32.mrb[0].mxu0
      %v690 = vadd.f32 %v526, %v689
      %v691 = vpop.f32.mrb[0].mxu0
      %v692 = vpop.f32.mrb[0].mxu0
      %v693 = vadd.f32 %v526, %v692
      %v694 = vpop.f32.mrb[0].mxu0
      %695 = vdwg.mxu0
      %v696 = vmax.f32 %v634, 0.0
      %v697 = vmax.f32 %v637, 0.0
      %v698 = vmax.f32 %v642, 0.0
      %v699 = vmax.f32 %v645, 0.0
      %v700 = vmax.f32 %v650, 0.0
      %v701 = vmax.f32 %v653, 0.0
      %v702 = vmax.f32 %v658, 0.0
      %v703 = vmax.f32 %v661, 0.0
      %v704 = vmax.f32 %v666, 0.0
      %v705 = vmax.f32 %v669, 0.0
      %v706 = vmax.f32 %v674, 0.0
      %v707 = vmax.f32 %v677, 0.0
      %v708 = vmax.f32 %v682, 0.0
      %v709 = vmax.f32 %v685, 0.0
      %v710 = vmax.f32 %v690, 0.0
      %v711 = vmax.f32 %v693, 0.0
      %v712 = vld [vmem:[%s466] sm:$0xf]
      %v713 = vld [vmem:[%s466 + $0x4] sm:$0xf]
      %v716 = vunpack.c.l.b16 %v712
      %v717 = vunpack.c.l.b16 %v713
      %v718 = vpack.c.b16 %v717, %v716
      %v720 = vsel %vm574, %v718, 0
      %722 = vmatprep.subr.bf16.mxu0 0
      %723 = vmatpush1.bf16.msra.mxu0 %v572
      %724 = vmatprep.subr.bf16.mxu0 0
      %725 = vmatpush1.bf16.msra.mxu0 0
      %726 = vmatprep.subr.bf16.mxu0 0
      %727 = vmatpush1.bf16.msra.mxu0 0
      %728 = vmatprep.subr.bf16.mxu0 0
      %729 = vmatpush1.bf16.msra.mxu0 0
      %730 = vmatprep.subr.bf16.mxu0 0
      %731 = vmatpush1.bf16.msra.mxu0 0
      %732 = vmatprep.subr.bf16.mxu0 0
      %733 = vmatpush1.bf16.msra.mxu0 0
      %734 = vmatprep.subr.bf16.mxu0 0
      %735 = vmatpush1.bf16.msra.mxu0 0
      %736 = vmatprep.subr.bf16.mxu0 0
      %737 = vmatpush1.bf16.msra.mxu0 0
      %738 = vmatprep.subr.bf16.mxu0 0
      %739 = vmatpush1.bf16.msra.mxu0 0
      %740 = vmatprep.subr.bf16.mxu0 0
      %741 = vmatpush1.bf16.msra.mxu0 0
      %742 = vmatprep.subr.bf16.mxu0 0
      %743 = vmatpush1.bf16.msra.mxu0 0
      %744 = vmatprep.subr.bf16.mxu0 0
      %745 = vmatpush1.bf16.msra.mxu0 0
      %746 = vmatprep.subr.bf16.mxu0 0
      %747 = vmatpush1.bf16.msra.mxu0 0
      %748 = vmatprep.subr.bf16.mxu0 0
      %749 = vmatpush1.bf16.msra.mxu0 0
      %750 = vmatprep.subr.bf16.mxu0 0
      %751 = vmatpush1.bf16.msra.mxu0 0
      %752 = vmatprep.subr.bf16.mxu0 0
      %753 = vmatpush1.bf16.msra.mxu0 0
      %754 = vmatprep.mubr.bf16.mxu0 0
      %755 = vmatmul.mubr.bf16.gmra.mrb[0].mxu0 %v720
      %v756 = vpop.f32.mrb[0].mxu0
      %v757 = vadd.f32 %v526, %v756
      %v758 = vpop.f32.mrb[0].mxu0
      %v759 = vpop.f32.mrb[0].mxu0
      %v760 = vadd.f32 %v526, %v759
      %v761 = vpop.f32.mrb[0].mxu0
      %762 = vdwg.mxu0
      %v763 = vmax.f32 %v757, 0.0
      %v764 = vmax.f32 %v760, 0.0
      %v765 = vld [vmem:[%s484] sm:$0xf]
      %v766 = vld [vmem:[%s484 + $0x4] sm:$0xf]
      %v769 = vunpack.c.l.b16 %v765
      %v770 = vunpack.c.l.b16 %v766
      %v771 = vpack.c.b16 %v770, %v769
      %v773 = vsel %vm574, %v771, 0
      %775 = vmatprep.subr.bf16.mxu0 0
      %776 = vmatpush1.bf16.msra.mxu0 %v572
      %777 = vmatprep.subr.bf16.mxu0 0
      %778 = vmatpush1.bf16.msra.mxu0 0
      %779 = vmatprep.subr.bf16.mxu0 0
      %780 = vmatpush1.bf16.msra.mxu0 0
      %781 = vmatprep.subr.bf16.mxu0 0
      %782 = vmatpush1.bf16.msra.mxu0 0
      %783 = vmatprep.subr.bf16.mxu0 0
      %784 = vmatpush1.bf16.msra.mxu0 0
      %785 = vmatprep.subr.bf16.mxu0 0
      %786 = vmatpush1.bf16.msra.mxu0 0
      %787 = vmatprep.subr.bf16.mxu0 0
      %788 = vmatpush1.bf16.msra.mxu0 0
      %789 = vmatprep.subr.bf16.mxu0 0
      %790 = vmatpush1.bf16.msra.mxu0 0
      %791 = vmatprep.subr.bf16.mxu0 0
      %792 = vmatpush1.bf16.msra.mxu0 0
      %793 = vmatprep.subr.bf16.mxu0 0
      %794 = vmatpush1.bf16.msra.mxu0 0
      %795 = vmatprep.subr.bf16.mxu0 0
      %796 = vmatpush1.bf16.msra.mxu0 0
      %797 = vmatprep.subr.bf16.mxu0 0
      %798 = vmatpush1.bf16.msra.mxu0 0
      %799 = vmatprep.subr.bf16.mxu0 0
      %800 = vmatpush1.bf16.msra.mxu0 0
      %801 = vmatprep.subr.bf16.mxu0 0
      %802 = vmatpush1.bf16.msra.mxu0 0
      %803 = vmatprep.subr.bf16.mxu0 0
      %804 = vmatpush1.bf16.msra.mxu0 0
      %805 = vmatprep.subr.bf16.mxu0 0
      %806 = vmatpush1.bf16.msra.mxu0 0
      %807 = vmatprep.mubr.bf16.mxu0 0
      %808 = vmatmul.mubr.bf16.gmra.mrb[0].mxu0 %v773
      %v809 = vpop.f32.mrb[0].mxu0
      %v810 = vadd.f32 %v526, %v809
      %v811 = vpop.f32.mrb[0].mxu0
      %v812 = vpop.f32.mrb[0].mxu0
      %v813 = vadd.f32 %v526, %v812
      %v814 = vpop.f32.mrb[0].mxu0
      %815 = vdwg.mxu0
      %v816 = vmax.f32 %v810, 0.0
      %v817 = vmax.f32 %v813, 0.0
      %p818 = scmp.gt.s32.totalorder %s25, 0
      %s819 = scalar_select %p818, 1, 0
      %v820 = vstv %s819
      %vm821 = vcmp.eq.s32.totalorder %v820, 1
      %v822 = vsel %vm821, %v763, 0.0
      %v823 = vsel %vm821, %v764, 0.0
      %p824 = scmp.lt.s32.totalorder %s25, 1
      %s825 = scalar_select %p824, 1, 0
      %v826 = vstv %s825
      %vm827 = vcmp.eq.s32.totalorder %v826, 1
      %v828 = vsel %vm827, %v816, 0.0
      %v829 = vsel %vm827, %v817, 0.0
      %v830 = vpack.c.bf16 %v823, %v822
      %vm831 = vcmask 31744
      %832 = vst.msk [vmem:[#allocation2 + $0x8] sm:$0xff] %vm831, %v830
      %v833 = vpack.c.bf16 %v697, %v696
      %v834 = vpack.c.bf16 %v699, %v698
      %v835 = vpack.c.bf16 %v701, %v700
      %v836 = vpack.c.bf16 %v703, %v702
      %v837 = vpack.c.bf16 %v705, %v704
      %v838 = vpack.c.bf16 %v707, %v706
      %v839 = vpack.c.bf16 %v709, %v708
      %v840 = vpack.c.bf16 %v711, %v710
      %841 = vst.msk [vmem:[#allocation2 + $0x10] sm:$0xff] %vm831, %v833
      %842 = vst.msk [vmem:[#allocation2 + $0x18] sm:$0xff] %vm831, %v834
      %843 = vst.msk [vmem:[#allocation2 + $0x20] sm:$0xff] %vm831, %v835
      %844 = vst.msk [vmem:[#allocation2 + $0x28] sm:$0xff] %vm831, %v836
      %845 = vst.msk [vmem:[#allocation2 + $0x30] sm:$0xff] %vm831, %v837
      %846 = vst.msk [vmem:[#allocation2 + $0x38] sm:$0xff] %vm831, %v838
      %847 = vst.msk [vmem:[#allocation2 + $0x40] sm:$0xff] %vm831, %v839
      %848 = vst.msk [vmem:[#allocation2 + $0x48] sm:$0xff] %vm831, %v840
      %v849 = vpack.c.bf16 %v829, %v828
      %850 = vst.msk [vmem:[#allocation2 + $0x50] sm:$0xff] %vm831, %v849
      %v851 = vlaneseq
      %v852 = vshrl.u32 %v851, 7
      %v853 = vadd.s32 %v852, 8
      %v854 = vadd.s32 %v852, 16
      %v855 = vadd.s32 %v852, 24
      %v856 = vadd.s32 %v852, 32
      %v857 = vadd.s32 %v852, 40
      %v858 = vadd.s32 %v852, 48
      %v859 = vadd.s32 %v852, 56
      %v860 = vadd.s32 %v852, 64
      %v861 = vadd.s32 %v852, 72
      %v862 = vadd.s32 %v852, 80
      %v863 = vadd.s32 %v852, 88
      %v864 = vadd.s32 %v852, 96
      %v865 = vadd.s32 %v852, 104
      %v866 = vadd.s32 %v852, 112
      %v867 = vadd.s32 %v852, 120
      %vm868 = vcmp.lt.s32.totalorder %v852, 0
      %v869 = vsub.s32 0, %v852
      %v870 = vsel %vm868, %v869, %v852
      %v871 = vshrl.u32 %v870, 4
      %v872 = vand.u32 %v870, 15
      %v873 = vsub.s32 0, %v872
      %v874 = vsel %vm868, %v873, %v872
      %vm875 = vcmp.lt.s32.totalorder %v853, 0
      %v876 = vsub.s32 0, %v853
      %v877 = vsel %vm875, %v876, %v853
      %v878 = vshrl.u32 %v877, 4
      %v879 = vand.u32 %v877, 15
      %v880 = vsub.s32 0, %v879
      %v881 = vsel %vm875, %v880, %v879
      %vm882 = vcmp.lt.s32.totalorder %v854, 0
      %v883 = vsub.s32 0, %v854
      %v884 = vsel %vm882, %v883, %v854
      %v885 = vshrl.u32 %v884, 4
      %v886 = vand.u32 %v884, 15
      %v887 = vsub.s32 0, %v886
      %v888 = vsel %vm882, %v887, %v886
      %vm889 = vcmp.lt.s32.totalorder %v855, 0
      %v890 = vsub.s32 0, %v855
      %v891 = vsel %vm889, %v890, %v855
      %v892 = vshrl.u32 %v891, 4
      %v893 = vand.u32 %v891, 15
      %v894 = vsub.s32 0, %v893
      %v895 = vsel %vm889, %v894, %v893
      %vm896 = vcmp.lt.s32.totalorder %v856, 0
      %v897 = vsub.s32 0, %v856
      %v898 = vsel %vm896, %v897, %v856
      %v899 = vshrl.u32 %v898, 4
      %v900 = vand.u32 %v898, 15
      %v901 = vsub.s32 0, %v900
      %v902 = vsel %vm896, %v901, %v900
      %vm903 = vcmp.lt.s32.totalorder %v857, 0
      %v904 = vsub.s32 0, %v857
      %v905 = vsel %vm903, %v904, %v857
      %v906 = vshrl.u32 %v905, 4
      %v907 = vand.u32 %v905, 15
      %v908 = vsub.s32 0, %v907
      %v909 = vsel %vm903, %v908, %v907
      %vm910 = vcmp.lt.s32.totalorder %v858, 0
      %v911 = vsub.s32 0, %v858
      %v912 = vsel %vm910, %v911, %v858
      %v913 = vshrl.u32 %v912, 4
      %v914 = vand.u32 %v912, 15
      %v915 = vsub.s32 0, %v914
      %v916 = vsel %vm910, %v915, %v914
      %vm917 = vcmp.lt.s32.totalorder %v859, 0
      %v918 = vsub.s32 0, %v859
      %v919 = vsel %vm917, %v918, %v859
      %v920 = vshrl.u32 %v919, 4
      %v921 = vand.u32 %v919, 15
      %v922 = vsub.s32 0, %v921
      %v923 = vsel %vm917, %v922, %v921
      %vm924 = vcmp.lt.s32.totalorder %v860, 0
      %v925 = vsub.s32 0, %v860
      %v926 = vsel %vm924, %v925, %v860
      %v927 = vshrl.u32 %v926, 4
      %v928 = vand.u32 %v926, 15
      %v929 = vsub.s32 0, %v928
      %v930 = vsel %vm924, %v929, %v928
      %vm931 = vcmp.lt.s32.totalorder %v861, 0
      %v932 = vsub.s32 0, %v861
      %v933 = vsel %vm931, %v932, %v861
      %v934 = vshrl.u32 %v933, 4
      %v935 = vand.u32 %v933, 15
      %v936 = vsub.s32 0, %v935
      %v937 = vsel %vm931, %v936, %v935
      %vm938 = vcmp.lt.s32.totalorder %v862, 0
      %v939 = vsub.s32 0, %v862
      %v940 = vsel %vm938, %v939, %v862
      %v941 = vshrl.u32 %v940, 4
      %v942 = vand.u32 %v940, 15
      %v943 = vsub.s32 0, %v942
      %v944 = vsel %vm938, %v943, %v942
      %vm945 = vcmp.lt.s32.totalorder %v863, 0
      %v946 = vsub.s32 0, %v863
      %v947 = vsel %vm945, %v946, %v863
      %v948 = vshrl.u32 %v947, 4
      %v949 = vand.u32 %v947, 15
      %v950 = vsub.s32 0, %v949
      %v951 = vsel %vm945, %v950, %v949
      %vm952 = vcmp.lt.s32.totalorder %v864, 0
      %v953 = vsub.s32 0, %v864
      %v954 = vsel %vm952, %v953, %v864
      %v955 = vshrl.u32 %v954, 4
      %v956 = vand.u32 %v954, 15
      %v957 = vsub.s32 0, %v956
      %v958 = vsel %vm952, %v957, %v956
      %vm959 = vcmp.lt.s32.totalorder %v865, 0
      %v960 = vsub.s32 0, %v865
      %v961 = vsel %vm959, %v960, %v865
      %v962 = vshrl.u32 %v961, 4
      %v963 = vand.u32 %v961, 15
      %v964 = vsub.s32 0, %v963
      %v965 = vsel %vm959, %v964, %v963
      %vm966 = vcmp.lt.s32.totalorder %v866, 0
      %v967 = vsub.s32 0, %v866
      %v968 = vsel %vm966, %v967, %v866
      %v969 = vshrl.u32 %v968, 4
      %v970 = vand.u32 %v968, 15
      %v971 = vsub.s32 0, %v970
      %v972 = vsel %vm966, %v971, %v970
      %vm973 = vcmp.lt.s32.totalorder %v867, 0
      %v974 = vsub.s32 0, %v867
      %v975 = vsel %vm973, %v974, %v867
      %v976 = vshrl.u32 %v975, 4
      %v977 = vand.u32 %v975, 15
      %v978 = vsub.s32 0, %v977
      %v979 = vsel %vm973, %v978, %v977
      %vm980 = vcmp.ne.s32.totalorder %v874, 0
      %vm981 = vcmp.ne.s32.totalorder %v881, 0
      %vm982 = vcmp.ne.s32.totalorder %v888, 0
      %vm983 = vcmp.ne.s32.totalorder %v895, 0
      %vm984 = vcmp.ne.s32.totalorder %v902, 0
      %vm985 = vcmp.ne.s32.totalorder %v909, 0
      %vm986 = vcmp.ne.s32.totalorder %v916, 0
      %vm987 = vcmp.ne.s32.totalorder %v923, 0
      %vm988 = vcmp.ne.s32.totalorder %v930, 0
      %vm989 = vcmp.ne.s32.totalorder %v937, 0
      %vm990 = vcmp.ne.s32.totalorder %v944, 0
      %vm991 = vcmp.ne.s32.totalorder %v951, 0
      %vm992 = vcmp.ne.s32.totalorder %v958, 0
      %vm993 = vcmp.ne.s32.totalorder %v965, 0
      %vm994 = vcmp.ne.s32.totalorder %v972, 0
      %vm995 = vcmp.ne.s32.totalorder %v979, 0
      %vm996 = vcmp.lt.s32.totalorder %v874, 0
      %vm997 = vcmp.lt.s32.totalorder %v881, 0
      %vm998 = vcmp.lt.s32.totalorder %v888, 0
      %vm999 = vcmp.lt.s32.totalorder %v895, 0
      %vm1000 = vcmp.lt.s32.totalorder %v902, 0
      %vm1001 = vcmp.lt.s32.totalorder %v909, 0
      %vm1002 = vcmp.lt.s32.totalorder %v916, 0
      %vm1003 = vcmp.lt.s32.totalorder %v923, 0
      %vm1004 = vcmp.lt.s32.totalorder %v930, 0
      %vm1005 = vcmp.lt.s32.totalorder %v937, 0
      %vm1006 = vcmp.lt.s32.totalorder %v944, 0
      %vm1007 = vcmp.lt.s32.totalorder %v951, 0
      %vm1008 = vcmp.lt.s32.totalorder %v958, 0
      %vm1009 = vcmp.lt.s32.totalorder %v965, 0
      %vm1010 = vcmp.lt.s32.totalorder %v972, 0
      %vm1011 = vcmp.lt.s32.totalorder %v979, 0
      %vm1012 = vmand %vm996, %vm980
      %vm1013 = vmand %vm997, %vm981
      %vm1014 = vmand %vm998, %vm982
      %vm1015 = vmand %vm999, %vm983
      %vm1016 = vmand %vm1000, %vm984
      %vm1017 = vmand %vm1001, %vm985
      %vm1018 = vmand %vm1002, %vm986
      %vm1019 = vmand %vm1003, %vm987
      %vm1020 = vmand %vm1004, %vm988
      %vm1021 = vmand %vm1005, %vm989
      %vm1022 = vmand %vm1006, %vm990
      %vm1023 = vmand %vm1007, %vm991
      %vm1024 = vmand %vm1008, %vm992
      %vm1025 = vmand %vm1009, %vm993
      %vm1026 = vmand %vm1010, %vm994
      %vm1027 = vmand %vm1011, %vm995
      %v1028 = vadd.s32 %v874, 16
      %v1029 = vadd.s32 %v881, 16
      %v1030 = vadd.s32 %v888, 16
      %v1031 = vadd.s32 %v895, 16
      %v1032 = vadd.s32 %v902, 16
      %v1033 = vadd.s32 %v909, 16
      %v1034 = vadd.s32 %v916, 16
      %v1035 = vadd.s32 %v923, 16
      %v1036 = vadd.s32 %v930, 16
      %v1037 = vadd.s32 %v937, 16
      %v1038 = vadd.s32 %v944, 16
      %v1039 = vadd.s32 %v951, 16
      %v1040 = vadd.s32 %v958, 16
      %v1041 = vadd.s32 %v965, 16
      %v1042 = vadd.s32 %v972, 16
      %v1043 = vadd.s32 %v979, 16
      %v1044 = vsel %vm1012, %v1028, %v874
      %v1045 = vsel %vm1013, %v1029, %v881
      %v1046 = vsel %vm1014, %v1030, %v888
      %v1047 = vsel %vm1015, %v1031, %v895
      %v1048 = vsel %vm1016, %v1032, %v902
      %v1049 = vsel %vm1017, %v1033, %v909
      %v1050 = vsel %vm1018, %v1034, %v916
      %v1051 = vsel %vm1019, %v1035, %v923
      %v1052 = vsel %vm1020, %v1036, %v930
      %v1053 = vsel %vm1021, %v1037, %v937
      %v1054 = vsel %vm1022, %v1038, %v944
      %v1055 = vsel %vm1023, %v1039, %v951
      %v1056 = vsel %vm1024, %v1040, %v958
      %v1057 = vsel %vm1025, %v1041, %v965
      %v1058 = vsel %vm1026, %v1042, %v972
      %v1059 = vsel %vm1027, %v1043, %v979
      %vm1060 = vcmp.gt.s32.totalorder %v1044, 0
      %vm1061 = vcmp.gt.s32.totalorder %v1045, 0
      %vm1062 = vcmp.gt.s32.totalorder %v1046, 0
      %vm1063 = vcmp.gt.s32.totalorder %v1047, 0
      %vm1064 = vcmp.gt.s32.totalorder %v1048, 0
      %vm1065 = vcmp.gt.s32.totalorder %v1049, 0
      %vm1066 = vcmp.gt.s32.totalorder %v1050, 0
      %vm1067 = vcmp.gt.s32.totalorder %v1051, 0
      %vm1068 = vcmp.gt.s32.totalorder %v1052, 0
      %vm1069 = vcmp.gt.s32.totalorder %v1053, 0
      %vm1070 = vcmp.gt.s32.totalorder %v1054, 0
      %vm1071 = vcmp.gt.s32.totalorder %v1055, 0
      %vm1072 = vcmp.gt.s32.totalorder %v1056, 0
      %vm1073 = vcmp.gt.s32.totalorder %v1057, 0
      %vm1074 = vcmp.gt.s32.totalorder %v1058, 0
      %vm1075 = vcmp.gt.s32.totalorder %v1059, 0
      %vm1076 = vcmp.lt.s32.totalorder %v1044, 15
      %vm1077 = vcmp.lt.s32.totalorder %v1045, 15
      %vm1078 = vcmp.lt.s32.totalorder %v1046, 15
      %vm1079 = vcmp.lt.s32.totalorder %v1047, 15
      %vm1080 = vcmp.lt.s32.totalorder %v1048, 15
      %vm1081 = vcmp.lt.s32.totalorder %v1049, 15
      %vm1082 = vcmp.lt.s32.totalorder %v1050, 15
      %vm1083 = vcmp.lt.s32.totalorder %v1051, 15
      %vm1084 = vcmp.lt.s32.totalorder %v1052, 15
      %vm1085 = vcmp.lt.s32.totalorder %v1053, 15
      %vm1086 = vcmp.lt.s32.totalorder %v1054, 15
      %vm1087 = vcmp.lt.s32.totalorder %v1055, 15
      %vm1088 = vcmp.lt.s32.totalorder %v1056, 15
      %vm1089 = vcmp.lt.s32.totalorder %v1057, 15
      %vm1090 = vcmp.lt.s32.totalorder %v1058, 15
      %vm1091 = vcmp.lt.s32.totalorder %v1059, 15
      %v1092 = vld [vmem:[#allocation2 + $0x10] sm:$0xff]
      %v1093 = vld [vmem:[#allocation2 + $0x18] sm:$0xff]
      %v1094 = vld [vmem:[#allocation2 + $0x20] sm:$0xff]
      %v1095 = vld [vmem:[#allocation2 + $0x28] sm:$0xff]
      %v1096 = vld [vmem:[#allocation2 + $0x30] sm:$0xff]
      %v1097 = vld [vmem:[#allocation2 + $0x38] sm:$0xff]
      %v1098 = vld [vmem:[#allocation2 + $0x40] sm:$0xff]
      %v1099 = vld [vmem:[#allocation2 + $0x48] sm:$0xff]
      %s1100 = scalar_lea.vmem %s4, 8
      %v1101 = vld [vmem:[%s1100] sm:$0x3]
      %v1102 = vld [vmem:[#allocation2] sm:$0x80]
      %v1103 = vld [vmem:[#allocation2 + $0x8] sm:$0xff]
      %vm1104 = vmpackc.low %vm1060, %vm1060
      %vm1105 = vmpackc.low %vm1061, %vm1061
      %vm1106 = vmpackc.low %vm1062, %vm1062
      %vm1107 = vmpackc.low %vm1063, %vm1063
      %vm1108 = vmpackc.low %vm1064, %vm1064
      %vm1109 = vmpackc.low %vm1065, %vm1065
      %vm1110 = vmpackc.low %vm1066, %vm1066
      %vm1111 = vmpackc.low %vm1067, %vm1067
      %vm1112 = vmpackc.low %vm1068, %vm1068
      %vm1113 = vmpackc.low %vm1069, %vm1069
      %vm1114 = vmpackc.low %vm1070, %vm1070
      %vm1115 = vmpackc.low %vm1071, %vm1071
      %vm1116 = vmpackc.low %vm1072, %vm1072
      %vm1117 = vmpackc.low %vm1073, %vm1073
      %vm1118 = vmpackc.low %vm1074, %vm1074
      %vm1119 = vmpackc.low %vm1075, %vm1075
      %v1120 = vsel %vm1104, 65537, 0
      %v1121 = vsel %vm1105, 65537, 0
      %v1122 = vsel %vm1106, 65537, 0
      %v1123 = vsel %vm1107, 65537, 0
      %v1124 = vsel %vm1108, 65537, 0
      %v1125 = vsel %vm1109, 65537, 0
      %v1126 = vsel %vm1110, 65537, 0
      %v1127 = vsel %vm1111, 65537, 0
      %v1128 = vsel %vm1112, 65537, 0
      %v1129 = vsel %vm1113, 65537, 0
      %v1130 = vsel %vm1114, 65537, 0
      %v1131 = vsel %vm1115, 65537, 0
      %v1132 = vsel %vm1116, 65537, 0
      %v1133 = vsel %vm1117, 65537, 0
      %v1134 = vsel %vm1118, 65537, 0
      %v1135 = vsel %vm1119, 65537, 0
      %v1136 = vunpack.c.l.b16 %v1120
      %v1137 = vunpack.c.l.b16 %v1121
      %v1138 = vunpack.c.l.b16 %v1122
      %v1139 = vunpack.c.l.b16 %v1123
      %v1140 = vunpack.c.l.b16 %v1124
      %v1141 = vunpack.c.l.b16 %v1125
      %v1142 = vunpack.c.l.b16 %v1126
      %v1143 = vunpack.c.l.b16 %v1127
      %v1144 = vunpack.c.l.b16 %v1128
      %v1145 = vunpack.c.l.b16 %v1129
      %v1146 = vunpack.c.l.b16 %v1130
      %v1147 = vunpack.c.l.b16 %v1131
      %v1148 = vunpack.c.l.b16 %v1132
      %v1149 = vunpack.c.l.b16 %v1133
      %v1150 = vunpack.c.l.b16 %v1134
      %v1151 = vunpack.c.l.b16 %v1135
      %v1152 = vpack.c.b16 %v1137, %v1136
      %v1153 = vpack.c.b16 %v1139, %v1138
      %v1154 = vpack.c.b16 %v1141, %v1140
      %v1155 = vpack.c.b16 %v1143, %v1142
      %v1156 = vpack.c.b16 %v1145, %v1144
      %v1157 = vpack.c.b16 %v1147, %v1146
      %v1158 = vpack.c.b16 %v1149, %v1148
      %v1159 = vpack.c.b16 %v1151, %v1150
      %vm1160 = vsmask.f32 7424
      %v1162 = vshll.u32 %v1152, 16
      %v1164 = vrot.slane %v1162, 1
      %v1165 = vshrl.u32 %v1152, 16
      %v1167 = vor.u32 %v1165, %v1164
      %v1169 = vshll.u32 %v1153, 16
      %v1171 = vrot.slane %v1169, 1
      %v1172 = vsel %vm1160, %v1167, %v1171
      %v1173 = vshrl.u32 %v1153, 16
      %v1175 = vor.u32 %v1173, %v1171
      %v1177 = vshll.u32 %v1154, 16
      %v1179 = vrot.slane %v1177, 1
      %v1180 = vsel %vm1160, %v1175, %v1179
      %v1181 = vshrl.u32 %v1154, 16
      %v1183 = vor.u32 %v1181, %v1179
      %v1185 = vshll.u32 %v1155, 16
      %v1187 = vrot.slane %v1185, 1
      %v1188 = vsel %vm1160, %v1183, %v1187
      %v1189 = vshrl.u32 %v1155, 16
      %v1191 = vor.u32 %v1189, %v1187
      %v1193 = vshll.u32 %v1156, 16
      %v1195 = vrot.slane %v1193, 1
      %v1196 = vsel %vm1160, %v1191, %v1195
      %v1197 = vshrl.u32 %v1156, 16
      %v1199 = vor.u32 %v1197, %v1195
      %v1201 = vshll.u32 %v1157, 16
      %v1203 = vrot.slane %v1201, 1
      %v1204 = vsel %vm1160, %v1199, %v1203
      %v1205 = vshrl.u32 %v1157, 16
      %v1207 = vor.u32 %v1205, %v1203
      %v1209 = vshll.u32 %v1158, 16
      %v1211 = vrot.slane %v1209, 1
      %v1212 = vsel %vm1160, %v1207, %v1211
      %v1213 = vshrl.u32 %v1158, 16
      %v1215 = vor.u32 %v1213, %v1211
      %v1217 = vshll.u32 %v1159, 16
      %v1219 = vrot.slane %v1217, 1
      %v1220 = vsel %vm1160, %v1215, %v1219
      %v1221 = vshrl.u32 %v1159, 16
      %v1223 = vor.u32 %v1221, %v1219
      %vm1224 = vcmp.ne.s16.totalorder %v1164, 0
      %vm1225 = vcmp.ne.s16.totalorder %v1172, 0
      %vm1226 = vcmp.ne.s16.totalorder %v1180, 0
      %vm1227 = vcmp.ne.s16.totalorder %v1188, 0
      %vm1228 = vcmp.ne.s16.totalorder %v1196, 0
      %vm1229 = vcmp.ne.s16.totalorder %v1204, 0
      %vm1230 = vcmp.ne.s16.totalorder %v1212, 0
      %vm1231 = vcmp.ne.s16.totalorder %v1220, 0
      %vm1232 = vcmp.ne.s16.totalorder %v1223, 0
      %v1233 = vsel %vm1224, %v1102, 0
      %v1234 = vsel %vm1225, %v1103, 0
      %v1235 = vsel %vm1226, %v1092, 0
      %v1236 = vsel %vm1227, %v1093, 0
      %v1237 = vsel %vm1228, %v1094, 0
      %v1238 = vsel %vm1229, %v1095, 0
      %v1239 = vsel %vm1230, %v1096, 0
      %v1240 = vsel %vm1231, %v1097, 0
      %v1241 = vsel %vm1232, %v1098, 0
      %v1242 = vld [vmem:[%s4] sm:$0x3]
      %vm1243 = vsmask.f32 256
      %v1245 = vshrl.u32 %v1233, 16
      %v1247 = vrot.slane %v1245, 7
      %v1249 = vshrl.u32 %v1234, 16
      %v1251 = vrot.slane %v1249, 7
      %v1252 = vshll.u32 %v1234, 16
      %v1254 = vor.u32 %v1251, %v1252
      %v1255 = vsel %vm1243, %v1247, %v1254
      %v1257 = vshrl.u32 %v1235, 16
      %v1259 = vrot.slane %v1257, 7
      %v1260 = vshll.u32 %v1235, 16
      %v1262 = vor.u32 %v1259, %v1260
      %v1263 = vsel %vm1243, %v1251, %v1262
      %v1265 = vshrl.u32 %v1236, 16
      %v1267 = vrot.slane %v1265, 7
      %v1268 = vshll.u32 %v1236, 16
      %v1270 = vor.u32 %v1267, %v1268
      %v1271 = vsel %vm1243, %v1259, %v1270
      %v1273 = vshrl.u32 %v1237, 16
      %v1275 = vrot.slane %v1273, 7
      %v1276 = vshll.u32 %v1237, 16
      %v1278 = vor.u32 %v1275, %v1276
      %v1279 = vsel %vm1243, %v1267, %v1278
      %v1281 = vshrl.u32 %v1238, 16
      %v1283 = vrot.slane %v1281, 7
      %v1284 = vshll.u32 %v1238, 16
      %v1286 = vor.u32 %v1283, %v1284
      %v1287 = vsel %vm1243, %v1275, %v1286
      %v1289 = vshrl.u32 %v1239, 16
      %v1291 = vrot.slane %v1289, 7
      %v1292 = vshll.u32 %v1239, 16
      %v1294 = vor.u32 %v1291, %v1292
      %v1295 = vsel %vm1243, %v1283, %v1294
      %v1297 = vshrl.u32 %v1240, 16
      %v1299 = vrot.slane %v1297, 7
      %v1300 = vshll.u32 %v1240, 16
      %v1302 = vor.u32 %v1299, %v1300
      %v1303 = vsel %vm1243, %v1291, %v1302
      %v1305 = vshrl.u32 %v1241, 16
      %v1307 = vrot.slane %v1305, 7
      %v1308 = vshll.u32 %v1241, 16
      %v1310 = vor.u32 %v1307, %v1308
      %v1311 = vsel %vm1243, %v1299, %v1310
      %v1313 = vsel %vm831, %v1255, 0
      %v1316 = vsel %vm831, %v1263, 0
      %v1319 = vsel %vm831, %v1271, 0
      %v1322 = vsel %vm831, %v1279, 0
      %v1325 = vsel %vm831, %v1287, 0
      %v1328 = vsel %vm831, %v1295, 0
      %v1331 = vsel %vm831, %v1303, 0
      %v1334 = vsel %vm831, %v1311, 0
      %vm1336 = vcmask 1041408
      %v1338 = vsel %vm1336, %v1242, 0
      %1340 = vmatprep.subr.bf16.mxu0 0
      %1341 = vmatpush1.bf16.msra.mxu0 %v1338
      %1342 = vmatprep.subr.bf16.mxu0 0
      %1343 = vmatpush1.bf16.msra.mxu0 0
      %1344 = vmatprep.subr.bf16.mxu0 0
      %1345 = vmatpush1.bf16.msra.mxu0 0
      %1346 = vmatprep.subr.bf16.mxu0 0
      %1347 = vmatpush1.bf16.msra.mxu0 0
      %1348 = vmatprep.subr.bf16.mxu0 0
      %1349 = vmatpush1.bf16.msra.mxu0 0
      %1350 = vmatprep.subr.bf16.mxu0 0
      %1351 = vmatpush1.bf16.msra.mxu0 0
      %1352 = vmatprep.subr.bf16.mxu0 0
      %1353 = vmatpush1.bf16.msra.mxu0 0
      %1354 = vmatprep.subr.bf16.mxu0 0
      %1355 = vmatpush1.bf16.msra.mxu0 0
      %1356 = vmatprep.subr.bf16.mxu0 0
      %1357 = vmatpush1.bf16.msra.mxu0 0
      %1358 = vmatprep.subr.bf16.mxu0 0
      %1359 = vmatpush1.bf16.msra.mxu0 0
      %1360 = vmatprep.subr.bf16.mxu0 0
      %1361 = vmatpush1.bf16.msra.mxu0 0
      %1362 = vmatprep.subr.bf16.mxu0 0
      %1363 = vmatpush1.bf16.msra.mxu0 0
      %1364 = vmatprep.subr.bf16.mxu0 0
      %1365 = vmatpush1.bf16.msra.mxu0 0
      %1366 = vmatprep.subr.bf16.mxu0 0
      %1367 = vmatpush1.bf16.msra.mxu0 0
      %1368 = vmatprep.subr.bf16.mxu0 0
      %1369 = vmatpush1.bf16.msra.mxu0 0
      %1370 = vmatprep.subr.bf16.mxu0 0
      %1371 = vmatpush1.bf16.msra.mxu0 0
      %1372 = vmatprep.mubr.bf16.mxu0 0
      %1373 = vmatmul.mubr.bf16.gmra.mrb[0].mxu0 %v1313
      %v1374 = vpop.f32.mrb[0].mxu0
      %v1375 = vadd.f32 0.0, %v1374
      %v1376 = vpop.f32.mrb[0].mxu0
      %v1377 = vpop.f32.mrb[0].mxu0
      %v1378 = vadd.f32 0.0, %v1377
      %v1379 = vpop.f32.mrb[0].mxu0
      %1380 = vmatprep.mubr.bf16.mxu0 0
      %1381 = vmatmul.mubr.bf16.gmra.mrb[0].mxu0 %v1316
      %v1382 = vpop.f32.mrb[0].mxu0
      %v1383 = vadd.f32 0.0, %v1382
      %v1384 = vpop.f32.mrb[0].mxu0
      %v1385 = vpop.f32.mrb[0].mxu0
      %v1386 = vadd.f32 0.0, %v1385
      %v1387 = vpop.f32.mrb[0].mxu0
      %1388 = vmatprep.mubr.bf16.mxu0 0
      %1389 = vmatmul.mubr.bf16.gmra.mrb[0].mxu0 %v1319
      %v1390 = vpop.f32.mrb[0].mxu0
      %v1391 = vadd.f32 0.0, %v1390
      %v1392 = vpop.f32.mrb[0].mxu0
      %v1393 = vpop.f32.mrb[0].mxu0
      %v1394 = vadd.f32 0.0, %v1393
      %v1395 = vpop.f32.mrb[0].mxu0
      %1396 = vmatprep.mubr.bf16.mxu0 0
      %1397 = vmatmul.mubr.bf16.gmra.mrb[0].mxu0 %v1322
      %v1398 = vpop.f32.mrb[0].mxu0
      %v1399 = vadd.f32 0.0, %v1398
      %v1400 = vpop.f32.mrb[0].mxu0
      %v1401 = vpop.f32.mrb[0].mxu0
      %v1402 = vadd.f32 0.0, %v1401
      %v1403 = vpop.f32.mrb[0].mxu0
      %1404 = vmatprep.mubr.bf16.mxu0 0
      %1405 = vmatmul.mubr.bf16.gmra.mrb[0].mxu0 %v1325
      %v1406 = vpop.f32.mrb[0].mxu0
      %v1407 = vadd.f32 0.0, %v1406
      %v1408 = vpop.f32.mrb[0].mxu0
      %v1409 = vpop.f32.mrb[0].mxu0
      %v1410 = vadd.f32 0.0, %v1409
      %v1411 = vpop.f32.mrb[0].mxu0
      %1412 = vmatprep.mubr.bf16.mxu0 0
      %1413 = vmatmul.mubr.bf16.gmra.mrb[0].mxu0 %v1328
      %v1414 = vpop.f32.mrb[0].mxu0
      %v1415 = vadd.f32 0.0, %v1414
      %v1416 = vpop.f32.mrb[0].mxu0
      %v1417 = vpop.f32.mrb[0].mxu0
      %v1418 = vadd.f32 0.0, %v1417
      %v1419 = vpop.f32.mrb[0].mxu0
      %1420 = vmatprep.mubr.bf16.mxu0 0
      %1421 = vmatmul.mubr.bf16.gmra.mrb[0].mxu0 %v1331
      %v1422 = vpop.f32.mrb[0].mxu0
      %v1423 = vadd.f32 0.0, %v1422
      %v1424 = vpop.f32.mrb[0].mxu0
      %v1425 = vpop.f32.mrb[0].mxu0
      %v1426 = vadd.f32 0.0, %v1425
      %v1427 = vpop.f32.mrb[0].mxu0
      %1428 = vmatprep.mubr.bf16.mxu0 0
      %1429 = vmatmul.mubr.bf16.gmra.mrb[0].mxu0 %v1334
      %v1430 = vpop.f32.mrb[0].mxu0
      %v1431 = vadd.f32 0.0, %v1430
      %v1432 = vpop.f32.mrb[0].mxu0
      %v1433 = vpop.f32.mrb[0].mxu0
      %v1434 = vadd.f32 0.0, %v1433
      %v1435 = vpop.f32.mrb[0].mxu0
      %1436 = vdwg.mxu0
      %v1438 = vsel %vm831, %v1092, 0
      %v1441 = vsel %vm831, %v1093, 0
      %v1444 = vsel %vm831, %v1094, 0
      %v1447 = vsel %vm831, %v1095, 0
      %v1450 = vsel %vm831, %v1096, 0
      %v1453 = vsel %vm831, %v1097, 0
      %v1456 = vsel %vm831, %v1098, 0
      %v1459 = vsel %vm831, %v1099, 0
      %v1462 = vsel %vm1336, %v1101, 0
      %1464 = vmatprep.subr.bf16.mxu0 0
      %1465 = vmatpush1.bf16.msra.mxu0 %v1462
      %1466 = vmatprep.subr.bf16.mxu0 0
      %1467 = vmatpush1.bf16.msra.mxu0 0
      %1468 = vmatprep.subr.bf16.mxu0 0
      %1469 = vmatpush1.bf16.msra.mxu0 0
      %1470 = vmatprep.subr.bf16.mxu0 0
      %1471 = vmatpush1.bf16.msra.mxu0 0
      %1472 = vmatprep.subr.bf16.mxu0 0
      %1473 = vmatpush1.bf16.msra.mxu0 0
      %1474 = vmatprep.subr.bf16.mxu0 0
      %1475 = vmatpush1.bf16.msra.mxu0 0
      %1476 = vmatprep.subr.bf16.mxu0 0
      %1477 = vmatpush1.bf16.msra.mxu0 0
      %1478 = vmatprep.subr.bf16.mxu0 0
      %1479 = vmatpush1.bf16.msra.mxu0 0
      %1480 = vmatprep.subr.bf16.mxu0 0
      %1481 = vmatpush1.bf16.msra.mxu0 0
      %1482 = vmatprep.subr.bf16.mxu0 0
      %1483 = vmatpush1.bf16.msra.mxu0 0
      %1484 = vmatprep.subr.bf16.mxu0 0
      %1485 = vmatpush1.bf16.msra.mxu0 0
      %1486 = vmatprep.subr.bf16.mxu0 0
      %1487 = vmatpush1.bf16.msra.mxu0 0
      %1488 = vmatprep.subr.bf16.mxu0 0
      %1489 = vmatpush1.bf16.msra.mxu0 0
      %1490 = vmatprep.subr.bf16.mxu0 0
      %1491 = vmatpush1.bf16.msra.mxu0 0
      %1492 = vmatprep.subr.bf16.mxu0 0
      %1493 = vmatpush1.bf16.msra.mxu0 0
      %1494 = vmatprep.subr.bf16.mxu0 0
      %1495 = vmatpush1.bf16.msra.mxu0 0
      %1496 = vmatprep.mubr.bf16.mxu0 0
      %1497 = vmatmul.mubr.bf16.gmra.mrb[0].mxu0 %v1438
      %v1498 = vpop.f32.mrb[0].mxu0
      %v1499 = vadd.f32 %v1375, %v1498
      %v1500 = vpop.f32.mrb[0].mxu0
      %v1501 = vpop.f32.mrb[0].mxu0
      %v1502 = vadd.f32 %v1378, %v1501
      %v1503 = vpop.f32.mrb[0].mxu0
      %1504 = vmatprep.mubr.bf16.mxu0 0
      %1505 = vmatmul.mubr.bf16.gmra.mrb[0].mxu0 %v1441
      %v1506 = vpop.f32.mrb[0].mxu0
      %v1507 = vadd.f32 %v1383, %v1506
      %v1508 = vpop.f32.mrb[0].mxu0
      %v1509 = vpop.f32.mrb[0].mxu0
      %v1510 = vadd.f32 %v1386, %v1509
      %v1511 = vpop.f32.mrb[0].mxu0
      %1512 = vmatprep.mubr.bf16.mxu0 0
      %1513 = vmatmul.mubr.bf16.gmra.mrb[0].mxu0 %v1444
      %v1514 = vpop.f32.mrb[0].mxu0
      %v1515 = vadd.f32 %v1391, %v1514
      %v1516 = vpop.f32.mrb[0].mxu0
      %v1517 = vpop.f32.mrb[0].mxu0
      %v1518 = vadd.f32 %v1394, %v1517
      %v1519 = vpop.f32.mrb[0].mxu0
      %1520 = vmatprep.mubr.bf16.mxu0 0
      %1521 = vmatmul.mubr.bf16.gmra.mrb[0].mxu0 %v1447
      %v1522 = vpop.f32.mrb[0].mxu0
      %v1523 = vadd.f32 %v1399, %v1522
      %v1524 = vpop.f32.mrb[0].mxu0
      %v1525 = vpop.f32.mrb[0].mxu0
      %v1526 = vadd.f32 %v1402, %v1525
      %v1527 = vpop.f32.mrb[0].mxu0
      %1528 = vmatprep.mubr.bf16.mxu0 0
      %1529 = vmatmul.mubr.bf16.gmra.mrb[0].mxu0 %v1450
      %v1530 = vpop.f32.mrb[0].mxu0
      %v1531 = vadd.f32 %v1407, %v1530
      %v1532 = vpop.f32.mrb[0].mxu0
      %v1533 = vpop.f32.mrb[0].mxu0
      %v1534 = vadd.f32 %v1410, %v1533
      %v1535 = vpop.f32.mrb[0].mxu0
      %1536 = vmatprep.mubr.bf16.mxu0 0
      %1537 = vmatmul.mubr.bf16.gmra.mrb[0].mxu0 %v1453
      %v1538 = vpop.f32.mrb[0].mxu0
      %v1539 = vadd.f32 %v1415, %v1538
      %v1540 = vpop.f32.mrb[0].mxu0
      %v1541 = vpop.f32.mrb[0].mxu0
      %v1542 = vadd.f32 %v1418, %v1541
      %v1543 = vpop.f32.mrb[0].mxu0
      %1544 = vmatprep.mubr.bf16.mxu0 0
      %1545 = vmatmul.mubr.bf16.gmra.mrb[0].mxu0 %v1456
      %v1546 = vpop.f32.mrb[0].mxu0
      %v1547 = vadd.f32 %v1423, %v1546
      %v1548 = vpop.f32.mrb[0].mxu0
      %v1549 = vpop.f32.mrb[0].mxu0
      %v1550 = vadd.f32 %v1426, %v1549
      %v1551 = vpop.f32.mrb[0].mxu0
      %1552 = vmatprep.mubr.bf16.mxu0 0
      %1553 = vmatmul.mubr.bf16.gmra.mrb[0].mxu0 %v1459
      %v1554 = vpop.f32.mrb[0].mxu0
      %v1555 = vadd.f32 %v1431, %v1554
      %v1556 = vpop.f32.mrb[0].mxu0
      %v1557 = vpop.f32.mrb[0].mxu0
      %v1558 = vadd.f32 %v1434, %v1557
      %v1559 = vpop.f32.mrb[0].mxu0
      %1560 = vdwg.mxu0
      %s1561 = scalar_lea.vmem %s4, 2
      %v1562 = vld [vmem:[%s1561] sm:$0x3]
      %v1564 = vsel %vm831, %v1103, 0
      %v1567 = vsel %vm1336, %v1562, 0
      %1569 = vmatprep.subr.bf16.mxu0 0
      %1570 = vmatpush1.bf16.msra.mxu0 %v1567
      %1571 = vmatprep.subr.bf16.mxu0 0
      %1572 = vmatpush1.bf16.msra.mxu0 0
      %1573 = vmatprep.subr.bf16.mxu0 0
      %1574 = vmatpush1.bf16.msra.mxu0 0
      %1575 = vmatprep.subr.bf16.mxu0 0
      %1576 = vmatpush1.bf16.msra.mxu0 0
      %1577 = vmatprep.subr.bf16.mxu0 0
      %1578 = vmatpush1.bf16.msra.mxu0 0
      %1579 = vmatprep.subr.bf16.mxu0 0
      %1580 = vmatpush1.bf16.msra.mxu0 0
      %1581 = vmatprep.subr.bf16.mxu0 0
      %1582 = vmatpush1.bf16.msra.mxu0 0
      %1583 = vmatprep.subr.bf16.mxu0 0
      %1584 = vmatpush1.bf16.msra.mxu0 0
      %1585 = vmatprep.subr.bf16.mxu0 0
      %1586 = vmatpush1.bf16.msra.mxu0 0
      %1587 = vmatprep.subr.bf16.mxu0 0
      %1588 = vmatpush1.bf16.msra.mxu0 0
      %1589 = vmatprep.subr.bf16.mxu0 0
      %1590 = vmatpush1.bf16.msra.mxu0 0
      %1591 = vmatprep.subr.bf16.mxu0 0
      %1592 = vmatpush1.bf16.msra.mxu0 0
      %1593 = vmatprep.subr.bf16.mxu0 0
      %1594 = vmatpush1.bf16.msra.mxu0 0
      %1595 = vmatprep.subr.bf16.mxu0 0
      %1596 = vmatpush1.bf16.msra.mxu0 0
      %1597 = vmatprep.subr.bf16.mxu0 0
      %1598 = vmatpush1.bf16.msra.mxu0 0
      %1599 = vmatprep.subr.bf16.mxu0 0
      %1600 = vmatpush1.bf16.msra.mxu0 0
      %1601 = vmatprep.mubr.bf16.mxu0 0
      %1602 = vmatmul.mubr.bf16.gmra.mrb[0].mxu0 %v1564
      %v1603 = vpop.f32.mrb[0].mxu0
      %v1604 = vadd.f32 0.0, %v1603
      %v1605 = vpop.f32.mrb[0].mxu0
      %v1606 = vpop.f32.mrb[0].mxu0
      %v1607 = vadd.f32 0.0, %v1606
      %v1608 = vpop.f32.mrb[0].mxu0
      %1609 = vmatprep.mubr.bf16.mxu0 0
      %1610 = vmatmul.mubr.bf16.gmra.mrb[0].mxu0 %v1438
      %v1611 = vpop.f32.mrb[0].mxu0
      %v1612 = vadd.f32 0.0, %v1611
      %v1613 = vpop.f32.mrb[0].mxu0
      %v1614 = vpop.f32.mrb[0].mxu0
      %v1615 = vadd.f32 0.0, %v1614
      %v1616 = vpop.f32.mrb[0].mxu0
      %1617 = vmatprep.mubr.bf16.mxu0 0
      %1618 = vmatmul.mubr.bf16.gmra.mrb[0].mxu0 %v1441
      %v1619 = vpop.f32.mrb[0].mxu0
      %v1620 = vadd.f32 0.0, %v1619
      %v1621 = vpop.f32.mrb[0].mxu0
      %v1622 = vpop.f32.mrb[0].mxu0
      %v1623 = vadd.f32 0.0, %v1622
      %v1624 = vpop.f32.mrb[0].mxu0
      %1625 = vmatprep.mubr.bf16.mxu0 0
      %1626 = vmatmul.mubr.bf16.gmra.mrb[0].mxu0 %v1444
      %v1627 = vpop.f32.mrb[0].mxu0
      %v1628 = vadd.f32 0.0, %v1627
      %v1629 = vpop.f32.mrb[0].mxu0
      %v1630 = vpop.f32.mrb[0].mxu0
      %v1631 = vadd.f32 0.0, %v1630
      %v1632 = vpop.f32.mrb[0].mxu0
      %1633 = vmatprep.mubr.bf16.mxu0 0
      %1634 = vmatmul.mubr.bf16.gmra.mrb[0].mxu0 %v1447
      %v1635 = vpop.f32.mrb[0].mxu0
      %v1636 = vadd.f32 0.0, %v1635
      %v1637 = vpop.f32.mrb[0].mxu0
      %v1638 = vpop.f32.mrb[0].mxu0
      %v1639 = vadd.f32 0.0, %v1638
      %v1640 = vpop.f32.mrb[0].mxu0
      %1641 = vmatprep.mubr.bf16.mxu0 0
      %1642 = vmatmul.mubr.bf16.gmra.mrb[0].mxu0 %v1450
      %v1643 = vpop.f32.mrb[0].mxu0
      %v1644 = vadd.f32 0.0, %v1643
      %v1645 = vpop.f32.mrb[0].mxu0
      %v1646 = vpop.f32.mrb[0].mxu0
      %v1647 = vadd.f32 0.0, %v1646
      %v1648 = vpop.f32.mrb[0].mxu0
      %1649 = vmatprep.mubr.bf16.mxu0 0
      %1650 = vmatmul.mubr.bf16.gmra.mrb[0].mxu0 %v1453
      %v1651 = vpop.f32.mrb[0].mxu0
      %v1652 = vadd.f32 0.0, %v1651
      %v1653 = vpop.f32.mrb[0].mxu0
      %v1654 = vpop.f32.mrb[0].mxu0
      %v1655 = vadd.f32 0.0, %v1654
      %v1656 = vpop.f32.mrb[0].mxu0
      %1657 = vmatprep.mubr.bf16.mxu0 0
      %1658 = vmatmul.mubr.bf16.gmra.mrb[0].mxu0 %v1456
      %v1659 = vpop.f32.mrb[0].mxu0
      %v1660 = vadd.f32 0.0, %v1659
      %v1661 = vpop.f32.mrb[0].mxu0
      %v1662 = vpop.f32.mrb[0].mxu0
      %v1663 = vadd.f32 0.0, %v1662
      %v1664 = vpop.f32.mrb[0].mxu0
      %1665 = vdwg.mxu0
      %v1666 = vadd.f32 %v1499, %v1604
      %v1667 = vadd.f32 %v1502, %v1607
      %v1668 = vadd.f32 %v1507, %v1612
      %v1669 = vadd.f32 %v1510, %v1615
      %v1670 = vadd.f32 %v1515, %v1620
      %v1671 = vadd.f32 %v1518, %v1623
      %v1672 = vadd.f32 %v1523, %v1628
      %v1673 = vadd.f32 %v1526, %v1631
      %v1674 = vadd.f32 %v1531, %v1636
      %v1675 = vadd.f32 %v1534, %v1639
      %v1676 = vadd.f32 %v1539, %v1644
      %v1677 = vadd.f32 %v1542, %v1647
      %v1678 = vadd.f32 %v1547, %v1652
      %v1679 = vadd.f32 %v1550, %v1655
      %v1680 = vadd.f32 %v1555, %v1660
      %v1681 = vadd.f32 %v1558, %v1663
      %v1682 = vld [vmem:[#allocation2 + $0x8] sm:$0xff]
      %v1683 = vld [vmem:[#allocation2 + $0x48] sm:$0x1]
      %vm1684 = vmpackc.low %vm1076, %vm1076
      %vm1685 = vmpackc.low %vm1077, %vm1077
      %vm1686 = vmpackc.low %vm1078, %vm1078
      %vm1687 = vmpackc.low %vm1079, %vm1079
      %vm1688 = vmpackc.low %vm1080, %vm1080
      %vm1689 = vmpackc.low %vm1081, %vm1081
      %vm1690 = vmpackc.low %vm1082, %vm1082
      %vm1691 = vmpackc.low %vm1083, %vm1083
      %vm1692 = vmpackc.low %vm1084, %vm1084
      %vm1693 = vmpackc.low %vm1085, %vm1085
      %vm1694 = vmpackc.low %vm1086, %vm1086
      %vm1695 = vmpackc.low %vm1087, %vm1087
      %vm1696 = vmpackc.low %vm1088, %vm1088
      %vm1697 = vmpackc.low %vm1089, %vm1089
      %vm1698 = vmpackc.low %vm1090, %vm1090
      %vm1699 = vmpackc.low %vm1091, %vm1091
      %v1700 = vsel %vm1684, 65537, 0
      %v1701 = vsel %vm1685, 65537, 0
      %v1702 = vsel %vm1686, 65537, 0
      %v1703 = vsel %vm1687, 65537, 0
      %v1704 = vsel %vm1688, 65537, 0
      %v1705 = vsel %vm1689, 65537, 0
      %v1706 = vsel %vm1690, 65537, 0
      %v1707 = vsel %vm1691, 65537, 0
      %v1708 = vsel %vm1692, 65537, 0
      %v1709 = vsel %vm1693, 65537, 0
      %v1710 = vsel %vm1694, 65537, 0
      %v1711 = vsel %vm1695, 65537, 0
      %v1712 = vsel %vm1696, 65537, 0
      %v1713 = vsel %vm1697, 65537, 0
      %v1714 = vsel %vm1698, 65537, 0
      %v1715 = vsel %vm1699, 65537, 0
      %v1716 = vunpack.c.l.b16 %v1700
      %v1717 = vunpack.c.l.b16 %v1701
      %v1718 = vunpack.c.l.b16 %v1702
      %v1719 = vunpack.c.l.b16 %v1703
      %v1720 = vunpack.c.l.b16 %v1704
      %v1721 = vunpack.c.l.b16 %v1705
      %v1722 = vunpack.c.l.b16 %v1706
      %v1723 = vunpack.c.l.b16 %v1707
      %v1724 = vunpack.c.l.b16 %v1708
      %v1725 = vunpack.c.l.b16 %v1709
      %v1726 = vunpack.c.l.b16 %v1710
      %v1727 = vunpack.c.l.b16 %v1711
      %v1728 = vunpack.c.l.b16 %v1712
      %v1729 = vunpack.c.l.b16 %v1713
      %v1730 = vunpack.c.l.b16 %v1714
      %v1731 = vunpack.c.l.b16 %v1715
      %v1732 = vpack.c.b16 %v1717, %v1716
      %v1733 = vpack.c.b16 %v1719, %v1718
      %v1734 = vpack.c.b16 %v1721, %v1720
      %v1735 = vpack.c.b16 %v1723, %v1722
      %v1736 = vpack.c.b16 %v1725, %v1724
      %v1737 = vpack.c.b16 %v1727, %v1726
      %v1738 = vpack.c.b16 %v1729, %v1728
      %v1739 = vpack.c.b16 %v1731, %v1730
      %v1741 = vshrl.u32 %v1732, 16
      %v1743 = vrot.slane %v1741, 7
      %v1744 = vshll.u32 %v1732, 16
      %v1746 = vor.u32 %v1743, %v1744
      %v1748 = vshrl.u32 %v1733, 16
      %v1750 = vrot.slane %v1748, 7
      %v1751 = vshll.u32 %v1733, 16
      %v1753 = vor.u32 %v1750, %v1751
      %v1754 = vsel %vm1243, %v1743, %v1753
      %v1756 = vshrl.u32 %v1734, 16
      %v1758 = vrot.slane %v1756, 7
      %v1759 = vshll.u32 %v1734, 16
      %v1761 = vor.u32 %v1758, %v1759
      %v1762 = vsel %vm1243, %v1750, %v1761
      %v1764 = vshrl.u32 %v1735, 16
      %v1766 = vrot.slane %v1764, 7
      %v1767 = vshll.u32 %v1735, 16
      %v1769 = vor.u32 %v1766, %v1767
      %v1770 = vsel %vm1243, %v1758, %v1769
      %v1772 = vshrl.u32 %v1736, 16
      %v1774 = vrot.slane %v1772, 7
      %v1775 = vshll.u32 %v1736, 16
      %v1777 = vor.u32 %v1774, %v1775
      %v1778 = vsel %vm1243, %v1766, %v1777
      %v1780 = vshrl.u32 %v1737, 16
      %v1782 = vrot.slane %v1780, 7
      %v1783 = vshll.u32 %v1737, 16
      %v1785 = vor.u32 %v1782, %v1783
      %v1786 = vsel %vm1243, %v1774, %v1785
      %v1788 = vshrl.u32 %v1738, 16
      %v1790 = vrot.slane %v1788, 7
      %v1791 = vshll.u32 %v1738, 16
      %v1793 = vor.u32 %v1790, %v1791
      %v1794 = vsel %vm1243, %v1782, %v1793
      %v1796 = vshrl.u32 %v1739, 16
      %v1798 = vrot.slane %v1796, 7
      %v1799 = vshll.u32 %v1739, 16
      %v1801 = vor.u32 %v1798, %v1799
      %v1802 = vsel %vm1243, %v1790, %v1801
      %vm1803 = vcmp.ne.s16.totalorder %v1746, 0
      %vm1804 = vcmp.ne.s16.totalorder %v1754, 0
      %vm1805 = vcmp.ne.s16.totalorder %v1762, 0
      %vm1806 = vcmp.ne.s16.totalorder %v1770, 0
      %vm1807 = vcmp.ne.s16.totalorder %v1778, 0
      %vm1808 = vcmp.ne.s16.totalorder %v1786, 0
      %vm1809 = vcmp.ne.s16.totalorder %v1794, 0
      %vm1810 = vcmp.ne.s16.totalorder %v1802, 0
      %vm1811 = vcmp.ne.s16.totalorder %v1798, 0
      %v1812 = vsel %vm1803, %v1682, 0
      %v1813 = vsel %vm1804, %v1092, 0
      %v1814 = vsel %vm1805, %v1093, 0
      %v1815 = vsel %vm1806, %v1094, 0
      %v1816 = vsel %vm1807, %v1095, 0
      %v1817 = vsel %vm1808, %v1096, 0
      %v1818 = vsel %vm1809, %v1097, 0
      %v1819 = vsel %vm1810, %v1098, 0
      %v1820 = vsel %vm1811, %v1683, 0
      %s1821 = scalar_lea.vmem %s4, 4
      %v1822 = vld [vmem:[%s1821] sm:$0x3]
      %v1824 = vshrl.u32 %v1812, 16
      %v1826 = vshll.u32 %v1812, 16
      %v1828 = vrot.slane %v1826, 1
      %v1829 = vor.u32 %v1824, %v1828
      %v1831 = vshll.u32 %v1813, 16
      %v1833 = vrot.slane %v1831, 1
      %v1834 = vsel %vm1160, %v1829, %v1833
      %v1835 = vshrl.u32 %v1813, 16
      %v1837 = vor.u32 %v1835, %v1833
      %v1839 = vshll.u32 %v1814, 16
      %v1841 = vrot.slane %v1839, 1
      %v1842 = vsel %vm1160, %v1837, %v1841
      %v1843 = vshrl.u32 %v1814, 16
      %v1845 = vor.u32 %v1843, %v1841
      %v1847 = vshll.u32 %v1815, 16
      %v1849 = vrot.slane %v1847, 1
      %v1850 = vsel %vm1160, %v1845, %v1849
      %v1851 = vshrl.u32 %v1815, 16
      %v1853 = vor.u32 %v1851, %v1849
      %v1855 = vshll.u32 %v1816, 16
      %v1857 = vrot.slane %v1855, 1
      %v1858 = vsel %vm1160, %v1853, %v1857
      %v1859 = vshrl.u32 %v1816, 16
      %v1861 = vor.u32 %v1859, %v1857
      %v1863 = vshll.u32 %v1817, 16
      %v1865 = vrot.slane %v1863, 1
      %v1866 = vsel %vm1160, %v1861, %v1865
      %v1867 = vshrl.u32 %v1817, 16
      %v1869 = vor.u32 %v1867, %v1865
      %v1871 = vshll.u32 %v1818, 16
      %v1873 = vrot.slane %v1871, 1
      %v1874 = vsel %vm1160, %v1869, %v1873
      %v1875 = vshrl.u32 %v1818, 16
      %v1877 = vor.u32 %v1875, %v1873
      %v1879 = vshll.u32 %v1819, 16
      %v1881 = vrot.slane %v1879, 1
      %v1882 = vsel %vm1160, %v1877, %v1881
      %v1883 = vshrl.u32 %v1819, 16
      %v1885 = vor.u32 %v1883, %v1881
      %v1887 = vshll.u32 %v1820, 16
      %v1889 = vrot.slane %v1887, 1
      %v1890 = vsel %vm1160, %v1885, %v1889
      %v1892 = vsel %vm831, %v1834, 0
      %v1895 = vsel %vm831, %v1842, 0
      %v1898 = vsel %vm831, %v1850, 0
      %v1901 = vsel %vm831, %v1858, 0
      %v1904 = vsel %vm831, %v1866, 0
      %v1907 = vsel %vm831, %v1874, 0
      %v1910 = vsel %vm831, %v1882, 0
      %v1913 = vsel %vm831, %v1890, 0
      %v1916 = vsel %vm1336, %v1822, 0
      %1918 = vmatprep.subr.bf16.mxu0 0
      %1919 = vmatpush1.bf16.msra.mxu0 %v1916
      %1920 = vmatprep.subr.bf16.mxu0 0
      %1921 = vmatpush1.bf16.msra.mxu0 0
      %1922 = vmatprep.subr.bf16.mxu0 0
      %1923 = vmatpush1.bf16.msra.mxu0 0
      %1924 = vmatprep.subr.bf16.mxu0 0
      %1925 = vmatpush1.bf16.msra.mxu0 0
      %1926 = vmatprep.subr.bf16.mxu0 0
      %1927 = vmatpush1.bf16.msra.mxu0 0
      %1928 = vmatprep.subr.bf16.mxu0 0
      %1929 = vmatpush1.bf16.msra.mxu0 0
      %1930 = vmatprep.subr.bf16.mxu0 0
      %1931 = vmatpush1.bf16.msra.mxu0 0
      %1932 = vmatprep.subr.bf16.mxu0 0
      %1933 = vmatpush1.bf16.msra.mxu0 0
      %1934 = vmatprep.subr.bf16.mxu0 0
      %1935 = vmatpush1.bf16.msra.mxu0 0
      %1936 = vmatprep.subr.bf16.mxu0 0
      %1937 = vmatpush1.bf16.msra.mxu0 0
      %1938 = vmatprep.subr.bf16.mxu0 0
      %1939 = vmatpush1.bf16.msra.mxu0 0
      %1940 = vmatprep.subr.bf16.mxu0 0
      %1941 = vmatpush1.bf16.msra.mxu0 0
      %1942 = vmatprep.subr.bf16.mxu0 0
      %1943 = vmatpush1.bf16.msra.mxu0 0
      %1944 = vmatprep.subr.bf16.mxu0 0
      %1945 = vmatpush1.bf16.msra.mxu0 0
      %1946 = vmatprep.subr.bf16.mxu0 0
      %1947 = vmatpush1.bf16.msra.mxu0 0
      %1948 = vmatprep.subr.bf16.mxu0 0
      %1949 = vmatpush1.bf16.msra.mxu0 0
      %1950 = vmatprep.mubr.bf16.mxu0 0
      %1951 = vmatmul.mubr.bf16.gmra.mrb[0].mxu0 %v1892
      %v1952 = vpop.f32.mrb[0].mxu0
      %v1953 = vadd.f32 0.0, %v1952
      %v1954 = vpop.f32.mrb[0].mxu0
      %v1955 = vpop.f32.mrb[0].mxu0
      %v1956 = vadd.f32 0.0, %v1955
      %v1957 = vpop.f32.mrb[0].mxu0
      %1958 = vmatprep.mubr.bf16.mxu0 0
      %1959 = vmatmul.mubr.bf16.gmra.mrb[0].mxu0 %v1895
      %v1960 = vpop.f32.mrb[0].mxu0
      %v1961 = vadd.f32 0.0, %v1960
      %v1962 = vpop.f32.mrb[0].mxu0
      %v1963 = vpop.f32.mrb[0].mxu0
      %v1964 = vadd.f32 0.0, %v1963
      %v1965 = vpop.f32.mrb[0].mxu0
      %1966 = vmatprep.mubr.bf16.mxu0 0
      %1967 = vmatmul.mubr.bf16.gmra.mrb[0].mxu0 %v1898
      %v1968 = vpop.f32.mrb[0].mxu0
      %v1969 = vadd.f32 0.0, %v1968
      %v1970 = vpop.f32.mrb[0].mxu0
      %v1971 = vpop.f32.mrb[0].mxu0
      %v1972 = vadd.f32 0.0, %v1971
      %v1973 = vpop.f32.mrb[0].mxu0
      %1974 = vmatprep.mubr.bf16.mxu0 0
      %1975 = vmatmul.mubr.bf16.gmra.mrb[0].mxu0 %v1901
      %v1976 = vpop.f32.mrb[0].mxu0
      %v1977 = vadd.f32 0.0, %v1976
      %v1978 = vpop.f32.mrb[0].mxu0
      %v1979 = vpop.f32.mrb[0].mxu0
      %v1980 = vadd.f32 0.0, %v1979
      %v1981 = vpop.f32.mrb[0].mxu0
      %1982 = vmatprep.mubr.bf16.mxu0 0
      %1983 = vmatmul.mubr.bf16.gmra.mrb[0].mxu0 %v1904
      %v1984 = vpop.f32.mrb[0].mxu0
      %v1985 = vadd.f32 0.0, %v1984
      %v1986 = vpop.f32.mrb[0].mxu0
      %v1987 = vpop.f32.mrb[0].mxu0
      %v1988 = vadd.f32 0.0, %v1987
      %v1989 = vpop.f32.mrb[0].mxu0
      %1990 = vmatprep.mubr.bf16.mxu0 0
      %1991 = vmatmul.mubr.bf16.gmra.mrb[0].mxu0 %v1907
      %v1992 = vpop.f32.mrb[0].mxu0
      %v1993 = vadd.f32 0.0, %v1992
      %v1994 = vpop.f32.mrb[0].mxu0
      %v1995 = vpop.f32.mrb[0].mxu0
      %v1996 = vadd.f32 0.0, %v1995
      %v1997 = vpop.f32.mrb[0].mxu0
      %1998 = vmatprep.mubr.bf16.mxu0 0
      %1999 = vmatmul.mubr.bf16.gmra.mrb[0].mxu0 %v1910
      %v2000 = vpop.f32.mrb[0].mxu0
      %v2001 = vadd.f32 0.0, %v2000
      %v2002 = vpop.f32.mrb[0].mxu0
      %v2003 = vpop.f32.mrb[0].mxu0
      %v2004 = vadd.f32 0.0, %v2003
      %v2005 = vpop.f32.mrb[0].mxu0
      %2006 = vmatprep.mubr.bf16.mxu0 0
      %2007 = vmatmul.mubr.bf16.gmra.mrb[0].mxu0 %v1913
      %v2008 = vpop.f32.mrb[0].mxu0
      %v2009 = vadd.f32 0.0, %v2008
      %v2010 = vpop.f32.mrb[0].mxu0
      %v2011 = vpop.f32.mrb[0].mxu0
      %v2012 = vadd.f32 0.0, %v2011
      %v2013 = vpop.f32.mrb[0].mxu0
      %2014 = vdwg.mxu0
      %v2015 = vadd.f32 %v1666, %v1953
      %v2016 = vadd.f32 %v1667, %v1956
      %v2017 = vadd.f32 %v1668, %v1961
      %v2018 = vadd.f32 %v1669, %v1964
      %v2019 = vadd.f32 %v1670, %v1969
      %v2020 = vadd.f32 %v1671, %v1972
      %v2021 = vadd.f32 %v1672, %v1977
      %v2022 = vadd.f32 %v1673, %v1980
      %v2023 = vadd.f32 %v1674, %v1985
      %v2024 = vadd.f32 %v1675, %v1988
      %v2025 = vadd.f32 %v1676, %v1993
      %v2026 = vadd.f32 %v1677, %v1996
      %v2027 = vadd.f32 %v1678, %v2001
      %v2028 = vadd.f32 %v1679, %v2004
      %v2029 = vadd.f32 %v1680, %v2009
      %v2030 = vadd.f32 %v1681, %v2012
      %v2031 = vld [vmem:[#allocation2 + $0x8] sm:$0x80]
      %v2032 = vsel %vm1224, %v2031, 0
      %v2033 = vsel %vm1225, %v1092, 0
      %v2034 = vsel %vm1226, %v1093, 0
      %v2035 = vsel %vm1227, %v1094, 0
      %v2036 = vsel %vm1228, %v1095, 0
      %v2037 = vsel %vm1229, %v1096, 0
      %v2038 = vsel %vm1230, %v1097, 0
      %v2039 = vsel %vm1231, %v1098, 0
      %v2040 = vsel %vm1232, %v1099, 0
      %s2041 = scalar_lea.vmem %s4, 6
      %v2042 = vld [vmem:[%s2041] sm:$0x3]
      %v2044 = vshrl.u32 %v2032, 16
      %v2046 = vrot.slane %v2044, 7
      %v2048 = vshrl.u32 %v2033, 16
      %v2050 = vrot.slane %v2048, 7
      %v2051 = vshll.u32 %v2033, 16
      %v2053 = vor.u32 %v2050, %v2051
      %v2054 = vsel %vm1243, %v2046, %v2053
      %v2056 = vshrl.u32 %v2034, 16
      %v2058 = vrot.slane %v2056, 7
      %v2059 = vshll.u32 %v2034, 16
      %v2061 = vor.u32 %v2058, %v2059
      %v2062 = vsel %vm1243, %v2050, %v2061
      %v2064 = vshrl.u32 %v2035, 16
      %v2066 = vrot.slane %v2064, 7
      %v2067 = vshll.u32 %v2035, 16
      %v2069 = vor.u32 %v2066, %v2067
      %v2070 = vsel %vm1243, %v2058, %v2069
      %v2072 = vshrl.u32 %v2036, 16
      %v2074 = vrot.slane %v2072, 7
      %v2075 = vshll.u32 %v2036, 16
      %v2077 = vor.u32 %v2074, %v2075
      %v2078 = vsel %vm1243, %v2066, %v2077
      %v2080 = vshrl.u32 %v2037, 16
      %v2082 = vrot.slane %v2080, 7
      %v2083 = vshll.u32 %v2037, 16
      %v2085 = vor.u32 %v2082, %v2083
      %v2086 = vsel %vm1243, %v2074, %v2085
      %v2088 = vshrl.u32 %v2038, 16
      %v2090 = vrot.slane %v2088, 7
      %v2091 = vshll.u32 %v2038, 16
      %v2093 = vor.u32 %v2090, %v2091
      %v2094 = vsel %vm1243, %v2082, %v2093
      %v2096 = vshrl.u32 %v2039, 16
      %v2098 = vrot.slane %v2096, 7
      %v2099 = vshll.u32 %v2039, 16
      %v2101 = vor.u32 %v2098, %v2099
      %v2102 = vsel %vm1243, %v2090, %v2101
      %v2104 = vshrl.u32 %v2040, 16
      %v2106 = vrot.slane %v2104, 7
      %v2107 = vshll.u32 %v2040, 16
      %v2109 = vor.u32 %v2106, %v2107
      %v2110 = vsel %vm1243, %v2098, %v2109
      %v2112 = vsel %vm831, %v2054, 0
      %v2115 = vsel %vm831, %v2062, 0
      %v2118 = vsel %vm831, %v2070, 0
      %v2121 = vsel %vm831, %v2078, 0
      %v2124 = vsel %vm831, %v2086, 0
      %v2127 = vsel %vm831, %v2094, 0
      %v2130 = vsel %vm831, %v2102, 0
      %v2133 = vsel %vm831, %v2110, 0
      %v2136 = vsel %vm1336, %v2042, 0
      %2138 = vmatprep.subr.bf16.mxu0 0
      %2139 = vmatpush1.bf16.msra.mxu0 %v2136
      %2140 = vmatprep.subr.bf16.mxu0 0
      %2141 = vmatpush1.bf16.msra.mxu0 0
      %2142 = vmatprep.subr.bf16.mxu0 0
      %2143 = vmatpush1.bf16.msra.mxu0 0
      %2144 = vmatprep.subr.bf16.mxu0 0
      %2145 = vmatpush1.bf16.msra.mxu0 0
      %2146 = vmatprep.subr.bf16.mxu0 0
      %2147 = vmatpush1.bf16.msra.mxu0 0
      %2148 = vmatprep.subr.bf16.mxu0 0
      %2149 = vmatpush1.bf16.msra.mxu0 0
      %2150 = vmatprep.subr.bf16.mxu0 0
      %2151 = vmatpush1.bf16.msra.mxu0 0
      %2152 = vmatprep.subr.bf16.mxu0 0
      %2153 = vmatpush1.bf16.msra.mxu0 0
      %2154 = vmatprep.subr.bf16.mxu0 0
      %2155 = vmatpush1.bf16.msra.mxu0 0
      %2156 = vmatprep.subr.bf16.mxu0 0
      %2157 = vmatpush1.bf16.msra.mxu0 0
      %2158 = vmatprep.subr.bf16.mxu0 0
      %2159 = vmatpush1.bf16.msra.mxu0 0
      %2160 = vmatprep.subr.bf16.mxu0 0
      %2161 = vmatpush1.bf16.msra.mxu0 0
      %2162 = vmatprep.subr.bf16.mxu0 0
      %2163 = vmatpush1.bf16.msra.mxu0 0
      %2164 = vmatprep.subr.bf16.mxu0 0
      %2165 = vmatpush1.bf16.msra.mxu0 0
      %2166 = vmatprep.subr.bf16.mxu0 0
      %2167 = vmatpush1.bf16.msra.mxu0 0
      %2168 = vmatprep.subr.bf16.mxu0 0
      %2169 = vmatpush1.bf16.msra.mxu0 0
      %2170 = vmatprep.mubr.bf16.mxu0 0
      %2171 = vmatmul.mubr.bf16.gmra.mrb[0].mxu0 %v2112
      %v2172 = vpop.f32.mrb[0].mxu0
      %v2173 = vadd.f32 0.0, %v2172
      %v2174 = vpop.f32.mrb[0].mxu0
      %v2175 = vpop.f32.mrb[0].mxu0
      %v2176 = vadd.f32 0.0, %v2175
      %v2177 = vpop.f32.mrb[0].mxu0
      %2178 = vmatprep.mubr.bf16.mxu0 0
      %2179 = vmatmul.mubr.bf16.gmra.mrb[0].mxu0 %v2115
      %v2180 = vpop.f32.mrb[0].mxu0
      %v2181 = vadd.f32 0.0, %v2180
      %v2182 = vpop.f32.mrb[0].mxu0
      %v2183 = vpop.f32.mrb[0].mxu0
      %v2184 = vadd.f32 0.0, %v2183
      %v2185 = vpop.f32.mrb[0].mxu0
      %2186 = vmatprep.mubr.bf16.mxu0 0
      %2187 = vmatmul.mubr.bf16.gmra.mrb[0].mxu0 %v2118
      %v2188 = vpop.f32.mrb[0].mxu0
      %v2189 = vadd.f32 0.0, %v2188
      %v2190 = vpop.f32.mrb[0].mxu0
      %v2191 = vpop.f32.mrb[0].mxu0
      %v2192 = vadd.f32 0.0, %v2191
      %v2193 = vpop.f32.mrb[0].mxu0
      %2194 = vmatprep.mubr.bf16.mxu0 0
      %2195 = vmatmul.mubr.bf16.gmra.mrb[0].mxu0 %v2121
      %v2196 = vpop.f32.mrb[0].mxu0
      %v2197 = vadd.f32 0.0, %v2196
      %v2198 = vpop.f32.mrb[0].mxu0
      %v2199 = vpop.f32.mrb[0].mxu0
      %v2200 = vadd.f32 0.0, %v2199
      %v2201 = vpop.f32.mrb[0].mxu0
      %2202 = vmatprep.mubr.bf16.mxu0 0
      %2203 = vmatmul.mubr.bf16.gmra.mrb[0].mxu0 %v2124
      %v2204 = vpop.f32.mrb[0].mxu0
      %v2205 = vadd.f32 0.0, %v2204
      %v2206 = vpop.f32.mrb[0].mxu0
      %v2207 = vpop.f32.mrb[0].mxu0
      %v2208 = vadd.f32 0.0, %v2207
      %v2209 = vpop.f32.mrb[0].mxu0
      %2210 = vmatprep.mubr.bf16.mxu0 0
      %2211 = vmatmul.mubr.bf16.gmra.mrb[0].mxu0 %v2127
      %v2212 = vpop.f32.mrb[0].mxu0
      %v2213 = vadd.f32 0.0, %v2212
      %v2214 = vpop.f32.mrb[0].mxu0
      %v2215 = vpop.f32.mrb[0].mxu0
      %v2216 = vadd.f32 0.0, %v2215
      %v2217 = vpop.f32.mrb[0].mxu0
      %2218 = vmatprep.mubr.bf16.mxu0 0
      %2219 = vmatmul.mubr.bf16.gmra.mrb[0].mxu0 %v2130
      %v2220 = vpop.f32.mrb[0].mxu0
      %v2221 = vadd.f32 0.0, %v2220
      %v2222 = vpop.f32.mrb[0].mxu0
      %v2223 = vpop.f32.mrb[0].mxu0
      %v2224 = vadd.f32 0.0, %v2223
      %v2225 = vpop.f32.mrb[0].mxu0
      %2226 = vmatprep.mubr.bf16.mxu0 0
      %2227 = vmatmul.mubr.bf16.gmra.mrb[0].mxu0 %v2133
      %v2228 = vpop.f32.mrb[0].mxu0
      %v2229 = vadd.f32 0.0, %v2228
      %v2230 = vpop.f32.mrb[0].mxu0
      %v2231 = vpop.f32.mrb[0].mxu0
      %v2232 = vadd.f32 0.0, %v2231
      %v2233 = vpop.f32.mrb[0].mxu0
      %2234 = vdwg.mxu0
      %v2235 = vadd.f32 %v2015, %v2173
      %v2236 = vadd.f32 %v2016, %v2176
      %v2237 = vadd.f32 %v2017, %v2181
      %v2238 = vadd.f32 %v2018, %v2184
      %v2239 = vadd.f32 %v2019, %v2189
      %v2240 = vadd.f32 %v2020, %v2192
      %v2241 = vadd.f32 %v2021, %v2197
      %v2242 = vadd.f32 %v2022, %v2200
      %v2243 = vadd.f32 %v2023, %v2205
      %v2244 = vadd.f32 %v2024, %v2208
      %v2245 = vadd.f32 %v2025, %v2213
      %v2246 = vadd.f32 %v2026, %v2216
      %v2247 = vadd.f32 %v2027, %v2221
      %v2248 = vadd.f32 %v2028, %v2224
      %v2249 = vadd.f32 %v2029, %v2229
      %v2250 = vadd.f32 %v2030, %v2232
      %v2251 = vld [vmem:[#allocation2 + $0x10] sm:$0xff]
      %v2252 = vld [vmem:[#allocation2 + $0x18] sm:$0xff]
      %v2253 = vld [vmem:[#allocation2 + $0x20] sm:$0xff]
      %v2254 = vld [vmem:[#allocation2 + $0x28] sm:$0xff]
      %v2255 = vld [vmem:[#allocation2 + $0x30] sm:$0xff]
      %v2256 = vld [vmem:[#allocation2 + $0x38] sm:$0xff]
      %v2257 = vld [vmem:[#allocation2 + $0x40] sm:$0xff]
      %v2258 = vld [vmem:[#allocation2 + $0x48] sm:$0xff]
      %v2259 = vld [vmem:[#allocation2 + $0x50] sm:$0x1]
      %v2260 = vsel %vm1803, %v2251, 0
      %v2261 = vsel %vm1804, %v2252, 0
      %v2262 = vsel %vm1805, %v2253, 0
      %v2263 = vsel %vm1806, %v2254, 0
      %v2264 = vsel %vm1807, %v2255, 0
      %v2265 = vsel %vm1808, %v2256, 0
      %v2266 = vsel %vm1809, %v2257, 0
      %v2267 = vsel %vm1810, %v2258, 0
      %v2268 = vsel %vm1811, %v2259, 0
      %s2269 = scalar_lea.vmem %s4, 10
      %v2270 = vld [vmem:[%s2269] sm:$0x3]
      %v2272 = vshrl.u32 %v2260, 16
      %v2274 = vshll.u32 %v2260, 16
      %v2276 = vrot.slane %v2274, 1
      %v2277 = vor.u32 %v2272, %v2276
      %v2279 = vshll.u32 %v2261, 16
      %v2281 = vrot.slane %v2279, 1
      %v2282 = vsel %vm1160, %v2277, %v2281
      %v2283 = vshrl.u32 %v2261, 16
      %v2285 = vor.u32 %v2283, %v2281
      %v2287 = vshll.u32 %v2262, 16
      %v2289 = vrot.slane %v2287, 1
      %v2290 = vsel %vm1160, %v2285, %v2289
      %v2291 = vshrl.u32 %v2262, 16
      %v2293 = vor.u32 %v2291, %v2289
      %v2295 = vshll.u32 %v2263, 16
      %v2297 = vrot.slane %v2295, 1
      %v2298 = vsel %vm1160, %v2293, %v2297
      %v2299 = vshrl.u32 %v2263, 16
      %v2301 = vor.u32 %v2299, %v2297
      %v2303 = vshll.u32 %v2264, 16
      %v2305 = vrot.slane %v2303, 1
      %v2306 = vsel %vm1160, %v2301, %v2305
      %v2307 = vshrl.u32 %v2264, 16
      %v2309 = vor.u32 %v2307, %v2305
      %v2311 = vshll.u32 %v2265, 16
      %v2313 = vrot.slane %v2311, 1
      %v2314 = vsel %vm1160, %v2309, %v2313
      %v2315 = vshrl.u32 %v2265, 16
      %v2317 = vor.u32 %v2315, %v2313
      %v2319 = vshll.u32 %v2266, 16
      %v2321 = vrot.slane %v2319, 1
      %v2322 = vsel %vm1160, %v2317, %v2321
      %v2323 = vshrl.u32 %v2266, 16
      %v2325 = vor.u32 %v2323, %v2321
      %v2327 = vshll.u32 %v2267, 16
      %v2329 = vrot.slane %v2327, 1
      %v2330 = vsel %vm1160, %v2325, %v2329
      %v2331 = vshrl.u32 %v2267, 16
      %v2333 = vor.u32 %v2331, %v2329
      %v2335 = vshll.u32 %v2268, 16
      %v2337 = vrot.slane %v2335, 1
      %v2338 = vsel %vm1160, %v2333, %v2337
      %v2340 = vsel %vm831, %v2282, 0
      %v2343 = vsel %vm831, %v2290, 0
      %v2346 = vsel %vm831, %v2298, 0
      %v2349 = vsel %vm831, %v2306, 0
      %v2352 = vsel %vm831, %v2314, 0
      %v2355 = vsel %vm831, %v2322, 0
      %v2358 = vsel %vm831, %v2330, 0
      %v2361 = vsel %vm831, %v2338, 0
      %v2364 = vsel %vm1336, %v2270, 0
      %2366 = vmatprep.subr.bf16.mxu0 0
      %2367 = vmatpush1.bf16.msra.mxu0 %v2364
      %2368 = vmatprep.subr.bf16.mxu0 0
      %2369 = vmatpush1.bf16.msra.mxu0 0
      %2370 = vmatprep.subr.bf16.mxu0 0
      %2371 = vmatpush1.bf16.msra.mxu0 0
      %2372 = vmatprep.subr.bf16.mxu0 0
      %2373 = vmatpush1.bf16.msra.mxu0 0
      %2374 = vmatprep.subr.bf16.mxu0 0
      %2375 = vmatpush1.bf16.msra.mxu0 0
      %2376 = vmatprep.subr.bf16.mxu0 0
      %2377 = vmatpush1.bf16.msra.mxu0 0
      %2378 = vmatprep.subr.bf16.mxu0 0
      %2379 = vmatpush1.bf16.msra.mxu0 0
      %2380 = vmatprep.subr.bf16.mxu0 0
      %2381 = vmatpush1.bf16.msra.mxu0 0
      %2382 = vmatprep.subr.bf16.mxu0 0
      %2383 = vmatpush1.bf16.msra.mxu0 0
      %2384 = vmatprep.subr.bf16.mxu0 0
      %2385 = vmatpush1.bf16.msra.mxu0 0
      %2386 = vmatprep.subr.bf16.mxu0 0
      %2387 = vmatpush1.bf16.msra.mxu0 0
      %2388 = vmatprep.subr.bf16.mxu0 0
      %2389 = vmatpush1.bf16.msra.mxu0 0
      %2390 = vmatprep.subr.bf16.mxu0 0
      %2391 = vmatpush1.bf16.msra.mxu0 0
      %2392 = vmatprep.subr.bf16.mxu0 0
      %2393 = vmatpush1.bf16.msra.mxu0 0
      %2394 = vmatprep.subr.bf16.mxu0 0
      %2395 = vmatpush1.bf16.msra.mxu0 0
      %2396 = vmatprep.subr.bf16.mxu0 0
      %2397 = vmatpush1.bf16.msra.mxu0 0
      %2398 = vmatprep.mubr.bf16.mxu0 0
      %2399 = vmatmul.mubr.bf16.gmra.mrb[0].mxu0 %v2340
      %v2400 = vpop.f32.mrb[0].mxu0
      %v2401 = vadd.f32 0.0, %v2400
      %v2402 = vpop.f32.mrb[0].mxu0
      %v2403 = vpop.f32.mrb[0].mxu0
      %v2404 = vadd.f32 0.0, %v2403
      %v2405 = vpop.f32.mrb[0].mxu0
      %2406 = vmatprep.mubr.bf16.mxu0 0
      %2407 = vmatmul.mubr.bf16.gmra.mrb[0].mxu0 %v2343
      %v2408 = vpop.f32.mrb[0].mxu0
      %v2409 = vadd.f32 0.0, %v2408
      %v2410 = vpop.f32.mrb[0].mxu0
      %v2411 = vpop.f32.mrb[0].mxu0
      %v2412 = vadd.f32 0.0, %v2411
      %v2413 = vpop.f32.mrb[0].mxu0
      %2414 = vmatprep.mubr.bf16.mxu0 0
      %2415 = vmatmul.mubr.bf16.gmra.mrb[0].mxu0 %v2346
      %v2416 = vpop.f32.mrb[0].mxu0
      %v2417 = vadd.f32 0.0, %v2416
      %v2418 = vpop.f32.mrb[0].mxu0
      %v2419 = vpop.f32.mrb[0].mxu0
      %v2420 = vadd.f32 0.0, %v2419
      %v2421 = vpop.f32.mrb[0].mxu0
      %2422 = vmatprep.mubr.bf16.mxu0 0
      %2423 = vmatmul.mubr.bf16.gmra.mrb[0].mxu0 %v2349
      %v2424 = vpop.f32.mrb[0].mxu0
      %v2425 = vadd.f32 0.0, %v2424
      %v2426 = vpop.f32.mrb[0].mxu0
      %v2427 = vpop.f32.mrb[0].mxu0
      %v2428 = vadd.f32 0.0, %v2427
      %v2429 = vpop.f32.mrb[0].mxu0
      %2430 = vmatprep.mubr.bf16.mxu0 0
      %2431 = vmatmul.mubr.bf16.gmra.mrb[0].mxu0 %v2352
      %v2432 = vpop.f32.mrb[0].mxu0
      %v2433 = vadd.f32 0.0, %v2432
      %v2434 = vpop.f32.mrb[0].mxu0
      %v2435 = vpop.f32.mrb[0].mxu0
      %v2436 = vadd.f32 0.0, %v2435
      %v2437 = vpop.f32.mrb[0].mxu0
      %2438 = vmatprep.mubr.bf16.mxu0 0
      %2439 = vmatmul.mubr.bf16.gmra.mrb[0].mxu0 %v2355
      %v2440 = vpop.f32.mrb[0].mxu0
      %v2441 = vadd.f32 0.0, %v2440
      %v2442 = vpop.f32.mrb[0].mxu0
      %v2443 = vpop.f32.mrb[0].mxu0
      %v2444 = vadd.f32 0.0, %v2443
      %v2445 = vpop.f32.mrb[0].mxu0
      %2446 = vmatprep.mubr.bf16.mxu0 0
      %2447 = vmatmul.mubr.bf16.gmra.mrb[0].mxu0 %v2358
      %v2448 = vpop.f32.mrb[0].mxu0
      %v2449 = vadd.f32 0.0, %v2448
      %v2450 = vpop.f32.mrb[0].mxu0
      %v2451 = vpop.f32.mrb[0].mxu0
      %v2452 = vadd.f32 0.0, %v2451
      %v2453 = vpop.f32.mrb[0].mxu0
      %2454 = vmatprep.mubr.bf16.mxu0 0
      %2455 = vmatmul.mubr.bf16.gmra.mrb[0].mxu0 %v2361
      %v2456 = vpop.f32.mrb[0].mxu0
      %v2457 = vadd.f32 0.0, %v2456
      %v2458 = vpop.f32.mrb[0].mxu0
      %v2459 = vpop.f32.mrb[0].mxu0
      %v2460 = vadd.f32 0.0, %v2459
      %v2461 = vpop.f32.mrb[0].mxu0
      %2462 = vdwg.mxu0
      %v2463 = vadd.f32 %v2235, %v2401
      %v2464 = vadd.f32 %v2236, %v2404
      %v2465 = vadd.f32 %v2237, %v2409
      %v2466 = vadd.f32 %v2238, %v2412
      %v2467 = vadd.f32 %v2239, %v2417
      %v2468 = vadd.f32 %v2240, %v2420
      %v2469 = vadd.f32 %v2241, %v2425
      %v2470 = vadd.f32 %v2242, %v2428
      %v2471 = vadd.f32 %v2243, %v2433
      %v2472 = vadd.f32 %v2244, %v2436
      %v2473 = vadd.f32 %v2245, %v2441
      %v2474 = vadd.f32 %v2246, %v2444
      %v2475 = vadd.f32 %v2247, %v2449
      %v2476 = vadd.f32 %v2248, %v2452
      %v2477 = vadd.f32 %v2249, %v2457
      %v2478 = vadd.f32 %v2250, %v2460
      %v2479 = vld [vmem:[#allocation2 + $0x10] sm:$0x80]
      %v2480 = vld [vmem:[#allocation2 + $0x50] sm:$0xff]
      %v2481 = vsel %vm1224, %v2479, 0
      %v2482 = vsel %vm1225, %v2252, 0
      %v2483 = vsel %vm1226, %v2253, 0
      %v2484 = vsel %vm1227, %v2254, 0
      %v2485 = vsel %vm1228, %v2255, 0
      %v2486 = vsel %vm1229, %v2256, 0
      %v2487 = vsel %vm1230, %v2257, 0
      %v2488 = vsel %vm1231, %v2258, 0
      %v2489 = vsel %vm1232, %v2480, 0
      %s2490 = scalar_lea.vmem %s4, 12
      %v2491 = vld [vmem:[%s2490] sm:$0x3]
      %v2493 = vshrl.u32 %v2481, 16
      %v2495 = vrot.slane %v2493, 7
      %v2497 = vshrl.u32 %v2482, 16
      %v2499 = vrot.slane %v2497, 7
      %v2500 = vshll.u32 %v2482, 16
      %v2502 = vor.u32 %v2499, %v2500
      %v2503 = vsel %vm1243, %v2495, %v2502
      %v2505 = vshrl.u32 %v2483, 16
      %v2507 = vrot.slane %v2505, 7
      %v2508 = vshll.u32 %v2483, 16
      %v2510 = vor.u32 %v2507, %v2508
      %v2511 = vsel %vm1243, %v2499, %v2510
      %v2513 = vshrl.u32 %v2484, 16
      %v2515 = vrot.slane %v2513, 7
      %v2516 = vshll.u32 %v2484, 16
      %v2518 = vor.u32 %v2515, %v2516
      %v2519 = vsel %vm1243, %v2507, %v2518
      %v2521 = vshrl.u32 %v2485, 16
      %v2523 = vrot.slane %v2521, 7
      %v2524 = vshll.u32 %v2485, 16
      %v2526 = vor.u32 %v2523, %v2524
      %v2527 = vsel %vm1243, %v2515, %v2526
      %v2529 = vshrl.u32 %v2486, 16
      %v2531 = vrot.slane %v2529, 7
      %v2532 = vshll.u32 %v2486, 16
      %v2534 = vor.u32 %v2531, %v2532
      %v2535 = vsel %vm1243, %v2523, %v2534
      %v2537 = vshrl.u32 %v2487, 16
      %v2539 = vrot.slane %v2537, 7
      %v2540 = vshll.u32 %v2487, 16
      %v2542 = vor.u32 %v2539, %v2540
      %v2543 = vsel %vm1243, %v2531, %v2542
      %v2545 = vshrl.u32 %v2488, 16
      %v2547 = vrot.slane %v2545, 7
      %v2548 = vshll.u32 %v2488, 16
      %v2550 = vor.u32 %v2547, %v2548
      %v2551 = vsel %vm1243, %v2539, %v2550
      %v2553 = vshrl.u32 %v2489, 16
      %v2555 = vrot.slane %v2553, 7
      %v2556 = vshll.u32 %v2489, 16
      %v2558 = vor.u32 %v2555, %v2556
      %v2559 = vsel %vm1243, %v2547, %v2558
      %v2561 = vsel %vm831, %v2503, 0
      %v2564 = vsel %vm831, %v2511, 0
      %v2567 = vsel %vm831, %v2519, 0
      %v2570 = vsel %vm831, %v2527, 0
      %v2573 = vsel %vm831, %v2535, 0
      %v2576 = vsel %vm831, %v2543, 0
      %v2579 = vsel %vm831, %v2551, 0
      %v2582 = vsel %vm831, %v2559, 0
      %v2585 = vsel %vm1336, %v2491, 0
      %2587 = vmatprep.subr.bf16.mxu0 0
      %2588 = vmatpush1.bf16.msra.mxu0 %v2585
      %2589 = vmatprep.subr.bf16.mxu0 0
      %2590 = vmatpush1.bf16.msra.mxu0 0
      %2591 = vmatprep.subr.bf16.mxu0 0
      %2592 = vmatpush1.bf16.msra.mxu0 0
      %2593 = vmatprep.subr.bf16.mxu0 0
      %2594 = vmatpush1.bf16.msra.mxu0 0
      %2595 = vmatprep.subr.bf16.mxu0 0
      %2596 = vmatpush1.bf16.msra.mxu0 0
      %2597 = vmatprep.subr.bf16.mxu0 0
      %2598 = vmatpush1.bf16.msra.mxu0 0
      %2599 = vmatprep.subr.bf16.mxu0 0
      %2600 = vmatpush1.bf16.msra.mxu0 0
      %2601 = vmatprep.subr.bf16.mxu0 0
      %2602 = vmatpush1.bf16.msra.mxu0 0
      %2603 = vmatprep.subr.bf16.mxu0 0
      %2604 = vmatpush1.bf16.msra.mxu0 0
      %2605 = vmatprep.subr.bf16.mxu0 0
      %2606 = vmatpush1.bf16.msra.mxu0 0
      %2607 = vmatprep.subr.bf16.mxu0 0
      %2608 = vmatpush1.bf16.msra.mxu0 0
      %2609 = vmatprep.subr.bf16.mxu0 0
      %2610 = vmatpush1.bf16.msra.mxu0 0
      %2611 = vmatprep.subr.bf16.mxu0 0
      %2612 = vmatpush1.bf16.msra.mxu0 0
      %2613 = vmatprep.subr.bf16.mxu0 0
      %2614 = vmatpush1.bf16.msra.mxu0 0
      %2615 = vmatprep.subr.bf16.mxu0 0
      %2616 = vmatpush1.bf16.msra.mxu0 0
      %2617 = vmatprep.subr.bf16.mxu0 0
      %2618 = vmatpush1.bf16.msra.mxu0 0
      %2619 = vmatprep.mubr.bf16.mxu0 0
      %2620 = vmatmul.mubr.bf16.gmra.mrb[0].mxu0 %v2561
      %v2621 = vpop.f32.mrb[0].mxu0
      %v2622 = vadd.f32 0.0, %v2621
      %v2623 = vpop.f32.mrb[0].mxu0
      %v2624 = vpop.f32.mrb[0].mxu0
      %v2625 = vadd.f32 0.0, %v2624
      %v2626 = vpop.f32.mrb[0].mxu0
      %2627 = vmatprep.mubr.bf16.mxu0 0
      %2628 = vmatmul.mubr.bf16.gmra.mrb[0].mxu0 %v2564
      %v2629 = vpop.f32.mrb[0].mxu0
      %v2630 = vadd.f32 0.0, %v2629
      %v2631 = vpop.f32.mrb[0].mxu0
      %v2632 = vpop.f32.mrb[0].mxu0
      %v2633 = vadd.f32 0.0, %v2632
      %v2634 = vpop.f32.mrb[0].mxu0
      %2635 = vmatprep.mubr.bf16.mxu0 0
      %2636 = vmatmul.mubr.bf16.gmra.mrb[0].mxu0 %v2567
      %v2637 = vpop.f32.mrb[0].mxu0
      %v2638 = vadd.f32 0.0, %v2637
      %v2639 = vpop.f32.mrb[0].mxu0
      %v2640 = vpop.f32.mrb[0].mxu0
      %v2641 = vadd.f32 0.0, %v2640
      %v2642 = vpop.f32.mrb[0].mxu0
      %2643 = vmatprep.mubr.bf16.mxu0 0
      %2644 = vmatmul.mubr.bf16.gmra.mrb[0].mxu0 %v2570
      %v2645 = vpop.f32.mrb[0].mxu0
      %v2646 = vadd.f32 0.0, %v2645
      %v2647 = vpop.f32.mrb[0].mxu0
      %v2648 = vpop.f32.mrb[0].mxu0
      %v2649 = vadd.f32 0.0, %v2648
      %v2650 = vpop.f32.mrb[0].mxu0
      %2651 = vmatprep.mubr.bf16.mxu0 0
      %2652 = vmatmul.mubr.bf16.gmra.mrb[0].mxu0 %v2573
      %v2653 = vpop.f32.mrb[0].mxu0
      %v2654 = vadd.f32 0.0, %v2653
      %v2655 = vpop.f32.mrb[0].mxu0
      %v2656 = vpop.f32.mrb[0].mxu0
      %v2657 = vadd.f32 0.0, %v2656
      %v2658 = vpop.f32.mrb[0].mxu0
      %2659 = vmatprep.mubr.bf16.mxu0 0
      %2660 = vmatmul.mubr.bf16.gmra.mrb[0].mxu0 %v2576
      %v2661 = vpop.f32.mrb[0].mxu0
      %v2662 = vadd.f32 0.0, %v2661
      %v2663 = vpop.f32.mrb[0].mxu0
      %v2664 = vpop.f32.mrb[0].mxu0
      %v2665 = vadd.f32 0.0, %v2664
      %v2666 = vpop.f32.mrb[0].mxu0
      %2667 = vmatprep.mubr.bf16.mxu0 0
      %2668 = vmatmul.mubr.bf16.gmra.mrb[0].mxu0 %v2579
      %v2669 = vpop.f32.mrb[0].mxu0
      %v2670 = vadd.f32 0.0, %v2669
      %v2671 = vpop.f32.mrb[0].mxu0
      %v2672 = vpop.f32.mrb[0].mxu0
      %v2673 = vadd.f32 0.0, %v2672
      %v2674 = vpop.f32.mrb[0].mxu0
      %2675 = vmatprep.mubr.bf16.mxu0 0
      %2676 = vmatmul.mubr.bf16.gmra.mrb[0].mxu0 %v2582
      %v2677 = vpop.f32.mrb[0].mxu0
      %v2678 = vadd.f32 0.0, %v2677
      %v2679 = vpop.f32.mrb[0].mxu0
      %v2680 = vpop.f32.mrb[0].mxu0
      %v2681 = vadd.f32 0.0, %v2680
      %v2682 = vpop.f32.mrb[0].mxu0
      %2683 = vdwg.mxu0
      %v2684 = vadd.f32 %v2463, %v2622
      %v2685 = vadd.f32 %v2464, %v2625
      %v2686 = vadd.f32 %v2465, %v2630
      %v2687 = vadd.f32 %v2466, %v2633
      %v2688 = vadd.f32 %v2467, %v2638
      %v2689 = vadd.f32 %v2468, %v2641
      %v2690 = vadd.f32 %v2469, %v2646
      %v2691 = vadd.f32 %v2470, %v2649
      %v2692 = vadd.f32 %v2471, %v2654
      %v2693 = vadd.f32 %v2472, %v2657
      %v2694 = vadd.f32 %v2473, %v2662
      %v2695 = vadd.f32 %v2474, %v2665
      %v2696 = vadd.f32 %v2475, %v2670
      %v2697 = vadd.f32 %v2476, %v2673
      %v2698 = vadd.f32 %v2477, %v2678
      %v2699 = vadd.f32 %v2478, %v2681
      %s2700 = scalar_lea.vmem %s4, 14
      %v2701 = vld [vmem:[%s2700] sm:$0x3]
      %v2703 = vsel %vm831, %v2252, 0
      %v2706 = vsel %vm831, %v2253, 0
      %v2709 = vsel %vm831, %v2254, 0
      %v2712 = vsel %vm831, %v2255, 0
      %v2715 = vsel %vm831, %v2256, 0
      %v2718 = vsel %vm831, %v2257, 0
      %v2721 = vsel %vm831, %v2258, 0
      %v2724 = vsel %vm831, %v2480, 0
      %v2727 = vsel %vm1336, %v2701, 0
      %2729 = vmatprep.subr.bf16.mxu0 0
      %2730 = vmatpush1.bf16.msra.mxu0 %v2727
      %2731 = vmatprep.subr.bf16.mxu0 0
      %2732 = vmatpush1.bf16.msra.mxu0 0
      %2733 = vmatprep.subr.bf16.mxu0 0
      %2734 = vmatpush1.bf16.msra.mxu0 0
      %2735 = vmatprep.subr.bf16.mxu0 0
      %2736 = vmatpush1.bf16.msra.mxu0 0
      %2737 = vmatprep.subr.bf16.mxu0 0
      %2738 = vmatpush1.bf16.msra.mxu0 0
      %2739 = vmatprep.subr.bf16.mxu0 0
      %2740 = vmatpush1.bf16.msra.mxu0 0
      %2741 = vmatprep.subr.bf16.mxu0 0
      %2742 = vmatpush1.bf16.msra.mxu0 0
      %2743 = vmatprep.subr.bf16.mxu0 0
      %2744 = vmatpush1.bf16.msra.mxu0 0
      %2745 = vmatprep.subr.bf16.mxu0 0
      %2746 = vmatpush1.bf16.msra.mxu0 0
      %2747 = vmatprep.subr.bf16.mxu0 0
      %2748 = vmatpush1.bf16.msra.mxu0 0
      %2749 = vmatprep.subr.bf16.mxu0 0
      %2750 = vmatpush1.bf16.msra.mxu0 0
      %2751 = vmatprep.subr.bf16.mxu0 0
      %2752 = vmatpush1.bf16.msra.mxu0 0
      %2753 = vmatprep.subr.bf16.mxu0 0
      %2754 = vmatpush1.bf16.msra.mxu0 0
      %2755 = vmatprep.subr.bf16.mxu0 0
      %2756 = vmatpush1.bf16.msra.mxu0 0
      %2757 = vmatprep.subr.bf16.mxu0 0
      %2758 = vmatpush1.bf16.msra.mxu0 0
      %2759 = vmatprep.subr.bf16.mxu0 0
      %2760 = vmatpush1.bf16.msra.mxu0 0
      %2761 = vmatprep.mubr.bf16.mxu0 0
      %2762 = vmatmul.mubr.bf16.gmra.mrb[0].mxu0 %v2703
      %v2763 = vpop.f32.mrb[0].mxu0
      %v2764 = vadd.f32 0.0, %v2763
      %v2765 = vpop.f32.mrb[0].mxu0
      %v2766 = vpop.f32.mrb[0].mxu0
      %v2767 = vadd.f32 0.0, %v2766
      %v2768 = vpop.f32.mrb[0].mxu0
      %2769 = vmatprep.mubr.bf16.mxu0 0
      %2770 = vmatmul.mubr.bf16.gmra.mrb[0].mxu0 %v2706
      %v2771 = vpop.f32.mrb[0].mxu0
      %v2772 = vadd.f32 0.0, %v2771
      %v2773 = vpop.f32.mrb[0].mxu0
      %v2774 = vpop.f32.mrb[0].mxu0
      %v2775 = vadd.f32 0.0, %v2774
      %v2776 = vpop.f32.mrb[0].mxu0
      %2777 = vmatprep.mubr.bf16.mxu0 0
      %2778 = vmatmul.mubr.bf16.gmra.mrb[0].mxu0 %v2709
      %v2779 = vpop.f32.mrb[0].mxu0
      %v2780 = vadd.f32 0.0, %v2779
      %v2781 = vpop.f32.mrb[0].mxu0
      %v2782 = vpop.f32.mrb[0].mxu0
      %v2783 = vadd.f32 0.0, %v2782
      %v2784 = vpop.f32.mrb[0].mxu0
      %2785 = vmatprep.mubr.bf16.mxu0 0
      %2786 = vmatmul.mubr.bf16.gmra.mrb[0].mxu0 %v2712
      %v2787 = vpop.f32.mrb[0].mxu0
      %v2788 = vadd.f32 0.0, %v2787
      %v2789 = vpop.f32.mrb[0].mxu0
      %v2790 = vpop.f32.mrb[0].mxu0
      %v2791 = vadd.f32 0.0, %v2790
      %v2792 = vpop.f32.mrb[0].mxu0
      %2793 = vmatprep.mubr.bf16.mxu0 0
      %2794 = vmatmul.mubr.bf16.gmra.mrb[0].mxu0 %v2715
      %v2795 = vpop.f32.mrb[0].mxu0
      %v2796 = vadd.f32 0.0, %v2795
      %v2797 = vpop.f32.mrb[0].mxu0
      %v2798 = vpop.f32.mrb[0].mxu0
      %v2799 = vadd.f32 0.0, %v2798
      %v2800 = vpop.f32.mrb[0].mxu0
      %2801 = vmatprep.mubr.bf16.mxu0 0
      %2802 = vmatmul.mubr.bf16.gmra.mrb[0].mxu0 %v2718
      %v2803 = vpop.f32.mrb[0].mxu0
      %v2804 = vadd.f32 0.0, %v2803
      %v2805 = vpop.f32.mrb[0].mxu0
      %v2806 = vpop.f32.mrb[0].mxu0
      %v2807 = vadd.f32 0.0, %v2806
      %v2808 = vpop.f32.mrb[0].mxu0
      %2809 = vmatprep.mubr.bf16.mxu0 0
      %2810 = vmatmul.mubr.bf16.gmra.mrb[0].mxu0 %v2721
      %v2811 = vpop.f32.mrb[0].mxu0
      %v2812 = vadd.f32 0.0, %v2811
      %v2813 = vpop.f32.mrb[0].mxu0
      %v2814 = vpop.f32.mrb[0].mxu0
      %v2815 = vadd.f32 0.0, %v2814
      %v2816 = vpop.f32.mrb[0].mxu0
      %2817 = vmatprep.mubr.bf16.mxu0 0
      %2818 = vmatmul.mubr.bf16.gmra.mrb[0].mxu0 %v2724
      %v2819 = vpop.f32.mrb[0].mxu0
      %v2820 = vadd.f32 0.0, %v2819
      %v2821 = vpop.f32.mrb[0].mxu0
      %v2822 = vpop.f32.mrb[0].mxu0
      %v2823 = vadd.f32 0.0, %v2822
      %v2824 = vpop.f32.mrb[0].mxu0
      %2825 = vdwg.mxu0
      %v2826 = vadd.f32 %v2684, %v2764
      %v2827 = vadd.f32 %v2685, %v2767
      %v2828 = vadd.f32 %v2686, %v2772
      %v2829 = vadd.f32 %v2687, %v2775
      %v2830 = vadd.f32 %v2688, %v2780
      %v2831 = vadd.f32 %v2689, %v2783
      %v2832 = vadd.f32 %v2690, %v2788
      %v2833 = vadd.f32 %v2691, %v2791
      %v2834 = vadd.f32 %v2692, %v2796
      %v2835 = vadd.f32 %v2693, %v2799
      %v2836 = vadd.f32 %v2694, %v2804
      %v2837 = vadd.f32 %v2695, %v2807
      %v2838 = vadd.f32 %v2696, %v2812
      %v2839 = vadd.f32 %v2697, %v2815
      %v2840 = vadd.f32 %v2698, %v2820
      %v2841 = vadd.f32 %v2699, %v2823
      %v2842 = vld [vmem:[#allocation2 + $0x18] sm:$0xff]
      %v2843 = vld [vmem:[#allocation2 + $0x20] sm:$0xff]
      %v2844 = vld [vmem:[#allocation2 + $0x28] sm:$0xff]
      %v2845 = vld [vmem:[#allocation2 + $0x30] sm:$0xff]
      %v2846 = vld [vmem:[#allocation2 + $0x38] sm:$0xff]
      %v2847 = vld [vmem:[#allocation2 + $0x40] sm:$0xff]
      %v2848 = vld [vmem:[#allocation2 + $0x48] sm:$0xff]
      %v2849 = vld [vmem:[#allocation2 + $0x50] sm:$0xff]
      %v2850 = vld [vmem:[#allocation2 + $0x58] sm:$0x1]
      %v2851 = vsel %vm1803, %v2842, 0
      %v2852 = vsel %vm1804, %v2843, 0
      %v2853 = vsel %vm1805, %v2844, 0
      %v2854 = vsel %vm1806, %v2845, 0
      %v2855 = vsel %vm1807, %v2846, 0
      %v2856 = vsel %vm1808, %v2847, 0
      %v2857 = vsel %vm1809, %v2848, 0
      %v2858 = vsel %vm1810, %v2849, 0
      %v2859 = vsel %vm1811, %v2850, 0
      %s2860 = scalar_lea.vmem %s4, 16
      %v2861 = vld [vmem:[%s2860] sm:$0x3]
      %v2863 = vshrl.u32 %v2851, 16
      %v2865 = vshll.u32 %v2851, 16
      %v2867 = vrot.slane %v2865, 1
      %v2868 = vor.u32 %v2863, %v2867
      %v2870 = vshll.u32 %v2852, 16
      %v2872 = vrot.slane %v2870, 1
      %v2873 = vsel %vm1160, %v2868, %v2872
      %v2874 = vshrl.u32 %v2852, 16
      %v2876 = vor.u32 %v2874, %v2872
      %v2878 = vshll.u32 %v2853, 16
      %v2880 = vrot.slane %v2878, 1
      %v2881 = vsel %vm1160, %v2876, %v2880
      %v2882 = vshrl.u32 %v2853, 16
      %v2884 = vor.u32 %v2882, %v2880
      %v2886 = vshll.u32 %v2854, 16
      %v2888 = vrot.slane %v2886, 1
      %v2889 = vsel %vm1160, %v2884, %v2888
      %v2890 = vshrl.u32 %v2854, 16
      %v2892 = vor.u32 %v2890, %v2888
      %v2894 = vshll.u32 %v2855, 16
      %v2896 = vrot.slane %v2894, 1
      %v2897 = vsel %vm1160, %v2892, %v2896
      %v2898 = vshrl.u32 %v2855, 16
      %v2900 = vor.u32 %v2898, %v2896
      %v2902 = vshll.u32 %v2856, 16
      %v2904 = vrot.slane %v2902, 1
      %v2905 = vsel %vm1160, %v2900, %v2904
      %v2906 = vshrl.u32 %v2856, 16
      %v2908 = vor.u32 %v2906, %v2904
      %v2910 = vshll.u32 %v2857, 16
      %v2912 = vrot.slane %v2910, 1
      %v2913 = vsel %vm1160, %v2908, %v2912
      %v2914 = vshrl.u32 %v2857, 16
      %v2916 = vor.u32 %v2914, %v2912
      %v2918 = vshll.u32 %v2858, 16
      %v2920 = vrot.slane %v2918, 1
      %v2921 = vsel %vm1160, %v2916, %v2920
      %v2922 = vshrl.u32 %v2858, 16
      %v2924 = vor.u32 %v2922, %v2920
      %v2926 = vshll.u32 %v2859, 16
      %v2928 = vrot.slane %v2926, 1
      %v2929 = vsel %vm1160, %v2924, %v2928
      %v2931 = vsel %vm831, %v2873, 0
      %v2934 = vsel %vm831, %v2881, 0
      %v2937 = vsel %vm831, %v2889, 0
      %v2940 = vsel %vm831, %v2897, 0
      %v2943 = vsel %vm831, %v2905, 0
      %v2946 = vsel %vm831, %v2913, 0
      %v2949 = vsel %vm831, %v2921, 0
      %v2952 = vsel %vm831, %v2929, 0
      %v2955 = vsel %vm1336, %v2861, 0
      %2957 = vmatprep.subr.bf16.mxu0 0
      %2958 = vmatpush1.bf16.msra.mxu0 %v2955
      %2959 = vmatprep.subr.bf16.mxu0 0
      %2960 = vmatpush1.bf16.msra.mxu0 0
      %2961 = vmatprep.subr.bf16.mxu0 0
      %2962 = vmatpush1.bf16.msra.mxu0 0
      %2963 = vmatprep.subr.bf16.mxu0 0
      %2964 = vmatpush1.bf16.msra.mxu0 0
      %2965 = vmatprep.subr.bf16.mxu0 0
      %2966 = vmatpush1.bf16.msra.mxu0 0
      %2967 = vmatprep.subr.bf16.mxu0 0
      %2968 = vmatpush1.bf16.msra.mxu0 0
      %2969 = vmatprep.subr.bf16.mxu0 0
      %2970 = vmatpush1.bf16.msra.mxu0 0
      %2971 = vmatprep.subr.bf16.mxu0 0
      %2972 = vmatpush1.bf16.msra.mxu0 0
      %2973 = vmatprep.subr.bf16.mxu0 0
      %2974 = vmatpush1.bf16.msra.mxu0 0
      %2975 = vmatprep.subr.bf16.mxu0 0
      %2976 = vmatpush1.bf16.msra.mxu0 0
      %2977 = vmatprep.subr.bf16.mxu0 0
      %2978 = vmatpush1.bf16.msra.mxu0 0
      %2979 = vmatprep.subr.bf16.mxu0 0
      %2980 = vmatpush1.bf16.msra.mxu0 0
      %2981 = vmatprep.subr.bf16.mxu0 0
      %2982 = vmatpush1.bf16.msra.mxu0 0
      %2983 = vmatprep.subr.bf16.mxu0 0
      %2984 = vmatpush1.bf16.msra.mxu0 0
      %2985 = vmatprep.subr.bf16.mxu0 0
      %2986 = vmatpush1.bf16.msra.mxu0 0
      %2987 = vmatprep.subr.bf16.mxu0 0
      %2988 = vmatpush1.bf16.msra.mxu0 0
      %2989 = vmatprep.mubr.bf16.mxu0 0
      %2990 = vmatmul.mubr.bf16.gmra.mrb[0].mxu0 %v2931
      %v2991 = vpop.f32.mrb[0].mxu0
      %v2992 = vadd.f32 0.0, %v2991
      %v2993 = vpop.f32.mrb[0].mxu0
      %v2994 = vpop.f32.mrb[0].mxu0
      %v2995 = vadd.f32 0.0, %v2994
      %v2996 = vpop.f32.mrb[0].mxu0
      %2997 = vmatprep.mubr.bf16.mxu0 0
      %2998 = vmatmul.mubr.bf16.gmra.mrb[0].mxu0 %v2934
      %v2999 = vpop.f32.mrb[0].mxu0
      %v3000 = vadd.f32 0.0, %v2999
      %v3001 = vpop.f32.mrb[0].mxu0
      %v3002 = vpop.f32.mrb[0].mxu0
      %v3003 = vadd.f32 0.0, %v3002
      %v3004 = vpop.f32.mrb[0].mxu0
      %3005 = vmatprep.mubr.bf16.mxu0 0
      %3006 = vmatmul.mubr.bf16.gmra.mrb[0].mxu0 %v2937
      %v3007 = vpop.f32.mrb[0].mxu0
      %v3008 = vadd.f32 0.0, %v3007
      %v3009 = vpop.f32.mrb[0].mxu0
      %v3010 = vpop.f32.mrb[0].mxu0
      %v3011 = vadd.f32 0.0, %v3010
      %v3012 = vpop.f32.mrb[0].mxu0
      %3013 = vmatprep.mubr.bf16.mxu0 0
      %3014 = vmatmul.mubr.bf16.gmra.mrb[0].mxu0 %v2940
      %v3015 = vpop.f32.mrb[0].mxu0
      %v3016 = vadd.f32 0.0, %v3015
      %v3017 = vpop.f32.mrb[0].mxu0
      %v3018 = vpop.f32.mrb[0].mxu0
      %v3019 = vadd.f32 0.0, %v3018
      %v3020 = vpop.f32.mrb[0].mxu0
      %3021 = vmatprep.mubr.bf16.mxu0 0
      %3022 = vmatmul.mubr.bf16.gmra.mrb[0].mxu0 %v2943
      %v3023 = vpop.f32.mrb[0].mxu0
      %v3024 = vadd.f32 0.0, %v3023
      %v3025 = vpop.f32.mrb[0].mxu0
      %v3026 = vpop.f32.mrb[0].mxu0
      %v3027 = vadd.f32 0.0, %v3026
      %v3028 = vpop.f32.mrb[0].mxu0
      %3029 = vmatprep.mubr.bf16.mxu0 0
      %3030 = vmatmul.mubr.bf16.gmra.mrb[0].mxu0 %v2946
      %v3031 = vpop.f32.mrb[0].mxu0
      %v3032 = vadd.f32 0.0, %v3031
      %v3033 = vpop.f32.mrb[0].mxu0
      %v3034 = vpop.f32.mrb[0].mxu0
      %v3035 = vadd.f32 0.0, %v3034
      %v3036 = vpop.f32.mrb[0].mxu0
      %3037 = vmatprep.mubr.bf16.mxu0 0
      %3038 = vmatmul.mubr.bf16.gmra.mrb[0].mxu0 %v2949
      %v3039 = vpop.f32.mrb[0].mxu0
      %v3040 = vadd.f32 0.0, %v3039
      %v3041 = vpop.f32.mrb[0].mxu0
      %v3042 = vpop.f32.mrb[0].mxu0
      %v3043 = vadd.f32 0.0, %v3042
      %v3044 = vpop.f32.mrb[0].mxu0
      %3045 = vmatprep.mubr.bf16.mxu0 0
      %3046 = vmatmul.mubr.bf16.gmra.mrb[0].mxu0 %v2952
      %v3047 = vpop.f32.mrb[0].mxu0
      %v3048 = vadd.f32 0.0, %v3047
      %v3049 = vpop.f32.mrb[0].mxu0
      %v3050 = vpop.f32.mrb[0].mxu0
      %v3051 = vadd.f32 0.0, %v3050
      %v3052 = vpop.f32.mrb[0].mxu0
      %3053 = vdwg.mxu0
      %v3054 = vadd.f32 %v2826, %v2992
      %v3055 = vadd.f32 %v2827, %v2995
      %v3056 = vadd.f32 %v2828, %v3000
      %v3057 = vadd.f32 %v2829, %v3003
      %v3058 = vadd.f32 %v2830, %v3008
      %v3059 = vadd.f32 %v2831, %v3011
      %v3060 = vadd.f32 %v2832, %v3016
      %v3061 = vadd.f32 %v2833, %v3019
      %v3062 = vadd.f32 %v2834, %v3024
      %v3063 = vadd.f32 %v2835, %v3027
      %v3064 = vadd.f32 %v2836, %v3032
      %v3065 = vadd.f32 %v2837, %v3035
      %v3066 = vadd.f32 %v2838, %v3040
      %v3067 = vadd.f32 %v2839, %v3043
      %v3068 = vadd.f32 %v2840, %v3048
      %v3069 = vadd.f32 %v2841, %v3051
      %v3070 = vld [vmem:[%s7] sm:$0x1]
      %v3072 = vlaneseq
      %v3073 = vshrl.u32 %v3072, 7
      %v3074 = vsub.s32 0, %v3073
      %v3075 = vrot.slane %v3070, %v3074
      %v3077 = vadd.f32 %v3054, %v3075
      %v3078 = vadd.f32 %v3055, %v3075
      %v3079 = vadd.f32 %v3056, %v3075
      %v3080 = vadd.f32 %v3057, %v3075
      %v3081 = vadd.f32 %v3058, %v3075
      %v3082 = vadd.f32 %v3059, %v3075
      %v3083 = vadd.f32 %v3060, %v3075
      %v3084 = vadd.f32 %v3061, %v3075
      %v3085 = vadd.f32 %v3062, %v3075
      %v3086 = vadd.f32 %v3063, %v3075
      %v3087 = vadd.f32 %v3064, %v3075
      %v3088 = vadd.f32 %v3065, %v3075
      %v3089 = vadd.f32 %v3066, %v3075
      %v3090 = vadd.f32 %v3067, %v3075
      %v3091 = vadd.f32 %v3068, %v3075
      %v3092 = vadd.f32 %v3069, %v3075
      %v3093 = vmax.f32 %v3077, 0.0
      %v3094 = vmax.f32 %v3078, 0.0
      %v3095 = vmax.f32 %v3079, 0.0
      %v3096 = vmax.f32 %v3080, 0.0
      %v3097 = vmax.f32 %v3081, 0.0
      %v3098 = vmax.f32 %v3082, 0.0
      %v3099 = vmax.f32 %v3083, 0.0
      %v3100 = vmax.f32 %v3084, 0.0
      %v3101 = vmax.f32 %v3085, 0.0
      %v3102 = vmax.f32 %v3086, 0.0
      %v3103 = vmax.f32 %v3087, 0.0
      %v3104 = vmax.f32 %v3088, 0.0
      %v3105 = vmax.f32 %v3089, 0.0
      %v3106 = vmax.f32 %v3090, 0.0
      %v3107 = vmax.f32 %v3091, 0.0
      %v3108 = vmax.f32 %v3092, 0.0
      %v3109 = vpack.c.bf16 %v3094, %v3093
      %v3110 = vpack.c.bf16 %v3096, %v3095
      %v3111 = vpack.c.bf16 %v3098, %v3097
      %v3112 = vpack.c.bf16 %v3100, %v3099
      %v3113 = vpack.c.bf16 %v3102, %v3101
      %v3114 = vpack.c.bf16 %v3104, %v3103
      %v3115 = vpack.c.bf16 %v3106, %v3105
      %v3116 = vpack.c.bf16 %v3108, %v3107
      %v3117 = vld [vmem:[%s5] sm:$0x3]
      %v3118 = vld [vmem:[%s8] sm:$0x1]
      %v3120 = vlaneseq
      %v3121 = vshrl.u32 %v3120, 7
      %v3122 = vsub.s32 0, %v3121
      %v3123 = vrot.slane %v3118, %v3122
      %v3126 = vsel %vm831, %v3109, 0
      %v3129 = vsel %vm831, %v3110, 0
      %v3132 = vsel %vm831, %v3111, 0
      %v3135 = vsel %vm831, %v3112, 0
      %v3138 = vsel %vm831, %v3113, 0
      %v3141 = vsel %vm831, %v3114, 0
      %v3144 = vsel %vm831, %v3115, 0
      %v3147 = vsel %vm831, %v3116, 0
      %v3150 = vsel %vm1336, %v3117, 0
      %3152 = vmatprep.subr.bf16.mxu0 0
      %3153 = vmatpush1.bf16.msra.mxu0 %v3150
      %3154 = vmatprep.subr.bf16.mxu0 0
      %3155 = vmatpush1.bf16.msra.mxu0 0
      %3156 = vmatprep.subr.bf16.mxu0 0
      %3157 = vmatpush1.bf16.msra.mxu0 0
      %3158 = vmatprep.subr.bf16.mxu0 0
      %3159 = vmatpush1.bf16.msra.mxu0 0
      %3160 = vmatprep.subr.bf16.mxu0 0
      %3161 = vmatpush1.bf16.msra.mxu0 0
      %3162 = vmatprep.subr.bf16.mxu0 0
      %3163 = vmatpush1.bf16.msra.mxu0 0
      %3164 = vmatprep.subr.bf16.mxu0 0
      %3165 = vmatpush1.bf16.msra.mxu0 0
      %3166 = vmatprep.subr.bf16.mxu0 0
      %3167 = vmatpush1.bf16.msra.mxu0 0
      %3168 = vmatprep.subr.bf16.mxu0 0
      %3169 = vmatpush1.bf16.msra.mxu0 0
      %3170 = vmatprep.subr.bf16.mxu0 0
      %3171 = vmatpush1.bf16.msra.mxu0 0
      %3172 = vmatprep.subr.bf16.mxu0 0
      %3173 = vmatpush1.bf16.msra.mxu0 0
      %3174 = vmatprep.subr.bf16.mxu0 0
      %3175 = vmatpush1.bf16.msra.mxu0 0
      %3176 = vmatprep.subr.bf16.mxu0 0
      %3177 = vmatpush1.bf16.msra.mxu0 0
      %3178 = vmatprep.subr.bf16.mxu0 0
      %3179 = vmatpush1.bf16.msra.mxu0 0
      %3180 = vmatprep.subr.bf16.mxu0 0
      %3181 = vmatpush1.bf16.msra.mxu0 0
      %3182 = vmatprep.subr.bf16.mxu0 0
      %3183 = vmatpush1.bf16.msra.mxu0 0
      %3184 = vmatprep.mubr.bf16.mxu0 0
      %3185 = vmatmul.mubr.bf16.gmra.mrb[0].mxu0 %v3126
      %v3186 = vpop.f32.mrb[0].mxu0
      %v3187 = vadd.f32 %v3123, %v3186
      %v3188 = vpop.f32.mrb[0].mxu0
      %v3189 = vpop.f32.mrb[0].mxu0
      %v3190 = vadd.f32 %v3123, %v3189
      %v3191 = vpop.f32.mrb[0].mxu0
      %3192 = vmatprep.mubr.bf16.mxu0 0
      %3193 = vmatmul.mubr.bf16.gmra.mrb[0].mxu0 %v3129
      %v3194 = vpop.f32.mrb[0].mxu0
      %v3195 = vadd.f32 %v3123, %v3194
      %v3196 = vpop.f32.mrb[0].mxu0
      %v3197 = vpop.f32.mrb[0].mxu0
      %v3198 = vadd.f32 %v3123, %v3197
      %v3199 = vpop.f32.mrb[0].mxu0
      %3200 = vmatprep.mubr.bf16.mxu0 0
      %3201 = vmatmul.mubr.bf16.gmra.mrb[0].mxu0 %v3132
      %v3202 = vpop.f32.mrb[0].mxu0
      %v3203 = vadd.f32 %v3123, %v3202
      %v3204 = vpop.f32.mrb[0].mxu0
      %v3205 = vpop.f32.mrb[0].mxu0
      %v3206 = vadd.f32 %v3123, %v3205
      %v3207 = vpop.f32.mrb[0].mxu0
      %3208 = vmatprep.mubr.bf16.mxu0 0
      %3209 = vmatmul.mubr.bf16.gmra.mrb[0].mxu0 %v3135
      %v3210 = vpop.f32.mrb[0].mxu0
      %v3211 = vadd.f32 %v3123, %v3210
      %v3212 = vpop.f32.mrb[0].mxu0
      %v3213 = vpop.f32.mrb[0].mxu0
      %v3214 = vadd.f32 %v3123, %v3213
      %v3215 = vpop.f32.mrb[0].mxu0
      %3216 = vmatprep.mubr.bf16.mxu0 0
      %3217 = vmatmul.mubr.bf16.gmra.mrb[0].mxu0 %v3138
      %v3218 = vpop.f32.mrb[0].mxu0
      %v3219 = vadd.f32 %v3123, %v3218
      %v3220 = vpop.f32.mrb[0].mxu0
      %v3221 = vpop.f32.mrb[0].mxu0
      %v3222 = vadd.f32 %v3123, %v3221
      %v3223 = vpop.f32.mrb[0].mxu0
      %3224 = vmatprep.mubr.bf16.mxu0 0
      %3225 = vmatmul.mubr.bf16.gmra.mrb[0].mxu0 %v3141
      %v3226 = vpop.f32.mrb[0].mxu0
      %v3227 = vadd.f32 %v3123, %v3226
      %v3228 = vpop.f32.mrb[0].mxu0
      %v3229 = vpop.f32.mrb[0].mxu0
      %v3230 = vadd.f32 %v3123, %v3229
      %v3231 = vpop.f32.mrb[0].mxu0
      %3232 = vmatprep.mubr.bf16.mxu0 0
      %3233 = vmatmul.mubr.bf16.gmra.mrb[0].mxu0 %v3144
      %v3234 = vpop.f32.mrb[0].mxu0
      %v3235 = vadd.f32 %v3123, %v3234
      %v3236 = vpop.f32.mrb[0].mxu0
      %v3237 = vpop.f32.mrb[0].mxu0
      %v3238 = vadd.f32 %v3123, %v3237
      %v3239 = vpop.f32.mrb[0].mxu0
      %3240 = vmatprep.mubr.bf16.mxu0 0
      %3241 = vmatmul.mubr.bf16.gmra.mrb[0].mxu0 %v3147
      %v3242 = vpop.f32.mrb[0].mxu0
      %v3243 = vadd.f32 %v3123, %v3242
      %v3244 = vpop.f32.mrb[0].mxu0
      %v3245 = vpop.f32.mrb[0].mxu0
      %v3246 = vadd.f32 %v3123, %v3245
      %v3247 = vpop.f32.mrb[0].mxu0
      %3248 = vdwg.mxu0
      %v3249 = vld [vmem:[%s452] sm:$0xf]
      %v3250 = vld [vmem:[%s452 + $0x4] sm:$0xf]
      %v3251 = vld [vmem:[%s452 + $0x8] sm:$0xf]
      %v3252 = vld [vmem:[%s452 + $0xc] sm:$0xf]
      %v3253 = vld [vmem:[%s452 + $0x10] sm:$0xf]
      %v3254 = vld [vmem:[%s452 + $0x14] sm:$0xf]
      %v3255 = vld [vmem:[%s452 + $0x18] sm:$0xf]
      %v3256 = vld [vmem:[%s452 + $0x1c] sm:$0xf]
      %v3257 = vld [vmem:[%s452 + $0x20] sm:$0xf]
      %v3258 = vld [vmem:[%s452 + $0x24] sm:$0xf]
      %v3259 = vld [vmem:[%s452 + $0x28] sm:$0xf]
      %v3260 = vld [vmem:[%s452 + $0x2c] sm:$0xf]
      %v3261 = vld [vmem:[%s452 + $0x30] sm:$0xf]
      %v3262 = vld [vmem:[%s452 + $0x34] sm:$0xf]
      %v3263 = vld [vmem:[%s452 + $0x38] sm:$0xf]
      %v3264 = vld [vmem:[%s452 + $0x3c] sm:$0xf]
      %v3265 = vunpack.c.l.bf16 %v3249
      %v3266 = vunpack.c.l.bf16 %v3250
      %v3267 = vunpack.c.l.bf16 %v3251
      %v3268 = vunpack.c.l.bf16 %v3252
      %v3269 = vunpack.c.l.bf16 %v3253
      %v3270 = vunpack.c.l.bf16 %v3254
      %v3271 = vunpack.c.l.bf16 %v3255
      %v3272 = vunpack.c.l.bf16 %v3256
      %v3273 = vunpack.c.l.bf16 %v3257
      %v3274 = vunpack.c.l.bf16 %v3258
      %v3275 = vunpack.c.l.bf16 %v3259
      %v3276 = vunpack.c.l.bf16 %v3260
      %v3277 = vunpack.c.l.bf16 %v3261
      %v3278 = vunpack.c.l.bf16 %v3262
      %v3279 = vunpack.c.l.bf16 %v3263
      %v3280 = vunpack.c.l.bf16 %v3264
      %v3281 = vadd.f32 %v3187, %v3265
      %v3282 = vadd.f32 %v3190, %v3266
      %v3283 = vadd.f32 %v3195, %v3267
      %v3284 = vadd.f32 %v3198, %v3268
      %v3285 = vadd.f32 %v3203, %v3269
      %v3286 = vadd.f32 %v3206, %v3270
      %v3287 = vadd.f32 %v3211, %v3271
      %v3288 = vadd.f32 %v3214, %v3272
      %v3289 = vadd.f32 %v3219, %v3273
      %v3290 = vadd.f32 %v3222, %v3274
      %v3291 = vadd.f32 %v3227, %v3275
      %v3292 = vadd.f32 %v3230, %v3276
      %v3293 = vadd.f32 %v3235, %v3277
      %v3294 = vadd.f32 %v3238, %v3278
      %v3295 = vadd.f32 %v3243, %v3279
      %v3296 = vadd.f32 %v3246, %v3280
      %v3297 = vpack.c.bf16 %v3282, %v3281
      %v3298 = vpack.c.bf16 %v3284, %v3283
      %v3299 = vpack.c.bf16 %v3286, %v3285
      %v3300 = vpack.c.bf16 %v3288, %v3287
      %v3301 = vpack.c.bf16 %v3290, %v3289
      %v3302 = vpack.c.bf16 %v3292, %v3291
      %v3303 = vpack.c.bf16 %v3294, %v3293
      %v3304 = vpack.c.bf16 %v3296, %v3295
      %v3313 = vunpack.c.l.b16 %v3297
      %v3314 = vunpack.c.h.b16 %v3297
      %v3315 = vunpack.c.l.b16 %v3298
      %v3316 = vunpack.c.h.b16 %v3298
      %v3317 = vunpack.c.l.b16 %v3299
      %v3318 = vunpack.c.h.b16 %v3299
      %v3319 = vunpack.c.l.b16 %v3300
      %v3320 = vunpack.c.h.b16 %v3300
      %v3321 = vunpack.c.l.b16 %v3301
      %v3322 = vunpack.c.h.b16 %v3301
      %v3323 = vunpack.c.l.b16 %v3302
      %v3324 = vunpack.c.h.b16 %v3302
      %v3325 = vunpack.c.l.b16 %v3303
      %v3326 = vunpack.c.h.b16 %v3303
      %v3327 = vunpack.c.l.b16 %v3304
      %v3328 = vunpack.c.h.b16 %v3304
      %v3329 = vpack.c.b16 %v3313, %v3313
      %v3330 = vpack.c.b16 %v3314, %v3314
      %v3331 = vpack.c.b16 %v3315, %v3315
      %v3332 = vpack.c.b16 %v3316, %v3316
      %v3333 = vpack.c.b16 %v3317, %v3317
      %v3334 = vpack.c.b16 %v3318, %v3318
      %v3335 = vpack.c.b16 %v3319, %v3319
      %v3336 = vpack.c.b16 %v3320, %v3320
      %v3337 = vpack.c.b16 %v3321, %v3321
      %v3338 = vpack.c.b16 %v3322, %v3322
      %v3339 = vpack.c.b16 %v3323, %v3323
      %v3340 = vpack.c.b16 %v3324, %v3324
      %v3341 = vpack.c.b16 %v3325, %v3325
      %v3342 = vpack.c.b16 %v3326, %v3326
      %v3343 = vpack.c.b16 %v3327, %v3327
      %v3344 = vpack.c.b16 %v3328, %v3328
      %vm3361 = vcmask 125952
      %3362 = vst.msk [vmem:[%s498] sm:$0xf] %vm3361, %v3329
      %3363 = vst.msk [vmem:[%s498 + $0x4] sm:$0xf] %vm3361, %v3330
      %3364 = vst.msk [vmem:[%s498 + $0x8] sm:$0xf] %vm3361, %v3331
      %3365 = vst.msk [vmem:[%s498 + $0xc] sm:$0xf] %vm3361, %v3332
      %3366 = vst.msk [vmem:[%s498 + $0x10] sm:$0xf] %vm3361, %v3333
      %3367 = vst.msk [vmem:[%s498 + $0x14] sm:$0xf] %vm3361, %v3334
      %3368 = vst.msk [vmem:[%s498 + $0x18] sm:$0xf] %vm3361, %v3335
      %3369 = vst.msk [vmem:[%s498 + $0x1c] sm:$0xf] %vm3361, %v3336
      %3370 = vst.msk [vmem:[%s498 + $0x20] sm:$0xf] %vm3361, %v3337
      %3371 = vst.msk [vmem:[%s498 + $0x24] sm:$0xf] %vm3361, %v3338
      %3372 = vst.msk [vmem:[%s498 + $0x28] sm:$0xf] %vm3361, %v3339
      %3373 = vst.msk [vmem:[%s498 + $0x2c] sm:$0xf] %vm3361, %v3340
      %3374 = vst.msk [vmem:[%s498 + $0x30] sm:$0xf] %vm3361, %v3341
      %3375 = vst.msk [vmem:[%s498 + $0x34] sm:$0xf] %vm3361, %v3342
      %3376 = vst.msk [vmem:[%s498 + $0x38] sm:$0xf] %vm3361, %v3343
      %3377 = vst.msk [vmem:[%s498 + $0x3c] sm:$0xf] %vm3361, %v3344
      %s3378 = smul.u32 16, %s25
      %p3379 = scmp.lt.s32.totalorder %s24, 1
      %s3380 = scalar_select %p3379, %s24, 1
      %p3381 = scmp.lt.s32.totalorder %s3378, 31
      %s3382 = scalar_select %p3381, %s3378, 31
      %s3383 = smul.addr %s3380, 32
      %s3384 = sadd.s32 %s3382, %s3383
      %s3385 = smul.addr %s3384, 4
      %s3386 = scalar_lea.vmem %s9, %s3385
      // Predicated region
      $region57: #{tpu_custom_call.1} parent=55 // pred_check
        %p3387 = pneg %p278
      $region58: #{tpu_custom_call.1} parent=55 // pred_check_branch
        %3389 = sbr.rel (%p3387) target = $region60
      $region59: #{tpu_custom_call.1} parent=55 // pred_region
        %s3390 = smul.u32 16, %s25
      $region60: #{tpu_custom_call.1} parent=55 // pred_fallthru
        _
    $region56: #{tpu_custom_call.1} parent=5 // pred_fallthru
      _
    %p3391 = scmp.le.s32.totalorder 2, %s15
    // Predicated region
    $region61: #{tpu_custom_call.1} parent=5 // pred_check
      %p3392 = pneg %p3391
    $region62: #{tpu_custom_call.1} parent=5 // pred_check_branch
      %3394 = sbr.rel (%p3392) target = $region64
    $region63: #{tpu_custom_call.1} parent=5 // pred_region
      %s3395 = ssub.s32 %s15, 2
      // Predicated region
      $region65: #{tpu_custom_call.1} parent=63 // pred_check
        %p3396 = pneg %p284
      $region66: #{tpu_custom_call.1} parent=63 // pred_check_branch
        %3398 = sbr.rel (%p3396) target = $region68
      $region67: #{tpu_custom_call.1} parent=63 // pred_region
        %s3399 = smul.u32 16, %s27
        %p3400 = scmp.lt.s32.totalorder %s26, 1
        %s3401 = scalar_select %p3400, %s26, 1
        %p3402 = scmp.lt.s32.totalorder %s3399, 31
        %s3403 = scalar_select %p3402, %s3399, 31
        %s3404 = smul.addr %s3401, 32
        %s3405 = sadd.s32 %s3403, %s3404
        %s3406 = smul.addr %s3405, 4
        %s3407 = scalar_lea.vmem %s9, %s3406
      $region68: #{tpu_custom_call.1} parent=63 // pred_fallthru
        _
    $region64: #{tpu_custom_call.1} parent=5 // pred_fallthru
      _
  $region6: #{tpu_custom_call.1} parent=0 // loop_footer
    %s19 = sadd.s32 1, %s15
  $region7: #{tpu_custom_call.1} parent=0 // loop_footer_branch
    %14 = sbr.rel target = $region3
  $region8: #{tpu_custom_call.1} parent=0 // loop_exit
    _

</llo_original>
